<compile_context>
chip_gen: v7x
topology: tpu7x:2x2x1
jax: 0.10.0
libtpu: 0.0.40
codegen_flags: <defaults>
</compile_context>

<pallas_src>
import functools
import numpy as np
import jax
import jax.numpy as jnp
from jax.experimental import pallas as pl
from jax.experimental.pallas import tpu as pltpu

# ---------------- model hyper-params (small, consistent with the module) ----------------
B = 2            # batch
S = 8            # source sequence length (src_len)
D_MODEL = 32     # enc_dim / d_model
NUM_HEADS = 4
HEAD_DIM = D_MODEL // NUM_HEADS
D_FF = 64
NUM_LAYERS = 2
LN_EPS = 1e-5


def positional_encoding(seq_len, d_model):
    """Same formula as the PyTorch positionalEncoding()."""
    pe = np.zeros((seq_len, d_model), np.float32)
    for i in range(d_model):
        f = np.sin if i % 2 == 0 else np.cos
        pe[:, i] = f(np.arange(seq_len) / np.power(10000.0, 2 * (i // 2) / d_model))
    return jnp.asarray(pe, jnp.float32)


def _layernorm(x, gamma, beta, eps=LN_EPS):
    mu = jnp.mean(x, axis=-1, keepdims=True)
    var = jnp.mean((x - mu) ** 2, axis=-1, keepdims=True)
    return (x - mu) * jax.lax.rsqrt(var + eps) * gamma + beta


# ----------------------------------- kernel ---------------------------------------------
def encoder_stack_kernel(x_ref, pos_ref, bias_ref,
                         wq_ref, bq_ref, wk_ref, bk_ref, wv_ref, bv_ref,
                         wo_ref, bo_ref, w1_ref, b1_ref, w2_ref, b2_ref,
                         g1_ref, be1_ref, g2_ref, be2_ref,
                         out_ref, *, num_heads):
    bb, s, d = x_ref.shape          # (batches-per-grid-step, S, D)
    f32 = jnp.float32

    pos = pos_ref[...]                                  # (S, D) — resident across layers
    # current layer's weights (leading layer-block dim of 1 squeezed away with [0])
    wq, bq = wq_ref[0], bq_ref[0]                       # (H, D, dk), (H, 1, dk)  (1/sqrt(dk) folded)
    wk, bk = wk_ref[0], bk_ref[0]
    wv, bv = wv_ref[0], bv_ref[0]
    wo, bo = wo_ref[0], bo_ref[0]                       # (H, dk, D), (1, D)
    w1, b1 = w1_ref[0], b1_ref[0]                       # (D, DFF), (1, DFF)
    w2, b2 = w2_ref[0], b2_ref[0]                       # (DFF, D), (1, D)
    g1, be1 = g1_ref[0], be1_ref[0]
    g2, be2 = g2_ref[0], be2_ref[0]

    for b in range(bb):  # bb <= 2 -> tiny static unroll
        # Encoder-level: enc_out = enc_input + pos_emb (emb dropout = identity).
        # Every layer reads the SAME pos-encoded input (PyTorch layers are not chained).
        x = x_ref[b] + pos                              # (S, D)
        bias = bias_ref[b]                              # (S, S) additive mask bias (0 / -10000)

        # ---- multi-head self-attention: heads batched on the leading axis ----
        xh = jnp.broadcast_to(x[None], (num_heads, s, d))        # (H, S, D)
        q = jnp.einsum("hsd,hde->hse", xh, wq, preferred_element_type=f32) + bq
        k = jnp.einsum("hsd,hde->hse", xh, wk, preferred_element_type=f32) + bk
        v = jnp.einsum("hsd,hde->hse", xh, wv, preferred_element_type=f32) + bv

        scores = jnp.einsum("hqe,hke->hqk", q, k, preferred_element_type=f32) + bias[None]
        m = jnp.max(scores, axis=-1, keepdims=True)
        e = jnp.exp(scores - m)
        attn = e * pl.reciprocal(jnp.sum(e, axis=-1, keepdims=True), approx=True)

        ctx = jnp.einsum("hqk,hke->hqe", attn, v, preferred_element_type=f32)     # (H, S, dk)
        # concat-heads @ W_out  ==  sum_h ctx[h] @ W_out[h]  (no lane concat/relayout)
        attn_out = jnp.sum(
            jnp.einsum("hse,hed->hsd", ctx, wo, preferred_element_type=f32), axis=0) + bo

        # ---- residual + LayerNorm 1 ----
        n1 = _layernorm(x + attn_out, g1, be1)

        # ---- position-wise FFN (1x1 convs == linears); dropout = identity ----
        hid = jnp.maximum(jnp.dot(n1, w1, preferred_element_type=f32) + b1, 0.0)
        ffn = jnp.dot(hid, w2, preferred_element_type=f32) + b2

        # ---- residual + LayerNorm 2 ----
        # Output block index is constant over the layer grid axis: each layer overwrites the
        # resident block; only the LAST layer's value is written back (matches PyTorch loop).
        out_ref[b] = _layernorm(n1 + ffn, g2, be2)


# ----------------------------------- wrapper --------------------------------------------
_KP_ORDER = ("wq", "bq", "wk", "bk", "wv", "bv", "wo", "bo",
             "w1", "b1", "w2", "b2", "g1", "be1", "g2", "be2")


def _prep_layer_params(p, num_heads):
    """Canonical (PyTorch-layout) params -> kernel layout: per-head Q/K/V/Out weights with
    heads on the leading axis; 1/sqrt(d_k) folded into W_Q / b_Q (offline scale fold)."""
    d_model, hdk = p["wq"].shape
    dk = hdk // num_heads
    scale = jnp.float32(1.0 / np.sqrt(dk))

    def split_w(w):   # (D, H*dk) -> (H, D, dk)
        return jnp.transpose(w.reshape(d_model, num_heads, dk), (1, 0, 2))

    def split_b(bias):  # (1, H*dk) -> (H, 1, dk)
        return bias.reshape(num_heads, 1, dk)

    return {
        "wq": split_w(p["wq"]) * scale, "bq": split_b(p["bq"]) * scale,
        "wk": split_w(p["wk"]),         "bk": split_b(p["bk"]),
        "wv": split_w(p["wv"]),         "bv": split_b(p["bv"]),
        "wo": p["wo"].reshape(num_heads, dk, d_model), "bo": p["bo"],
        "w1": p["w1"], "b1": p["b1"], "w2": p["w2"], "b2": p["b2"],
        "g1": p["g1"], "be1": p["be1"], "g2": p["g2"], "be2": p["be2"],
    }


def _num_batch_blocks(batch):
    """v7x has 2 TensorCores/chip -> keep a 2-way 'parallel' batch grid so both get work.
    v5e/v6e are single-TC -> a multi-step grid is just a serial loop (~0.35us/step overhead),
    so collapse to one grid step. Any detection failure falls back to the safe 1-step grid."""
    try:
        kind = jax.devices()[0].device_kind.lower()
    except Exception:
        kind = ""
    g = min(batch, 2) if ("v7" in kind or "7x" in kind) else 1
    return g if (g > 0 and batch % g == 0) else 1


def encoder_forward(enc_input, attn_mask, layer_params_list, *, num_heads=NUM_HEADS):
    Bx, Sx, Dx = enc_input.shape
    num_layers = len(layer_params_list)
    pos = positional_encoding(Sx, Dx)

    if attn_mask is None:
        mask_bias = jnp.zeros((Bx, Sx, Sx), jnp.float32)
    else:
        mask_bias = jnp.where(attn_mask != 0, -10000.0, 0.0).astype(jnp.float32)

    grid_b = _num_batch_blocks(Bx)
    bb = Bx // grid_b

    # Pre-split per-head weights, then stack all layers on a leading (L, ...) axis so the
    # whole Encoder runs in ONE pallas_call with a layer grid axis.
    prepped = [_prep_layer_params(p, num_heads) for p in layer_params_list]
    kp = {name: jnp.stack([pr[name] for pr in prepped], axis=0) for name in _KP_ORDER}

    def shared_spec(a):  # layer-invariant, batch-invariant (stays resident in VMEM)
        nd = a.ndim
        return pl.BlockSpec(a.shape, lambda b, l, _nd=nd: (0,) * _nd)

    def layer_spec(a):   # one layer's slab per grid step along the layer axis
        nz = a.ndim - 1
        return pl.BlockSpec((1,) + a.shape[1:], lambda b, l, _nz=nz: (l,) + (0,) * _nz)

    in_specs = [
        pl.BlockSpec((bb, Sx, Dx), lambda b, l: (b, 0, 0)),   # x (batch-blocked, layer-resident)
        shared_spec(pos),                                     # positional encoding
        pl.BlockSpec((bb, Sx, Sx), lambda b, l: (b, 0, 0)),   # additive mask bias
    ] + [layer_spec(kp[name]) for name in _KP_ORDER]

    # Output block index ignores the layer axis -> resident accumulator; last layer wins.
    out_spec = pl.BlockSpec((bb, Sx, Dx), lambda b, l: (b, 0, 0))

    kernel = functools.partial(encoder_stack_kernel, num_heads=num_heads)

    return pl.pallas_call(
        kernel,
        out_shape=jax.ShapeDtypeStruct((Bx, Sx, Dx), jnp.float32),
        grid_spec=pltpu.PrefetchScalarGridSpec(
            num_scalar_prefetch=0,
            grid=(grid_b, num_layers),
            in_specs=in_specs,
            out_specs=out_spec,
        ),
        compiler_params=pltpu.CompilerParams(
            dimension_semantics=("parallel", "arbitrary")),
    )(enc_input, pos, mask_bias, *[kp[name] for name in _KP_ORDER])


# ------------------------------- pure-JAX reference --------------------------------------
def reference_encoder(enc_input, attn_mask, layer_params_list, *, num_heads=NUM_HEADS):
    Bx, Sx, Dx = enc_input.shape
    dk = Dx // num_heads
    enc_out = enc_input + positional_encoding(Sx, Dx)[None]

    def ln(t, g, b):
        mu = jnp.mean(t, axis=-1, keepdims=True)
        var = jnp.mean((t - mu) ** 2, axis=-1, keepdims=True)
        return (t - mu) / jnp.sqrt(var + LN_EPS) * g + b

    out = None
    for p in layer_params_list:
        q = enc_out @ p["wq"] + p["bq"]
        k = enc_out @ p["wk"] + p["bk"]
        v = enc_out @ p["wv"] + p["bv"]

        def split(t):
            return t.reshape(Bx, Sx, num_heads, dk).transpose(0, 2, 1, 3)

        qh, kh, vh = split(q), split(k), split(v)
        scores = jnp.einsum("bhqd,bhkd->bhqk", qh, kh) / np.sqrt(dk)
        if attn_mask is not None:
            scores = jnp.where(attn_mask[:, None] != 0, -10000.0, scores)
        attn = jax.nn.softmax(scores, axis=-1)
        ctx = jnp.einsum("bhqk,bhkd->bhqd", attn, vh)
        ctx = ctx.transpose(0, 2, 1, 3).reshape(Bx, Sx, num_heads * dk)
        attn_out = ctx @ p["wo"] + p["bo"]

        n1 = ln(enc_out + attn_out, p["g1"], p["be1"])
        ffn = jnp.maximum(n1 @ p["w1"] + p["b1"], 0.0) @ p["w2"] + p["b2"]
        out = ln(n1 + ffn, p["g2"], p["be2"])
    return out


# ------------------------------------ params --------------------------------------------
def init_layer_params(key):
    ks = jax.random.split(key, 12)
    f32 = jnp.float32
    std = np.float32(np.sqrt(2.0 / (D_MODEL + HEAD_DIM)))
    return {
        # attention projections stored as (in, out) so the math is x @ W + b
        "wq": jax.random.normal(ks[0], (D_MODEL, NUM_HEADS * HEAD_DIM), f32) * std,
        "bq": jax.random.normal(ks[1], (1, NUM_HEADS * HEAD_DIM), f32) * 0.02,
        "wk": jax.random.normal(ks[2], (D_MODEL, NUM_HEADS * HEAD_DIM), f32) * std,
        "bk": jax.random.normal(ks[3], (1, NUM_HEADS * HEAD_DIM), f32) * 0.02,
        "wv": jax.random.normal(ks[4], (D_MODEL, NUM_HEADS * HEAD_DIM), f32) * std,
        "bv": jax.random.normal(ks[5], (1, NUM_HEADS * HEAD_DIM), f32) * 0.02,
        "wo": jax.random.normal(ks[6], (NUM_HEADS * HEAD_DIM, D_MODEL), f32) * std,
        "bo": jax.random.normal(ks[7], (1, D_MODEL), f32) * 0.02,
        # position-wise FFN (kernel-size-1 convs == linears)
        "w1": jax.random.normal(ks[8], (D_MODEL, D_FF), f32) * 0.05,
        "b1": jax.random.normal(ks[9], (1, D_FF), f32) * 0.02,
        "w2": jax.random.normal(ks[10], (D_FF, D_MODEL), f32) * 0.05,
        "b2": jax.random.normal(ks[11], (1, D_MODEL), f32) * 0.02,
        # LayerNorm affine params (PyTorch default init)
        "g1": jnp.ones((1, D_MODEL), f32), "be1": jnp.zeros((1, D_MODEL), f32),
        "g2": jnp.ones((1, D_MODEL), f32), "be2": jnp.zeros((1, D_MODEL), f32),
    }


if __name__ == "__main__":
    key = jax.random.PRNGKey(0)
    k_x, k_p = jax.random.split(key)

    enc_input = jax.random.normal(k_x, (B, S, D_MODEL), jnp.float32)
    # padding-style mask: last 2 key positions masked out (nonzero == masked)
    key_pos = jnp.arange(S)
    attn_mask = jnp.broadcast_to((key_pos >= S - 2)[None, None, :], (B, S, S)).astype(jnp.int32)

    layer_params = [init_layer_params(k) for k in jax.random.split(k_p, NUM_LAYERS)]

    out = encoder_forward(enc_input, attn_mask, layer_params, num_heads=NUM_HEADS)
    out = jax.block_until_ready(out)

    ref = reference_encoder(enc_input, attn_mask, layer_params, num_heads=NUM_HEADS)
    # slightly loose tolerance: softmax normalization uses approx EUP reciprocal in-kernel
    np.testing.assert_allclose(np.asarray(out), np.asarray(ref), rtol=1e-2, atol=1e-2)

    print("KERNEL_OK")
</pallas_src>

<mosaic_0001>
module attributes {stable_mosaic.version = 11 : i64} {
  func.func @encoder_stack_kernel(%arg0: i32, %arg1: i32, %arg2: memref<2x8x32xf32, #tpu.memory_space<vmem>>, %arg3: memref<8x32xf32, #tpu.memory_space<vmem>>, %arg4: memref<2x8x8xf32, #tpu.memory_space<vmem>>, %arg5: memref<1x4x32x8xf32, #tpu.memory_space<vmem>>, %arg6: memref<1x4x1x8xf32, #tpu.memory_space<vmem>>, %arg7: memref<1x4x32x8xf32, #tpu.memory_space<vmem>>, %arg8: memref<1x4x1x8xf32, #tpu.memory_space<vmem>>, %arg9: memref<1x4x32x8xf32, #tpu.memory_space<vmem>>, %arg10: memref<1x4x1x8xf32, #tpu.memory_space<vmem>>, %arg11: memref<1x4x8x32xf32, #tpu.memory_space<vmem>>, %arg12: memref<1x1x32xf32, #tpu.memory_space<vmem>>, %arg13: memref<1x32x64xf32, #tpu.memory_space<vmem>>, %arg14: memref<1x1x64xf32, #tpu.memory_space<vmem>>, %arg15: memref<1x64x32xf32, #tpu.memory_space<vmem>>, %arg16: memref<1x1x32xf32, #tpu.memory_space<vmem>>, %arg17: memref<1x1x32xf32, #tpu.memory_space<vmem>>, %arg18: memref<1x1x32xf32, #tpu.memory_space<vmem>>, %arg19: memref<1x1x32xf32, #tpu.memory_space<vmem>>, %arg20: memref<1x1x32xf32, #tpu.memory_space<vmem>>, %arg21: memref<2x8x32xf32, #tpu.memory_space<vmem>>) attributes {dimension_semantics = [#tpu.dimension_semantics<parallel>, #tpu.dimension_semantics<arbitrary>], iteration_bounds = array<i64: 1, 2>, scalar_prefetch = 0 : i64, scratch_operands = 0 : i64, tpu.core_type = #tpu.core_type<tc>, window_params = [{transform_indices = @transform_0, window_bounds = array<i64: 2, 8, 32>}, {pipeline_mode = #tpu.pipeline_mode<synchronous>, transform_indices = @transform_1, window_bounds = array<i64: 8, 32>}, {transform_indices = @transform_2, window_bounds = array<i64: 2, 8, 8>}, {transform_indices = @transform_3, window_bounds = array<i64: 1, 4, 32, 8>}, {transform_indices = @transform_4, window_bounds = array<i64: 1, 4, 1, 8>}, {transform_indices = @transform_5, window_bounds = array<i64: 1, 4, 32, 8>}, {transform_indices = @transform_6, window_bounds = array<i64: 1, 4, 1, 8>}, {transform_indices = @transform_7, window_bounds = array<i64: 1, 4, 32, 8>}, {transform_indices = @transform_8, window_bounds = array<i64: 1, 4, 1, 8>}, {transform_indices = @transform_9, window_bounds = array<i64: 1, 4, 8, 32>}, {transform_indices = @transform_10, window_bounds = array<i64: 1, 1, 32>}, {transform_indices = @transform_11, window_bounds = array<i64: 1, 32, 64>}, {transform_indices = @transform_12, window_bounds = array<i64: 1, 1, 64>}, {transform_indices = @transform_13, window_bounds = array<i64: 1, 64, 32>}, {transform_indices = @transform_14, window_bounds = array<i64: 1, 1, 32>}, {transform_indices = @transform_15, window_bounds = array<i64: 1, 1, 32>}, {transform_indices = @transform_16, window_bounds = array<i64: 1, 1, 32>}, {transform_indices = @transform_17, window_bounds = array<i64: 1, 1, 32>}, {transform_indices = @transform_18, window_bounds = array<i64: 1, 1, 32>}, {transform_indices = @transform_19, window_bounds = array<i64: 2, 8, 32>}]} {
    %c0 = arith.constant 0 : index
    %c0_0 = arith.constant 0 : index
    %0 = vector.load %arg3[%c0, %c0_0] : memref<8x32xf32, #tpu.memory_space<vmem>>, vector<8x32xf32>
    %c0_1 = arith.constant 0 : index
    %c0_2 = arith.constant 0 : index
    %c0_3 = arith.constant 0 : index
    %c0_4 = arith.constant 0 : index
    %1 = vector.load %arg5[%c0_1, %c0_2, %c0_3, %c0_4] : memref<1x4x32x8xf32, #tpu.memory_space<vmem>>, vector<1x4x32x8xf32>
    %2 = vector.shape_cast %1 : vector<1x4x32x8xf32> to vector<4x32x8xf32>
    %c0_5 = arith.constant 0 : index
    %c0_6 = arith.constant 0 : index
    %c0_7 = arith.constant 0 : index
    %c0_8 = arith.constant 0 : index
    %3 = vector.load %arg6[%c0_5, %c0_6, %c0_7, %c0_8] : memref<1x4x1x8xf32, #tpu.memory_space<vmem>>, vector<1x4x1x8xf32>
    %4 = vector.shape_cast %3 : vector<1x4x1x8xf32> to vector<4x1x8xf32>
    %c0_9 = arith.constant 0 : index
    %c0_10 = arith.constant 0 : index
    %c0_11 = arith.constant 0 : index
    %c0_12 = arith.constant 0 : index
    %5 = vector.load %arg7[%c0_9, %c0_10, %c0_11, %c0_12] : memref<1x4x32x8xf32, #tpu.memory_space<vmem>>, vector<1x4x32x8xf32>
    %6 = vector.shape_cast %5 : vector<1x4x32x8xf32> to vector<4x32x8xf32>
    %c0_13 = arith.constant 0 : index
    %c0_14 = arith.constant 0 : index
    %c0_15 = arith.constant 0 : index
    %c0_16 = arith.constant 0 : index
    %7 = vector.load %arg8[%c0_13, %c0_14, %c0_15, %c0_16] : memref<1x4x1x8xf32, #tpu.memory_space<vmem>>, vector<1x4x1x8xf32>
    %8 = vector.shape_cast %7 : vector<1x4x1x8xf32> to vector<4x1x8xf32>
    %c0_17 = arith.constant 0 : index
    %c0_18 = arith.constant 0 : index
    %c0_19 = arith.constant 0 : index
    %c0_20 = arith.constant 0 : index
    %9 = vector.load %arg9[%c0_17, %c0_18, %c0_19, %c0_20] : memref<1x4x32x8xf32, #tpu.memory_space<vmem>>, vector<1x4x32x8xf32>
    %10 = vector.shape_cast %9 : vector<1x4x32x8xf32> to vector<4x32x8xf32>
    %c0_21 = arith.constant 0 : index
    %c0_22 = arith.constant 0 : index
    %c0_23 = arith.constant 0 : index
    %c0_24 = arith.constant 0 : index
    %11 = vector.load %arg10[%c0_21, %c0_22, %c0_23, %c0_24] : memref<1x4x1x8xf32, #tpu.memory_space<vmem>>, vector<1x4x1x8xf32>
    %12 = vector.shape_cast %11 : vector<1x4x1x8xf32> to vector<4x1x8xf32>
    %c0_25 = arith.constant 0 : index
    %c0_26 = arith.constant 0 : index
    %c0_27 = arith.constant 0 : index
    %c0_28 = arith.constant 0 : index
    %13 = vector.load %arg11[%c0_25, %c0_26, %c0_27, %c0_28] : memref<1x4x8x32xf32, #tpu.memory_space<vmem>>, vector<1x4x8x32xf32>
    %14 = vector.shape_cast %13 : vector<1x4x8x32xf32> to vector<4x8x32xf32>
    %c0_29 = arith.constant 0 : index
    %c0_30 = arith.constant 0 : index
    %c0_31 = arith.constant 0 : index
    %15 = vector.load %arg12[%c0_29, %c0_30, %c0_31] : memref<1x1x32xf32, #tpu.memory_space<vmem>>, vector<1x1x32xf32>
    %16 = vector.shape_cast %15 : vector<1x1x32xf32> to vector<1x32xf32>
    %c0_32 = arith.constant 0 : index
    %c0_33 = arith.constant 0 : index
    %c0_34 = arith.constant 0 : index
    %17 = vector.load %arg13[%c0_32, %c0_33, %c0_34] : memref<1x32x64xf32, #tpu.memory_space<vmem>>, vector<1x32x64xf32>
    %18 = vector.shape_cast %17 : vector<1x32x64xf32> to vector<32x64xf32>
    %c0_35 = arith.constant 0 : index
    %c0_36 = arith.constant 0 : index
    %c0_37 = arith.constant 0 : index
    %19 = vector.load %arg14[%c0_35, %c0_36, %c0_37] : memref<1x1x64xf32, #tpu.memory_space<vmem>>, vector<1x1x64xf32>
    %20 = vector.shape_cast %19 : vector<1x1x64xf32> to vector<1x64xf32>
    %c0_38 = arith.constant 0 : index
    %c0_39 = arith.constant 0 : index
    %c0_40 = arith.constant 0 : index
    %21 = vector.load %arg15[%c0_38, %c0_39, %c0_40] : memref<1x64x32xf32, #tpu.memory_space<vmem>>, vector<1x64x32xf32>
    %22 = vector.shape_cast %21 : vector<1x64x32xf32> to vector<64x32xf32>
    %c0_41 = arith.constant 0 : index
    %c0_42 = arith.constant 0 : index
    %c0_43 = arith.constant 0 : index
    %23 = vector.load %arg16[%c0_41, %c0_42, %c0_43] : memref<1x1x32xf32, #tpu.memory_space<vmem>>, vector<1x1x32xf32>
    %24 = vector.shape_cast %23 : vector<1x1x32xf32> to vector<1x32xf32>
    %c0_44 = arith.constant 0 : index
    %c0_45 = arith.constant 0 : index
    %c0_46 = arith.constant 0 : index
    %25 = vector.load %arg17[%c0_44, %c0_45, %c0_46] : memref<1x1x32xf32, #tpu.memory_space<vmem>>, vector<1x1x32xf32>
    %26 = vector.shape_cast %25 : vector<1x1x32xf32> to vector<1x32xf32>
    %c0_47 = arith.constant 0 : index
    %c0_48 = arith.constant 0 : index
    %c0_49 = arith.constant 0 : index
    %27 = vector.load %arg18[%c0_47, %c0_48, %c0_49] : memref<1x1x32xf32, #tpu.memory_space<vmem>>, vector<1x1x32xf32>
    %28 = vector.shape_cast %27 : vector<1x1x32xf32> to vector<1x32xf32>
    %c0_50 = arith.constant 0 : index
    %c0_51 = arith.constant 0 : index
    %c0_52 = arith.constant 0 : index
    %29 = vector.load %arg19[%c0_50, %c0_51, %c0_52] : memref<1x1x32xf32, #tpu.memory_space<vmem>>, vector<1x1x32xf32>
    %30 = vector.shape_cast %29 : vector<1x1x32xf32> to vector<1x32xf32>
    %c0_53 = arith.constant 0 : index
    %c0_54 = arith.constant 0 : index
    %c0_55 = arith.constant 0 : index
    %31 = vector.load %arg20[%c0_53, %c0_54, %c0_55] : memref<1x1x32xf32, #tpu.memory_space<vmem>>, vector<1x1x32xf32>
    %32 = vector.shape_cast %31 : vector<1x1x32xf32> to vector<1x32xf32>
    %c0_56 = arith.constant 0 : index
    %c0_57 = arith.constant 0 : index
    %c0_58 = arith.constant 0 : index
    %33 = vector.load %arg2[%c0_56, %c0_57, %c0_58] : memref<2x8x32xf32, #tpu.memory_space<vmem>>, vector<1x8x32xf32>
    %34 = vector.shape_cast %33 : vector<1x8x32xf32> to vector<8x32xf32>
    %35 = arith.addf %34, %0 : vector<8x32xf32>
    %c0_59 = arith.constant 0 : index
    %c0_60 = arith.constant 0 : index
    %c0_61 = arith.constant 0 : index
    %36 = vector.load %arg4[%c0_59, %c0_60, %c0_61] : memref<2x8x8xf32, #tpu.memory_space<vmem>>, vector<1x8x8xf32>
    %37 = vector.shape_cast %36 : vector<1x8x8xf32> to vector<8x8xf32>
    %38 = vector.shape_cast %35 : vector<8x32xf32> to vector<1x8x32xf32>
    %39 = vector.shape_cast %38 : vector<1x8x32xf32> to vector<1x8x32xf32>
    %40 = vector.broadcast %39 : vector<1x8x32xf32> to vector<4x8x32xf32>
    "tpu.trace_start"() <{level = 10 : i32, message = "hsd,hde->hse"}> : () -> ()
    %cst = arith.constant dense<0.000000e+00> : vector<4x8x8xf32>
    %41 = tpu.matmul %40, %2, %cst {dimension_numbers = #tpu.dot_dimension_numbers<[2], [1], [1], [2], [0, 0, 0, 1, 1, 2], [0], [0]>} : vector<4x8x32xf32>, vector<4x32x8xf32>, vector<4x8x8xf32> -> vector<4x8x8xf32>
    "tpu.trace_stop"() : () -> ()
    %42 = vector.broadcast %4 : vector<4x1x8xf32> to vector<4x8x8xf32>
    %43 = arith.addf %41, %42 : vector<4x8x8xf32>
    "tpu.trace_start"() <{level = 10 : i32, message = "hsd,hde->hse"}> : () -> ()
    %cst_62 = arith.constant dense<0.000000e+00> : vector<4x8x8xf32>
    %44 = tpu.matmul %40, %6, %cst_62 {dimension_numbers = #tpu.dot_dimension_numbers<[2], [1], [1], [2], [0, 0, 0, 1, 1, 2], [0], [0]>} : vector<4x8x32xf32>, vector<4x32x8xf32>, vector<4x8x8xf32> -> vector<4x8x8xf32>
    "tpu.trace_stop"() : () -> ()
    %45 = vector.broadcast %8 : vector<4x1x8xf32> to vector<4x8x8xf32>
    %46 = arith.addf %44, %45 : vector<4x8x8xf32>
    "tpu.trace_start"() <{level = 10 : i32, message = "hsd,hde->hse"}> : () -> ()
    %cst_63 = arith.constant dense<0.000000e+00> : vector<4x8x8xf32>
    %47 = tpu.matmul %40, %10, %cst_63 {dimension_numbers = #tpu.dot_dimension_numbers<[2], [1], [1], [2], [0, 0, 0, 1, 1, 2], [0], [0]>} : vector<4x8x32xf32>, vector<4x32x8xf32>, vector<4x8x8xf32> -> vector<4x8x8xf32>
    "tpu.trace_stop"() : () -> ()
    %48 = vector.broadcast %12 : vector<4x1x8xf32> to vector<4x8x8xf32>
    %49 = arith.addf %47, %48 : vector<4x8x8xf32>
    "tpu.trace_start"() <{level = 10 : i32, message = "hqe,hke->hqk"}> : () -> ()
    %cst_64 = arith.constant dense<0.000000e+00> : vector<4x8x8xf32>
    %50 = tpu.matmul %43, %46, %cst_64 {dimension_numbers = #tpu.dot_dimension_numbers<[2], [2], [1], [1], [0, 0, 0, 1, 1, 1], [0], [0]>} : vector<4x8x8xf32>, vector<4x8x8xf32>, vector<4x8x8xf32> -> vector<4x8x8xf32>
    "tpu.trace_stop"() : () -> ()
    %51 = vector.shape_cast %37 : vector<8x8xf32> to vector<1x8x8xf32>
    %52 = vector.broadcast %51 : vector<1x8x8xf32> to vector<4x8x8xf32>
    %53 = arith.addf %50, %52 : vector<4x8x8xf32>
    %cst_65 = arith.constant dense<0xFF800000> : vector<4x8xf32>
    %54 = vector.multi_reduction <maximumf>, %53, %cst_65 [2] : vector<4x8x8xf32> to vector<4x8xf32>
    %55 = vector.shape_cast %54 : vector<4x8xf32> to vector<4x8x1xf32>
    %56 = vector.broadcast %55 : vector<4x8x1xf32> to vector<4x8x8xf32>
    %57 = arith.subf %53, %56 : vector<4x8x8xf32>
    %58 = math.exp %57 : vector<4x8x8xf32>
    %cst_66 = arith.constant dense<0.000000e+00> : vector<4x8xf32>
    %59 = vector.multi_reduction <add>, %58, %cst_66 [2] : vector<4x8x8xf32> to vector<4x8xf32>
    %60 = vector.shape_cast %59 : vector<4x8xf32> to vector<4x8x1xf32>
    %61 = tpu.reciprocal %60 {approx = true} : vector<4x8x1xf32> -> vector<4x8x1xf32>
    %62 = vector.broadcast %61 : vector<4x8x1xf32> to vector<4x8x8xf32>
    %63 = arith.mulf %58, %62 : vector<4x8x8xf32>
    "tpu.trace_start"() <{level = 10 : i32, message = "hqk,hke->hqe"}> : () -> ()
    %cst_67 = arith.constant dense<0.000000e+00> : vector<4x8x8xf32>
    %64 = tpu.matmul %63, %49, %cst_67 {dimension_numbers = #tpu.dot_dimension_numbers<[2], [1], [1], [2], [0, 0, 0, 1, 1, 2], [0], [0]>} : vector<4x8x8xf32>, vector<4x8x8xf32>, vector<4x8x8xf32> -> vector<4x8x8xf32>
    "tpu.trace_stop"() : () -> ()
    "tpu.trace_start"() <{level = 10 : i32, message = "hse,hed->hsd"}> : () -> ()
    %cst_68 = arith.constant dense<0.000000e+00> : vector<4x8x32xf32>
    %65 = tpu.matmul %64, %14, %cst_68 {dimension_numbers = #tpu.dot_dimension_numbers<[2], [1], [1], [2], [0, 0, 0, 1, 1, 2], [0], [0]>} : vector<4x8x8xf32>, vector<4x8x32xf32>, vector<4x8x32xf32> -> vector<4x8x32xf32>
    "tpu.trace_stop"() : () -> ()
    %cst_69 = arith.constant dense<0.000000e+00> : vector<8x32xf32>
    %66 = vector.multi_reduction <add>, %65, %cst_69 [0] : vector<4x8x32xf32> to vector<8x32xf32>
    %67 = vector.broadcast %16 : vector<1x32xf32> to vector<8x32xf32>
    %68 = arith.addf %66, %67 : vector<8x32xf32>
    %69 = arith.addf %35, %68 : vector<8x32xf32>
    %cst_70 = arith.constant dense<0.000000e+00> : vector<8xf32>
    %70 = vector.multi_reduction <add>, %69, %cst_70 [1] : vector<8x32xf32> to vector<8xf32>
    %71 = vector.shape_cast %70 : vector<8xf32> to vector<8x1xf32>
    %cst_71 = arith.constant 3.200000e+01 : f32
    %72 = vector.broadcast %cst_71 : f32 to vector<8x1xf32>
    %73 = arith.divf %71, %72 : vector<8x1xf32>
    %74 = vector.broadcast %73 : vector<8x1xf32> to vector<8x32xf32>
    %75 = arith.subf %69, %74 : vector<8x32xf32>
    %76 = arith.mulf %75, %75 : vector<8x32xf32>
    %cst_72 = arith.constant dense<0.000000e+00> : vector<8xf32>
    %77 = vector.multi_reduction <add>, %76, %cst_72 [1] : vector<8x32xf32> to vector<8xf32>
    %78 = vector.shape_cast %77 : vector<8xf32> to vector<8x1xf32>
    %cst_73 = arith.constant 3.200000e+01 : f32
    %79 = vector.broadcast %cst_73 : f32 to vector<8x1xf32>
    %80 = arith.divf %78, %79 : vector<8x1xf32>
    %81 = vector.broadcast %73 : vector<8x1xf32> to vector<8x32xf32>
    %82 = arith.subf %69, %81 : vector<8x32xf32>
    %cst_74 = arith.constant 9.99999974E-6 : f32
    %83 = vector.broadcast %cst_74 : f32 to vector<8x1xf32>
    %84 = arith.addf %80, %83 : vector<8x1xf32>
    %85 = math.rsqrt %84 : vector<8x1xf32>
    %86 = vector.broadcast %85 : vector<8x1xf32> to vector<8x32xf32>
    %87 = arith.mulf %82, %86 : vector<8x32xf32>
    %88 = vector.broadcast %26 : vector<1x32xf32> to vector<8x32xf32>
    %89 = arith.mulf %87, %88 : vector<8x32xf32>
    %90 = vector.broadcast %28 : vector<1x32xf32> to vector<8x32xf32>
    %91 = arith.addf %89, %90 : vector<8x32xf32>
    %cst_75 = arith.constant dense<0.000000e+00> : vector<8x64xf32>
    %92 = tpu.matmul %91, %18, %cst_75 {dimension_numbers = #tpu.dot_dimension_numbers<[1], [0], [0], [1], [0, 0, 1, 1], [], []>} : vector<8x32xf32>, vector<32x64xf32>, vector<8x64xf32> -> vector<8x64xf32>
    %93 = vector.broadcast %20 : vector<1x64xf32> to vector<8x64xf32>
    %94 = arith.addf %92, %93 : vector<8x64xf32>
    %cst_76 = arith.constant 0.000000e+00 : f32
    %95 = vector.broadcast %cst_76 : f32 to vector<8x64xf32>
    %96 = arith.maximumf %94, %95 : vector<8x64xf32>
    %cst_77 = arith.constant dense<0.000000e+00> : vector<8x32xf32>
    %97 = tpu.matmul %96, %22, %cst_77 {dimension_numbers = #tpu.dot_dimension_numbers<[1], [0], [0], [1], [0, 0, 1, 1], [], []>} : vector<8x64xf32>, vector<64x32xf32>, vector<8x32xf32> -> vector<8x32xf32>
    %98 = vector.broadcast %24 : vector<1x32xf32> to vector<8x32xf32>
    %99 = arith.addf %97, %98 : vector<8x32xf32>
    %100 = arith.addf %91, %99 : vector<8x32xf32>
    %cst_78 = arith.constant dense<0.000000e+00> : vector<8xf32>
    %101 = vector.multi_reduction <add>, %100, %cst_78 [1] : vector<8x32xf32> to vector<8xf32>
    %102 = vector.shape_cast %101 : vector<8xf32> to vector<8x1xf32>
    %cst_79 = arith.constant 3.200000e+01 : f32
    %103 = vector.broadcast %cst_79 : f32 to vector<8x1xf32>
    %104 = arith.divf %102, %103 : vector<8x1xf32>
    %105 = vector.broadcast %104 : vector<8x1xf32> to vector<8x32xf32>
    %106 = arith.subf %100, %105 : vector<8x32xf32>
    %107 = arith.mulf %106, %106 : vector<8x32xf32>
    %cst_80 = arith.constant dense<0.000000e+00> : vector<8xf32>
    %108 = vector.multi_reduction <add>, %107, %cst_80 [1] : vector<8x32xf32> to vector<8xf32>
    %109 = vector.shape_cast %108 : vector<8xf32> to vector<8x1xf32>
    %cst_81 = arith.constant 3.200000e+01 : f32
    %110 = vector.broadcast %cst_81 : f32 to vector<8x1xf32>
    %111 = arith.divf %109, %110 : vector<8x1xf32>
    %112 = vector.broadcast %104 : vector<8x1xf32> to vector<8x32xf32>
    %113 = arith.subf %100, %112 : vector<8x32xf32>
    %cst_82 = arith.constant 9.99999974E-6 : f32
    %114 = vector.broadcast %cst_82 : f32 to vector<8x1xf32>
    %115 = arith.addf %111, %114 : vector<8x1xf32>
    %116 = math.rsqrt %115 : vector<8x1xf32>
    %117 = vector.broadcast %116 : vector<8x1xf32> to vector<8x32xf32>
    %118 = arith.mulf %113, %117 : vector<8x32xf32>
    %119 = vector.broadcast %30 : vector<1x32xf32> to vector<8x32xf32>
    %120 = arith.mulf %118, %119 : vector<8x32xf32>
    %121 = vector.broadcast %32 : vector<1x32xf32> to vector<8x32xf32>
    %122 = arith.addf %120, %121 : vector<8x32xf32>
    %c0_83 = arith.constant 0 : index
    %c0_84 = arith.constant 0 : index
    %c0_85 = arith.constant 0 : index
    %123 = vector.load %arg21[%c0_83, %c0_84, %c0_85] : memref<2x8x32xf32, #tpu.memory_space<vmem>>, vector<1x8x32xf32>
    %124 = vector.shape_cast %123 : vector<1x8x32xf32> to vector<8x32xf32>
    %125 = vector.shape_cast %122 : vector<8x32xf32> to vector<1x8x32xf32>
    tpu.vector_store %arg21[%c0_83, %c0_84, %c0_85], %125 {strides = array<i32>} : memref<2x8x32xf32, #tpu.memory_space<vmem>>, vector<1x8x32xf32>,
    %c1 = arith.constant 1 : index
    %c0_86 = arith.constant 0 : index
    %c0_87 = arith.constant 0 : index
    %126 = vector.load %arg2[%c1, %c0_86, %c0_87] : memref<2x8x32xf32, #tpu.memory_space<vmem>>, vector<1x8x32xf32>
    %127 = vector.shape_cast %126 : vector<1x8x32xf32> to vector<8x32xf32>
    %128 = arith.addf %127, %0 : vector<8x32xf32>
    %c1_88 = arith.constant 1 : index
    %c0_89 = arith.constant 0 : index
    %c0_90 = arith.constant 0 : index
    %129 = vector.load %arg4[%c1_88, %c0_89, %c0_90] : memref<2x8x8xf32, #tpu.memory_space<vmem>>, vector<1x8x8xf32>
    %130 = vector.shape_cast %129 : vector<1x8x8xf32> to vector<8x8xf32>
    %131 = vector.shape_cast %128 : vector<8x32xf32> to vector<1x8x32xf32>
    %132 = vector.shape_cast %131 : vector<1x8x32xf32> to vector<1x8x32xf32>
    %133 = vector.broadcast %132 : vector<1x8x32xf32> to vector<4x8x32xf32>
    "tpu.trace_start"() <{level = 10 : i32, message = "hsd,hde->hse"}> : () -> ()
    %cst_91 = arith.constant dense<0.000000e+00> : vector<4x8x8xf32>
    %134 = tpu.matmul %133, %2, %cst_91 {dimension_numbers = #tpu.dot_dimension_numbers<[2], [1], [1], [2], [0, 0, 0, 1, 1, 2], [0], [0]>} : vector<4x8x32xf32>, vector<4x32x8xf32>, vector<4x8x8xf32> -> vector<4x8x8xf32>
    "tpu.trace_stop"() : () -> ()
    %135 = vector.broadcast %4 : vector<4x1x8xf32> to vector<4x8x8xf32>
    %136 = arith.addf %134, %135 : vector<4x8x8xf32>
    "tpu.trace_start"() <{level = 10 : i32, message = "hsd,hde->hse"}> : () -> ()
    %cst_92 = arith.constant dense<0.000000e+00> : vector<4x8x8xf32>
    %137 = tpu.matmul %133, %6, %cst_92 {dimension_numbers = #tpu.dot_dimension_numbers<[2], [1], [1], [2], [0, 0, 0, 1, 1, 2], [0], [0]>} : vector<4x8x32xf32>, vector<4x32x8xf32>, vector<4x8x8xf32> -> vector<4x8x8xf32>
    "tpu.trace_stop"() : () -> ()
    %138 = vector.broadcast %8 : vector<4x1x8xf32> to vector<4x8x8xf32>
    %139 = arith.addf %137, %138 : vector<4x8x8xf32>
    "tpu.trace_start"() <{level = 10 : i32, message = "hsd,hde->hse"}> : () -> ()
    %cst_93 = arith.constant dense<0.000000e+00> : vector<4x8x8xf32>
    %140 = tpu.matmul %133, %10, %cst_93 {dimension_numbers = #tpu.dot_dimension_numbers<[2], [1], [1], [2], [0, 0, 0, 1, 1, 2], [0], [0]>} : vector<4x8x32xf32>, vector<4x32x8xf32>, vector<4x8x8xf32> -> vector<4x8x8xf32>
    "tpu.trace_stop"() : () -> ()
    %141 = vector.broadcast %12 : vector<4x1x8xf32> to vector<4x8x8xf32>
    %142 = arith.addf %140, %141 : vector<4x8x8xf32>
    "tpu.trace_start"() <{level = 10 : i32, message = "hqe,hke->hqk"}> : () -> ()
    %cst_94 = arith.constant dense<0.000000e+00> : vector<4x8x8xf32>
    %143 = tpu.matmul %136, %139, %cst_94 {dimension_numbers = #tpu.dot_dimension_numbers<[2], [2], [1], [1], [0, 0, 0, 1, 1, 1], [0], [0]>} : vector<4x8x8xf32>, vector<4x8x8xf32>, vector<4x8x8xf32> -> vector<4x8x8xf32>
    "tpu.trace_stop"() : () -> ()
    %144 = vector.shape_cast %130 : vector<8x8xf32> to vector<1x8x8xf32>
    %145 = vector.broadcast %144 : vector<1x8x8xf32> to vector<4x8x8xf32>
    %146 = arith.addf %143, %145 : vector<4x8x8xf32>
    %cst_95 = arith.constant dense<0xFF800000> : vector<4x8xf32>
    %147 = vector.multi_reduction <maximumf>, %146, %cst_95 [2] : vector<4x8x8xf32> to vector<4x8xf32>
    %148 = vector.shape_cast %147 : vector<4x8xf32> to vector<4x8x1xf32>
    %149 = vector.broadcast %148 : vector<4x8x1xf32> to vector<4x8x8xf32>
    %150 = arith.subf %146, %149 : vector<4x8x8xf32>
    %151 = math.exp %150 : vector<4x8x8xf32>
    %cst_96 = arith.constant dense<0.000000e+00> : vector<4x8xf32>
    %152 = vector.multi_reduction <add>, %151, %cst_96 [2] : vector<4x8x8xf32> to vector<4x8xf32>
    %153 = vector.shape_cast %152 : vector<4x8xf32> to vector<4x8x1xf32>
    %154 = tpu.reciprocal %153 {approx = true} : vector<4x8x1xf32> -> vector<4x8x1xf32>
    %155 = vector.broadcast %154 : vector<4x8x1xf32> to vector<4x8x8xf32>
    %156 = arith.mulf %151, %155 : vector<4x8x8xf32>
    "tpu.trace_start"() <{level = 10 : i32, message = "hqk,hke->hqe"}> : () -> ()
    %cst_97 = arith.constant dense<0.000000e+00> : vector<4x8x8xf32>
    %157 = tpu.matmul %156, %142, %cst_97 {dimension_numbers = #tpu.dot_dimension_numbers<[2], [1], [1], [2], [0, 0, 0, 1, 1, 2], [0], [0]>} : vector<4x8x8xf32>, vector<4x8x8xf32>, vector<4x8x8xf32> -> vector<4x8x8xf32>
    "tpu.trace_stop"() : () -> ()
    "tpu.trace_start"() <{level = 10 : i32, message = "hse,hed->hsd"}> : () -> ()
    %cst_98 = arith.constant dense<0.000000e+00> : vector<4x8x32xf32>
    %158 = tpu.matmul %157, %14, %cst_98 {dimension_numbers = #tpu.dot_dimension_numbers<[2], [1], [1], [2], [0, 0, 0, 1, 1, 2], [0], [0]>} : vector<4x8x8xf32>, vector<4x8x32xf32>, vector<4x8x32xf32> -> vector<4x8x32xf32>
    "tpu.trace_stop"() : () -> ()
    %cst_99 = arith.constant dense<0.000000e+00> : vector<8x32xf32>
    %159 = vector.multi_reduction <add>, %158, %cst_99 [0] : vector<4x8x32xf32> to vector<8x32xf32>
    %160 = vector.broadcast %16 : vector<1x32xf32> to vector<8x32xf32>
    %161 = arith.addf %159, %160 : vector<8x32xf32>
    %162 = arith.addf %128, %161 : vector<8x32xf32>
    %cst_100 = arith.constant dense<0.000000e+00> : vector<8xf32>
    %163 = vector.multi_reduction <add>, %162, %cst_100 [1] : vector<8x32xf32> to vector<8xf32>
    %164 = vector.shape_cast %163 : vector<8xf32> to vector<8x1xf32>
    %cst_101 = arith.constant 3.200000e+01 : f32
    %165 = vector.broadcast %cst_101 : f32 to vector<8x1xf32>
    %166 = arith.divf %164, %165 : vector<8x1xf32>
    %167 = vector.broadcast %166 : vector<8x1xf32> to vector<8x32xf32>
    %168 = arith.subf %162, %167 : vector<8x32xf32>
    %169 = arith.mulf %168, %168 : vector<8x32xf32>
    %cst_102 = arith.constant dense<0.000000e+00> : vector<8xf32>
    %170 = vector.multi_reduction <add>, %169, %cst_102 [1] : vector<8x32xf32> to vector<8xf32>
    %171 = vector.shape_cast %170 : vector<8xf32> to vector<8x1xf32>
    %cst_103 = arith.constant 3.200000e+01 : f32
    %172 = vector.broadcast %cst_103 : f32 to vector<8x1xf32>
    %173 = arith.divf %171, %172 : vector<8x1xf32>
    %174 = vector.broadcast %166 : vector<8x1xf32> to vector<8x32xf32>
    %175 = arith.subf %162, %174 : vector<8x32xf32>
    %cst_104 = arith.constant 9.99999974E-6 : f32
    %176 = vector.broadcast %cst_104 : f32 to vector<8x1xf32>
    %177 = arith.addf %173, %176 : vector<8x1xf32>
    %178 = math.rsqrt %177 : vector<8x1xf32>
    %179 = vector.broadcast %178 : vector<8x1xf32> to vector<8x32xf32>
    %180 = arith.mulf %175, %179 : vector<8x32xf32>
    %181 = vector.broadcast %26 : vector<1x32xf32> to vector<8x32xf32>
    %182 = arith.mulf %180, %181 : vector<8x32xf32>
    %183 = vector.broadcast %28 : vector<1x32xf32> to vector<8x32xf32>
    %184 = arith.addf %182, %183 : vector<8x32xf32>
    %cst_105 = arith.constant dense<0.000000e+00> : vector<8x64xf32>
    %185 = tpu.matmul %184, %18, %cst_105 {dimension_numbers = #tpu.dot_dimension_numbers<[1], [0], [0], [1], [0, 0, 1, 1], [], []>} : vector<8x32xf32>, vector<32x64xf32>, vector<8x64xf32> -> vector<8x64xf32>
    %186 = vector.broadcast %20 : vector<1x64xf32> to vector<8x64xf32>
    %187 = arith.addf %185, %186 : vector<8x64xf32>
    %cst_106 = arith.constant 0.000000e+00 : f32
    %188 = vector.broadcast %cst_106 : f32 to vector<8x64xf32>
    %189 = arith.maximumf %187, %188 : vector<8x64xf32>
    %cst_107 = arith.constant dense<0.000000e+00> : vector<8x32xf32>
    %190 = tpu.matmul %189, %22, %cst_107 {dimension_numbers = #tpu.dot_dimension_numbers<[1], [0], [0], [1], [0, 0, 1, 1], [], []>} : vector<8x64xf32>, vector<64x32xf32>, vector<8x32xf32> -> vector<8x32xf32>
    %191 = vector.broadcast %24 : vector<1x32xf32> to vector<8x32xf32>
    %192 = arith.addf %190, %191 : vector<8x32xf32>
    %193 = arith.addf %184, %192 : vector<8x32xf32>
    %cst_108 = arith.constant dense<0.000000e+00> : vector<8xf32>
    %194 = vector.multi_reduction <add>, %193, %cst_108 [1] : vector<8x32xf32> to vector<8xf32>
    %195 = vector.shape_cast %194 : vector<8xf32> to vector<8x1xf32>
    %cst_109 = arith.constant 3.200000e+01 : f32
    %196 = vector.broadcast %cst_109 : f32 to vector<8x1xf32>
    %197 = arith.divf %195, %196 : vector<8x1xf32>
    %198 = vector.broadcast %197 : vector<8x1xf32> to vector<8x32xf32>
    %199 = arith.subf %193, %198 : vector<8x32xf32>
    %200 = arith.mulf %199, %199 : vector<8x32xf32>
    %cst_110 = arith.constant dense<0.000000e+00> : vector<8xf32>
    %201 = vector.multi_reduction <add>, %200, %cst_110 [1] : vector<8x32xf32> to vector<8xf32>
    %202 = vector.shape_cast %201 : vector<8xf32> to vector<8x1xf32>
    %cst_111 = arith.constant 3.200000e+01 : f32
    %203 = vector.broadcast %cst_111 : f32 to vector<8x1xf32>
    %204 = arith.divf %202, %203 : vector<8x1xf32>
    %205 = vector.broadcast %197 : vector<8x1xf32> to vector<8x32xf32>
    %206 = arith.subf %193, %205 : vector<8x32xf32>
    %cst_112 = arith.constant 9.99999974E-6 : f32
    %207 = vector.broadcast %cst_112 : f32 to vector<8x1xf32>
    %208 = arith.addf %204, %207 : vector<8x1xf32>
    %209 = math.rsqrt %208 : vector<8x1xf32>
    %210 = vector.broadcast %209 : vector<8x1xf32> to vector<8x32xf32>
    %211 = arith.mulf %206, %210 : vector<8x32xf32>
    %212 = vector.broadcast %30 : vector<1x32xf32> to vector<8x32xf32>
    %213 = arith.mulf %211, %212 : vector<8x32xf32>
    %214 = vector.broadcast %32 : vector<1x32xf32> to vector<8x32xf32>
    %215 = arith.addf %213, %214 : vector<8x32xf32>
    %c1_113 = arith.constant 1 : index
    %c0_114 = arith.constant 0 : index
    %c0_115 = arith.constant 0 : index
    %216 = vector.load %arg21[%c1_113, %c0_114, %c0_115] : memref<2x8x32xf32, #tpu.memory_space<vmem>>, vector<1x8x32xf32>
    %217 = vector.shape_cast %216 : vector<1x8x32xf32> to vector<8x32xf32>
    %218 = vector.shape_cast %215 : vector<8x32xf32> to vector<1x8x32xf32>
    tpu.vector_store %arg21[%c1_113, %c0_114, %c0_115], %218 {strides = array<i32>} : memref<2x8x32xf32, #tpu.memory_space<vmem>>, vector<1x8x32xf32>,
    return
  }
  func.func @transform_0(%arg0: i32, %arg1: i32) -> (i32, i32, i32) {
    %c0_i32 = arith.constant 0 : i32
    %c0_i32_0 = arith.constant 0 : i32
    %c0_i32_1 = arith.constant 0 : i32
    return %arg0, %c0_i32, %c0_i32_0 : i32, i32, i32
  }
  func.func @transform_1(%arg0: i32, %arg1: i32) -> (i32, i32) {
    %c0_i32 = arith.constant 0 : i32
    %c0_i32_0 = arith.constant 0 : i32
    %c0_i32_1 = arith.constant 0 : i32
    return %c0_i32, %c0_i32_0 : i32, i32
  }
  func.func @transform_2(%arg0: i32, %arg1: i32) -> (i32, i32, i32) {
    %c0_i32 = arith.constant 0 : i32
    %c0_i32_0 = arith.constant 0 : i32
    %c0_i32_1 = arith.constant 0 : i32
    return %arg0, %c0_i32, %c0_i32_0 : i32, i32, i32
  }
  func.func @transform_3(%arg0: i32, %arg1: i32) -> (i32, i32, i32, i32) {
    %c0_i32 = arith.constant 0 : i32
    %c0_i32_0 = arith.constant 0 : i32
    %c0_i32_1 = arith.constant 0 : i32
    %c0_i32_2 = arith.constant 0 : i32
    return %arg1, %c0_i32, %c0_i32_0, %c0_i32_1 : i32, i32, i32, i32
  }
  func.func @transform_4(%arg0: i32, %arg1: i32) -> (i32, i32, i32, i32) {
    %c0_i32 = arith.constant 0 : i32
    %c0_i32_0 = arith.constant 0 : i32
    %c0_i32_1 = arith.constant 0 : i32
    %c0_i32_2 = arith.constant 0 : i32
    return %arg1, %c0_i32, %c0_i32_0, %c0_i32_1 : i32, i32, i32, i32
  }
  func.func @transform_5(%arg0: i32, %arg1: i32) -> (i32, i32, i32, i32) {
    %c0_i32 = arith.constant 0 : i32
    %c0_i32_0 = arith.constant 0 : i32
    %c0_i32_1 = arith.constant 0 : i32
    %c0_i32_2 = arith.constant 0 : i32
    return %arg1, %c0_i32, %c0_i32_0, %c0_i32_1 : i32, i32, i32, i32
  }
  func.func @transform_6(%arg0: i32, %arg1: i32) -> (i32, i32, i32, i32) {
    %c0_i32 = arith.constant 0 : i32
    %c0_i32_0 = arith.constant 0 : i32
    %c0_i32_1 = arith.constant 0 : i32
    %c0_i32_2 = arith.constant 0 : i32
    return %arg1, %c0_i32, %c0_i32_0, %c0_i32_1 : i32, i32, i32, i32
  }
  func.func @transform_7(%arg0: i32, %arg1: i32) -> (i32, i32, i32, i32) {
    %c0_i32 = arith.constant 0 : i32
    %c0_i32_0 = arith.constant 0 : i32
    %c0_i32_1 = arith.constant 0 : i32
    %c0_i32_2 = arith.constant 0 : i32
    return %arg1, %c0_i32, %c0_i32_0, %c0_i32_1 : i32, i32, i32, i32
  }
  func.func @transform_8(%arg0: i32, %arg1: i32) -> (i32, i32, i32, i32) {
    %c0_i32 = arith.constant 0 : i32
    %c0_i32_0 = arith.constant 0 : i32
    %c0_i32_1 = arith.constant 0 : i32
    %c0_i32_2 = arith.constant 0 : i32
    return %arg1, %c0_i32, %c0_i32_0, %c0_i32_1 : i32, i32, i32, i32
  }
  func.func @transform_9(%arg0: i32, %arg1: i32) -> (i32, i32, i32, i32) {
    %c0_i32 = arith.constant 0 : i32
    %c0_i32_0 = arith.constant 0 : i32
    %c0_i32_1 = arith.constant 0 : i32
    %c0_i32_2 = arith.constant 0 : i32
    return %arg1, %c0_i32, %c0_i32_0, %c0_i32_1 : i32, i32, i32, i32
  }
  func.func @transform_10(%arg0: i32, %arg1: i32) -> (i32, i32, i32) {
    %c0_i32 = arith.constant 0 : i32
    %c0_i32_0 = arith.constant 0 : i32
    %c0_i32_1 = arith.constant 0 : i32
    return %arg1, %c0_i32, %c0_i32_0 : i32, i32, i32
  }
  func.func @transform_11(%arg0: i32, %arg1: i32) -> (i32, i32, i32) {
    %c0_i32 = arith.constant 0 : i32
    %c0_i32_0 = arith.constant 0 : i32
    %c0_i32_1 = arith.constant 0 : i32
    return %arg1, %c0_i32, %c0_i32_0 : i32, i32, i32
  }
  func.func @transform_12(%arg0: i32, %arg1: i32) -> (i32, i32, i32) {
    %c0_i32 = arith.constant 0 : i32
    %c0_i32_0 = arith.constant 0 : i32
    %c0_i32_1 = arith.constant 0 : i32
    return %arg1, %c0_i32, %c0_i32_0 : i32, i32, i32
  }
  func.func @transform_13(%arg0: i32, %arg1: i32) -> (i32, i32, i32) {
    %c0_i32 = arith.constant 0 : i32
    %c0_i32_0 = arith.constant 0 : i32
    %c0_i32_1 = arith.constant 0 : i32
    return %arg1, %c0_i32, %c0_i32_0 : i32, i32, i32
  }
  func.func @transform_14(%arg0: i32, %arg1: i32) -> (i32, i32, i32) {
    %c0_i32 = arith.constant 0 : i32
    %c0_i32_0 = arith.constant 0 : i32
    %c0_i32_1 = arith.constant 0 : i32
    return %arg1, %c0_i32, %c0_i32_0 : i32, i32, i32
  }
  func.func @transform_15(%arg0: i32, %arg1: i32) -> (i32, i32, i32) {
    %c0_i32 = arith.constant 0 : i32
    %c0_i32_0 = arith.constant 0 : i32
    %c0_i32_1 = arith.constant 0 : i32
    return %arg1, %c0_i32, %c0_i32_0 : i32, i32, i32
  }
  func.func @transform_16(%arg0: i32, %arg1: i32) -> (i32, i32, i32) {
    %c0_i32 = arith.constant 0 : i32
    %c0_i32_0 = arith.constant 0 : i32
    %c0_i32_1 = arith.constant 0 : i32
    return %arg1, %c0_i32, %c0_i32_0 : i32, i32, i32
  }
  func.func @transform_17(%arg0: i32, %arg1: i32) -> (i32, i32, i32) {
    %c0_i32 = arith.constant 0 : i32
    %c0_i32_0 = arith.constant 0 : i32
    %c0_i32_1 = arith.constant 0 : i32
    return %arg1, %c0_i32, %c0_i32_0 : i32, i32, i32
  }
  func.func @transform_18(%arg0: i32, %arg1: i32) -> (i32, i32, i32) {
    %c0_i32 = arith.constant 0 : i32
    %c0_i32_0 = arith.constant 0 : i32
    %c0_i32_1 = arith.constant 0 : i32
    return %arg1, %c0_i32, %c0_i32_0 : i32, i32, i32
  }
  func.func @transform_19(%arg0: i32, %arg1: i32) -> (i32, i32, i32) {
    %c0_i32 = arith.constant 0 : i32
    %c0_i32_0 = arith.constant 0 : i32
    %c0_i32_1 = arith.constant 0 : i32
    return %arg0, %c0_i32, %c0_i32_0 : i32, i32, i32
  }
}

</mosaic_0001>

<llo_original>
// kernel: tpu_custom_call.1
$region0: #{tpu_custom_call.1}
  #allocation0 [shape = 'u32[]', space=smem, size = 0x4, offset = 0x4, fixed_abs, tag = 'smem constant byte address 0x4 - core index']
  #allocation1 [shape = 'u32[144,128]{1,0:T(1,128)}', space=vmem, size = 0x12000, scoped, tag = 'internal scratch']
  %s0 = inlined_call_operand.vmem [shape: f32[2,8,32], index: 0, kind: input, shape index: {}]
  %s1 = inlined_call_operand.vmem [shape: f32[8,32], index: 1, kind: input, shape index: {}]
  %s2 = inlined_call_operand.vmem [shape: f32[2,8,8], index: 2, kind: input, shape index: {}]
  %s3 = inlined_call_operand.vmem [shape: f32[2,4,32,8], index: 3, kind: input, shape index: {}]
  %s4 = inlined_call_operand.vmem [shape: f32[2,4,1,8], index: 4, kind: input, shape index: {}]
  %s5 = inlined_call_operand.vmem [shape: f32[2,4,32,8], index: 5, kind: input, shape index: {}]
  %s6 = inlined_call_operand.vmem [shape: f32[2,4,1,8], index: 6, kind: input, shape index: {}]
  %s7 = inlined_call_operand.vmem [shape: f32[2,4,32,8], index: 7, kind: input, shape index: {}]
  %s8 = inlined_call_operand.vmem [shape: f32[2,4,1,8], index: 8, kind: input, shape index: {}]
  %s9 = inlined_call_operand.vmem [shape: f32[2,4,8,32], index: 9, kind: input, shape index: {}]
  %s10 = inlined_call_operand.vmem [shape: f32[2,1,32], index: 10, kind: input, shape index: {}]
  %s11 = inlined_call_operand.vmem [shape: f32[2,32,64], index: 11, kind: input, shape index: {}]
  %s12 = inlined_call_operand.vmem [shape: f32[2,1,64], index: 12, kind: input, shape index: {}]
  %s13 = inlined_call_operand.vmem [shape: f32[2,64,32], index: 13, kind: input, shape index: {}]
  %s14 = inlined_call_operand.vmem [shape: f32[2,1,32], index: 14, kind: input, shape index: {}]
  %s15 = inlined_call_operand.vmem [shape: f32[2,1,32], index: 15, kind: input, shape index: {}]
  %s16 = inlined_call_operand.vmem [shape: f32[2,1,32], index: 16, kind: input, shape index: {}]
  %s17 = inlined_call_operand.vmem [shape: f32[2,1,32], index: 17, kind: input, shape index: {}]
  %s18 = inlined_call_operand.vmem [shape: f32[2,1,32], index: 18, kind: input, shape index: {}]
  %s19 = inlined_call_operand.hbm [shape: f32[2,8,32], index: 19, kind: output, shape index: {}]
  %s20 = sld [smem:[#allocation0]]
  $region109: #{tpu_custom_call.1} parent=0
    _
  %s22 = ssub.s32 1, %s20
  %s23 = scalar_select 0, %s22, %s20
  $region1: #{tpu_custom_call.1} parent=0
    #allocation2 [shape = 'u8[8192]{0}', space=vmem, size = 0x2000, scoped, tag = 'output window, operand 0, single buffered']
    #allocation3 [shape = 's32[2]{0}', space=sflag, size = 0x8, scoped, tag = 'scoped memory for tpu_custom_call.1']
    %24 = vsyncpa [#allocation3], 0
    loop: start=0, step=1, limit=4
    $region2: #{tpu_custom_call.1} parent=1 // loop_pre_header
      _
    $region3: #{tpu_custom_call.1} parent=1 // loop_header
      %s26 = sphi 0, %s30
      %p27 = scmp.ge.s32.totalorder %s26, 4
      %s33 = sphi 0, %s45
      %s34 = sphi 0, %s41
      %s35 = sphi 0, %s33
      %s36 = sphi 0, %s34
      %s37 = sphi 0, %s35
      %s38 = sphi 0, %s36
      %s48 = sphi 0, %s50
      %s51 = sphi 0, %s48
      %s52 = sphi 0, %s51
      %s68 = sphi 0, %s52
      %s72 = sphi 0, %s72
      %s74 = sphi 0, %s72
      %s75 = sphi 0, %s74
      %s89 = sphi 0, %s75
      %s95 = sphi 0, %s97
      %s98 = sphi 0, %s95
      %s99 = sphi 0, %s98
      %s115 = sphi 0, %s99
      %s121 = sphi 0, %s123
      %s124 = sphi 0, %s121
      %s125 = sphi 0, %s124
      %s141 = sphi 0, %s125
      %s147 = sphi 0, %s149
      %s150 = sphi 0, %s147
      %s151 = sphi 0, %s150
      %s167 = sphi 0, %s151
      %s173 = sphi 0, %s175
      %s176 = sphi 0, %s173
      %s177 = sphi 0, %s176
      %s193 = sphi 0, %s177
      %s199 = sphi 0, %s201
      %s202 = sphi 0, %s199
      %s203 = sphi 0, %s202
      %s219 = sphi 0, %s203
      %s225 = sphi 0, %s227
      %s228 = sphi 0, %s225
      %s229 = sphi 0, %s228
      %s245 = sphi 0, %s229
      %s251 = sphi 0, %s253
      %s254 = sphi 0, %s251
      %s255 = sphi 0, %s254
      %s271 = sphi 0, %s255
      %s277 = sphi 0, %s279
      %s280 = sphi 0, %s277
      %s281 = sphi 0, %s280
      %s297 = sphi 0, %s281
      %s303 = sphi 0, %s305
      %s306 = sphi 0, %s303
      %s307 = sphi 0, %s306
      %s323 = sphi 0, %s307
      %s329 = sphi 0, %s331
      %s332 = sphi 0, %s329
      %s333 = sphi 0, %s332
      %s349 = sphi 0, %s333
      %s355 = sphi 0, %s357
      %s358 = sphi 0, %s355
      %s359 = sphi 0, %s358
      %s375 = sphi 0, %s359
      %s381 = sphi 0, %s383
      %s384 = sphi 0, %s381
      %s385 = sphi 0, %s384
      %s401 = sphi 0, %s385
      %s407 = sphi 0, %s409
      %s410 = sphi 0, %s407
      %s411 = sphi 0, %s410
      %s427 = sphi 0, %s411
      %s433 = sphi 0, %s435
      %s436 = sphi 0, %s433
      %s437 = sphi 0, %s436
      %s453 = sphi 0, %s437
      %s459 = sphi 0, %s461
      %s462 = sphi 0, %s459
      %s463 = sphi 0, %s462
      %s479 = sphi 0, %s463
      %s485 = sphi 0, %s487
      %s488 = sphi 0, %s485
      %s489 = sphi 0, %s488
      %s505 = sphi 0, %s489
      %s511 = sphi 0, %s513
      %s514 = sphi 0, %s511
      %s515 = sphi 0, %s514
      %s531 = sphi 0, %s515
      %s537 = sphi 0, %s539
      %s540 = sphi 0, %s537
      %s541 = sphi 0, %s540
      %s557 = sphi 0, %s541
    $region4: #{tpu_custom_call.1} parent=1 // loop_header_branch
      %29 = sbr.rel (%p27) target = $region8
    $region5: #{tpu_custom_call.1} parent=1 // loop_body
      %s31 = ssub.s32 %s26, 1
      %s32 = ssub.s32 %s26, 2
      %s39 = sadd.s32 1, %s34
      %p40 = scmp.ge.s32.totalorder %s39, 2
      %s41 = scalar_select %p40, 0, %s39
      %s42 = sadd.s32 1, %s33
      %s43 = scalar_select %p40, %s42, %s33
      %p44 = scmp.ge.s32.totalorder %s43, 1
      %s45 = scalar_select %p44, 0, %s43
      %s46 = ssub.s32 %s33, %s45
      %p47 = scmp.eq.s32.totalorder %s46, 0
      %s49 = sadd.s32 %s48, 1
      %s50 = scalar_select %p47, %s48, %s49
      %p53 = pneg %p47
      %p54 = scmp.eq.s32.totalorder %s26, 1
      %p55 = por %p53, %p54
      %p56 = scmp.ne.s32.totalorder %s48, %s51
      %p57 = scmp.eq.s32.totalorder %s26, 0
      %p58 = por %p56, %p57
      %p59 = scmp.ne.s32.totalorder %s48, %s51
      %p60 = scmp.eq.s32.totalorder %s31, 1
      %p61 = por %p59, %p60
      %p62 = scmp.ne.s32.totalorder %s51, %s52
      %p63 = scmp.eq.s32.totalorder %s31, 0
      %p64 = por %p62, %p63
      %p65 = scmp.ne.s32.totalorder %s51, %s52
      %p66 = scmp.eq.s32.totalorder %s32, 1
      %p67 = por %p65, %p66
      %p69 = scmp.ne.s32.totalorder %s52, %s68
      %p70 = scmp.eq.s32.totalorder %s32, 0
      %p71 = por %p69, %p70
      %s73 = sadd.s32 %s72, 1
      %p76 = scmp.eq.s32.totalorder %s26, 1
      %p77 = scmp.ne.s32.totalorder %s72, %s74
      %p78 = scmp.eq.s32.totalorder %s26, 0
      %p79 = por %p77, %p78
      %p80 = scmp.ne.s32.totalorder %s72, %s74
      %p81 = scmp.eq.s32.totalorder %s31, 1
      %p82 = por %p80, %p81
      %p83 = scmp.ne.s32.totalorder %s74, %s75
      %p84 = scmp.eq.s32.totalorder %s31, 0
      %p85 = por %p83, %p84
      %p86 = scmp.ne.s32.totalorder %s74, %s75
      %p87 = scmp.eq.s32.totalorder %s32, 1
      %p88 = por %p86, %p87
      %p90 = scmp.ne.s32.totalorder %s75, %s89
      %p91 = scmp.eq.s32.totalorder %s32, 0
      %p92 = por %p90, %p91
      %s93 = ssub.s32 %s33, %s45
      %p94 = scmp.eq.s32.totalorder %s93, 0
      %s96 = sadd.s32 %s95, 1
      %s97 = scalar_select %p94, %s95, %s96
      %p100 = pneg %p94
      %p101 = scmp.eq.s32.totalorder %s26, 1
      %p102 = por %p100, %p101
      %p103 = scmp.ne.s32.totalorder %s95, %s98
      %p104 = scmp.eq.s32.totalorder %s26, 0
      %p105 = por %p103, %p104
      %p106 = scmp.ne.s32.totalorder %s95, %s98
      %p107 = scmp.eq.s32.totalorder %s31, 1
      %p108 = por %p106, %p107
      %p109 = scmp.ne.s32.totalorder %s98, %s99
      %p110 = scmp.eq.s32.totalorder %s31, 0
      %p111 = por %p109, %p110
      %p112 = scmp.ne.s32.totalorder %s98, %s99
      %p113 = scmp.eq.s32.totalorder %s32, 1
      %p114 = por %p112, %p113
      %p116 = scmp.ne.s32.totalorder %s99, %s115
      %p117 = scmp.eq.s32.totalorder %s32, 0
      %p118 = por %p116, %p117
      %s119 = ssub.s32 %s34, %s41
      %p120 = scmp.eq.s32.totalorder %s119, 0
      %s122 = sadd.s32 %s121, 1
      %s123 = scalar_select %p120, %s121, %s122
      %p126 = pneg %p120
      %p127 = scmp.eq.s32.totalorder %s26, 1
      %p128 = por %p126, %p127
      %p129 = scmp.ne.s32.totalorder %s121, %s124
      %p130 = scmp.eq.s32.totalorder %s26, 0
      %p131 = por %p129, %p130
      %p132 = scmp.ne.s32.totalorder %s121, %s124
      %p133 = scmp.eq.s32.totalorder %s31, 1
      %p134 = por %p132, %p133
      %p135 = scmp.ne.s32.totalorder %s124, %s125
      %p136 = scmp.eq.s32.totalorder %s31, 0
      %p137 = por %p135, %p136
      %p138 = scmp.ne.s32.totalorder %s124, %s125
      %p139 = scmp.eq.s32.totalorder %s32, 1
      %p140 = por %p138, %p139
      %p142 = scmp.ne.s32.totalorder %s125, %s141
      %p143 = scmp.eq.s32.totalorder %s32, 0
      %p144 = por %p142, %p143
      %s145 = ssub.s32 %s34, %s41
      %p146 = scmp.eq.s32.totalorder %s145, 0
      %s148 = sadd.s32 %s147, 1
      %s149 = scalar_select %p146, %s147, %s148
      %p152 = pneg %p146
      %p153 = scmp.eq.s32.totalorder %s26, 1
      %p154 = por %p152, %p153
      %p155 = scmp.ne.s32.totalorder %s147, %s150
      %p156 = scmp.eq.s32.totalorder %s26, 0
      %p157 = por %p155, %p156
      %p158 = scmp.ne.s32.totalorder %s147, %s150
      %p159 = scmp.eq.s32.totalorder %s31, 1
      %p160 = por %p158, %p159
      %p161 = scmp.ne.s32.totalorder %s150, %s151
      %p162 = scmp.eq.s32.totalorder %s31, 0
      %p163 = por %p161, %p162
      %p164 = scmp.ne.s32.totalorder %s150, %s151
      %p165 = scmp.eq.s32.totalorder %s32, 1
      %p166 = por %p164, %p165
      %p168 = scmp.ne.s32.totalorder %s151, %s167
      %p169 = scmp.eq.s32.totalorder %s32, 0
      %p170 = por %p168, %p169
      %s171 = ssub.s32 %s34, %s41
      %p172 = scmp.eq.s32.totalorder %s171, 0
      %s174 = sadd.s32 %s173, 1
      %s175 = scalar_select %p172, %s173, %s174
      %p178 = pneg %p172
      %p179 = scmp.eq.s32.totalorder %s26, 1
      %p180 = por %p178, %p179
      %p181 = scmp.ne.s32.totalorder %s173, %s176
      %p182 = scmp.eq.s32.totalorder %s26, 0
      %p183 = por %p181, %p182
      %p184 = scmp.ne.s32.totalorder %s173, %s176
      %p185 = scmp.eq.s32.totalorder %s31, 1
      %p186 = por %p184, %p185
      %p187 = scmp.ne.s32.totalorder %s176, %s177
      %p188 = scmp.eq.s32.totalorder %s31, 0
      %p189 = por %p187, %p188
      %p190 = scmp.ne.s32.totalorder %s176, %s177
      %p191 = scmp.eq.s32.totalorder %s32, 1
      %p192 = por %p190, %p191
      %p194 = scmp.ne.s32.totalorder %s177, %s193
      %p195 = scmp.eq.s32.totalorder %s32, 0
      %p196 = por %p194, %p195
      %s197 = ssub.s32 %s34, %s41
      %p198 = scmp.eq.s32.totalorder %s197, 0
      %s200 = sadd.s32 %s199, 1
      %s201 = scalar_select %p198, %s199, %s200
      %p204 = pneg %p198
      %p205 = scmp.eq.s32.totalorder %s26, 1
      %p206 = por %p204, %p205
      %p207 = scmp.ne.s32.totalorder %s199, %s202
      %p208 = scmp.eq.s32.totalorder %s26, 0
      %p209 = por %p207, %p208
      %p210 = scmp.ne.s32.totalorder %s199, %s202
      %p211 = scmp.eq.s32.totalorder %s31, 1
      %p212 = por %p210, %p211
      %p213 = scmp.ne.s32.totalorder %s202, %s203
      %p214 = scmp.eq.s32.totalorder %s31, 0
      %p215 = por %p213, %p214
      %p216 = scmp.ne.s32.totalorder %s202, %s203
      %p217 = scmp.eq.s32.totalorder %s32, 1
      %p218 = por %p216, %p217
      %p220 = scmp.ne.s32.totalorder %s203, %s219
      %p221 = scmp.eq.s32.totalorder %s32, 0
      %p222 = por %p220, %p221
      %s223 = ssub.s32 %s34, %s41
      %p224 = scmp.eq.s32.totalorder %s223, 0
      %s226 = sadd.s32 %s225, 1
      %s227 = scalar_select %p224, %s225, %s226
      %p230 = pneg %p224
      %p231 = scmp.eq.s32.totalorder %s26, 1
      %p232 = por %p230, %p231
      %p233 = scmp.ne.s32.totalorder %s225, %s228
      %p234 = scmp.eq.s32.totalorder %s26, 0
      %p235 = por %p233, %p234
      %p236 = scmp.ne.s32.totalorder %s225, %s228
      %p237 = scmp.eq.s32.totalorder %s31, 1
      %p238 = por %p236, %p237
      %p239 = scmp.ne.s32.totalorder %s228, %s229
      %p240 = scmp.eq.s32.totalorder %s31, 0
      %p241 = por %p239, %p240
      %p242 = scmp.ne.s32.totalorder %s228, %s229
      %p243 = scmp.eq.s32.totalorder %s32, 1
      %p244 = por %p242, %p243
      %p246 = scmp.ne.s32.totalorder %s229, %s245
      %p247 = scmp.eq.s32.totalorder %s32, 0
      %p248 = por %p246, %p247
      %s249 = ssub.s32 %s34, %s41
      %p250 = scmp.eq.s32.totalorder %s249, 0
      %s252 = sadd.s32 %s251, 1
      %s253 = scalar_select %p250, %s251, %s252
      %p256 = pneg %p250
      %p257 = scmp.eq.s32.totalorder %s26, 1
      %p258 = por %p256, %p257
      %p259 = scmp.ne.s32.totalorder %s251, %s254
      %p260 = scmp.eq.s32.totalorder %s26, 0
      %p261 = por %p259, %p260
      %p262 = scmp.ne.s32.totalorder %s251, %s254
      %p263 = scmp.eq.s32.totalorder %s31, 1
      %p264 = por %p262, %p263
      %p265 = scmp.ne.s32.totalorder %s254, %s255
      %p266 = scmp.eq.s32.totalorder %s31, 0
      %p267 = por %p265, %p266
      %p268 = scmp.ne.s32.totalorder %s254, %s255
      %p269 = scmp.eq.s32.totalorder %s32, 1
      %p270 = por %p268, %p269
      %p272 = scmp.ne.s32.totalorder %s255, %s271
      %p273 = scmp.eq.s32.totalorder %s32, 0
      %p274 = por %p272, %p273
      %s275 = ssub.s32 %s34, %s41
      %p276 = scmp.eq.s32.totalorder %s275, 0
      %s278 = sadd.s32 %s277, 1
      %s279 = scalar_select %p276, %s277, %s278
      %p282 = pneg %p276
      %p283 = scmp.eq.s32.totalorder %s26, 1
      %p284 = por %p282, %p283
      %p285 = scmp.ne.s32.totalorder %s277, %s280
      %p286 = scmp.eq.s32.totalorder %s26, 0
      %p287 = por %p285, %p286
      %p288 = scmp.ne.s32.totalorder %s277, %s280
      %p289 = scmp.eq.s32.totalorder %s31, 1
      %p290 = por %p288, %p289
      %p291 = scmp.ne.s32.totalorder %s280, %s281
      %p292 = scmp.eq.s32.totalorder %s31, 0
      %p293 = por %p291, %p292
      %p294 = scmp.ne.s32.totalorder %s280, %s281
      %p295 = scmp.eq.s32.totalorder %s32, 1
      %p296 = por %p294, %p295
      %p298 = scmp.ne.s32.totalorder %s281, %s297
      %p299 = scmp.eq.s32.totalorder %s32, 0
      %p300 = por %p298, %p299
      %s301 = ssub.s32 %s34, %s41
      %p302 = scmp.eq.s32.totalorder %s301, 0
      %s304 = sadd.s32 %s303, 1
      %s305 = scalar_select %p302, %s303, %s304
      %p308 = pneg %p302
      %p309 = scmp.eq.s32.totalorder %s26, 1
      %p310 = por %p308, %p309
      %p311 = scmp.ne.s32.totalorder %s303, %s306
      %p312 = scmp.eq.s32.totalorder %s26, 0
      %p313 = por %p311, %p312
      %p314 = scmp.ne.s32.totalorder %s303, %s306
      %p315 = scmp.eq.s32.totalorder %s31, 1
      %p316 = por %p314, %p315
      %p317 = scmp.ne.s32.totalorder %s306, %s307
      %p318 = scmp.eq.s32.totalorder %s31, 0
      %p319 = por %p317, %p318
      %p320 = scmp.ne.s32.totalorder %s306, %s307
      %p321 = scmp.eq.s32.totalorder %s32, 1
      %p322 = por %p320, %p321
      %p324 = scmp.ne.s32.totalorder %s307, %s323
      %p325 = scmp.eq.s32.totalorder %s32, 0
      %p326 = por %p324, %p325
      %s327 = ssub.s32 %s34, %s41
      %p328 = scmp.eq.s32.totalorder %s327, 0
      %s330 = sadd.s32 %s329, 1
      %s331 = scalar_select %p328, %s329, %s330
      %p334 = pneg %p328
      %p335 = scmp.eq.s32.totalorder %s26, 1
      %p336 = por %p334, %p335
      %p337 = scmp.ne.s32.totalorder %s329, %s332
      %p338 = scmp.eq.s32.totalorder %s26, 0
      %p339 = por %p337, %p338
      %p340 = scmp.ne.s32.totalorder %s329, %s332
      %p341 = scmp.eq.s32.totalorder %s31, 1
      %p342 = por %p340, %p341
      %p343 = scmp.ne.s32.totalorder %s332, %s333
      %p344 = scmp.eq.s32.totalorder %s31, 0
      %p345 = por %p343, %p344
      %p346 = scmp.ne.s32.totalorder %s332, %s333
      %p347 = scmp.eq.s32.totalorder %s32, 1
      %p348 = por %p346, %p347
      %p350 = scmp.ne.s32.totalorder %s333, %s349
      %p351 = scmp.eq.s32.totalorder %s32, 0
      %p352 = por %p350, %p351
      %s353 = ssub.s32 %s34, %s41
      %p354 = scmp.eq.s32.totalorder %s353, 0
      %s356 = sadd.s32 %s355, 1
      %s357 = scalar_select %p354, %s355, %s356
      %p360 = pneg %p354
      %p361 = scmp.eq.s32.totalorder %s26, 1
      %p362 = por %p360, %p361
      %p363 = scmp.ne.s32.totalorder %s355, %s358
      %p364 = scmp.eq.s32.totalorder %s26, 0
      %p365 = por %p363, %p364
      %p366 = scmp.ne.s32.totalorder %s355, %s358
      %p367 = scmp.eq.s32.totalorder %s31, 1
      %p368 = por %p366, %p367
      %p369 = scmp.ne.s32.totalorder %s358, %s359
      %p370 = scmp.eq.s32.totalorder %s31, 0
      %p371 = por %p369, %p370
      %p372 = scmp.ne.s32.totalorder %s358, %s359
      %p373 = scmp.eq.s32.totalorder %s32, 1
      %p374 = por %p372, %p373
      %p376 = scmp.ne.s32.totalorder %s359, %s375
      %p377 = scmp.eq.s32.totalorder %s32, 0
      %p378 = por %p376, %p377
      %s379 = ssub.s32 %s34, %s41
      %p380 = scmp.eq.s32.totalorder %s379, 0
      %s382 = sadd.s32 %s381, 1
      %s383 = scalar_select %p380, %s381, %s382
      %p386 = pneg %p380
      %p387 = scmp.eq.s32.totalorder %s26, 1
      %p388 = por %p386, %p387
      %p389 = scmp.ne.s32.totalorder %s381, %s384
      %p390 = scmp.eq.s32.totalorder %s26, 0
      %p391 = por %p389, %p390
      %p392 = scmp.ne.s32.totalorder %s381, %s384
      %p393 = scmp.eq.s32.totalorder %s31, 1
      %p394 = por %p392, %p393
      %p395 = scmp.ne.s32.totalorder %s384, %s385
      %p396 = scmp.eq.s32.totalorder %s31, 0
      %p397 = por %p395, %p396
      %p398 = scmp.ne.s32.totalorder %s384, %s385
      %p399 = scmp.eq.s32.totalorder %s32, 1
      %p400 = por %p398, %p399
      %p402 = scmp.ne.s32.totalorder %s385, %s401
      %p403 = scmp.eq.s32.totalorder %s32, 0
      %p404 = por %p402, %p403
      %s405 = ssub.s32 %s34, %s41
      %p406 = scmp.eq.s32.totalorder %s405, 0
      %s408 = sadd.s32 %s407, 1
      %s409 = scalar_select %p406, %s407, %s408
      %p412 = pneg %p406
      %p413 = scmp.eq.s32.totalorder %s26, 1
      %p414 = por %p412, %p413
      %p415 = scmp.ne.s32.totalorder %s407, %s410
      %p416 = scmp.eq.s32.totalorder %s26, 0
      %p417 = por %p415, %p416
      %p418 = scmp.ne.s32.totalorder %s407, %s410
      %p419 = scmp.eq.s32.totalorder %s31, 1
      %p420 = por %p418, %p419
      %p421 = scmp.ne.s32.totalorder %s410, %s411
      %p422 = scmp.eq.s32.totalorder %s31, 0
      %p423 = por %p421, %p422
      %p424 = scmp.ne.s32.totalorder %s410, %s411
      %p425 = scmp.eq.s32.totalorder %s32, 1
      %p426 = por %p424, %p425
      %p428 = scmp.ne.s32.totalorder %s411, %s427
      %p429 = scmp.eq.s32.totalorder %s32, 0
      %p430 = por %p428, %p429
      %s431 = ssub.s32 %s34, %s41
      %p432 = scmp.eq.s32.totalorder %s431, 0
      %s434 = sadd.s32 %s433, 1
      %s435 = scalar_select %p432, %s433, %s434
      %p438 = pneg %p432
      %p439 = scmp.eq.s32.totalorder %s26, 1
      %p440 = por %p438, %p439
      %p441 = scmp.ne.s32.totalorder %s433, %s436
      %p442 = scmp.eq.s32.totalorder %s26, 0
      %p443 = por %p441, %p442
      %p444 = scmp.ne.s32.totalorder %s433, %s436
      %p445 = scmp.eq.s32.totalorder %s31, 1
      %p446 = por %p444, %p445
      %p447 = scmp.ne.s32.totalorder %s436, %s437
      %p448 = scmp.eq.s32.totalorder %s31, 0
      %p449 = por %p447, %p448
      %p450 = scmp.ne.s32.totalorder %s436, %s437
      %p451 = scmp.eq.s32.totalorder %s32, 1
      %p452 = por %p450, %p451
      %p454 = scmp.ne.s32.totalorder %s437, %s453
      %p455 = scmp.eq.s32.totalorder %s32, 0
      %p456 = por %p454, %p455
      %s457 = ssub.s32 %s34, %s41
      %p458 = scmp.eq.s32.totalorder %s457, 0
      %s460 = sadd.s32 %s459, 1
      %s461 = scalar_select %p458, %s459, %s460
      %p464 = pneg %p458
      %p465 = scmp.eq.s32.totalorder %s26, 1
      %p466 = por %p464, %p465
      %p467 = scmp.ne.s32.totalorder %s459, %s462
      %p468 = scmp.eq.s32.totalorder %s26, 0
      %p469 = por %p467, %p468
      %p470 = scmp.ne.s32.totalorder %s459, %s462
      %p471 = scmp.eq.s32.totalorder %s31, 1
      %p472 = por %p470, %p471
      %p473 = scmp.ne.s32.totalorder %s462, %s463
      %p474 = scmp.eq.s32.totalorder %s31, 0
      %p475 = por %p473, %p474
      %p476 = scmp.ne.s32.totalorder %s462, %s463
      %p477 = scmp.eq.s32.totalorder %s32, 1
      %p478 = por %p476, %p477
      %p480 = scmp.ne.s32.totalorder %s463, %s479
      %p481 = scmp.eq.s32.totalorder %s32, 0
      %p482 = por %p480, %p481
      %s483 = ssub.s32 %s34, %s41
      %p484 = scmp.eq.s32.totalorder %s483, 0
      %s486 = sadd.s32 %s485, 1
      %s487 = scalar_select %p484, %s485, %s486
      %p490 = pneg %p484
      %p491 = scmp.eq.s32.totalorder %s26, 1
      %p492 = por %p490, %p491
      %p493 = scmp.ne.s32.totalorder %s485, %s488
      %p494 = scmp.eq.s32.totalorder %s26, 0
      %p495 = por %p493, %p494
      %p496 = scmp.ne.s32.totalorder %s485, %s488
      %p497 = scmp.eq.s32.totalorder %s31, 1
      %p498 = por %p496, %p497
      %p499 = scmp.ne.s32.totalorder %s488, %s489
      %p500 = scmp.eq.s32.totalorder %s31, 0
      %p501 = por %p499, %p500
      %p502 = scmp.ne.s32.totalorder %s488, %s489
      %p503 = scmp.eq.s32.totalorder %s32, 1
      %p504 = por %p502, %p503
      %p506 = scmp.ne.s32.totalorder %s489, %s505
      %p507 = scmp.eq.s32.totalorder %s32, 0
      %p508 = por %p506, %p507
      %s509 = ssub.s32 %s34, %s41
      %p510 = scmp.eq.s32.totalorder %s509, 0
      %s512 = sadd.s32 %s511, 1
      %s513 = scalar_select %p510, %s511, %s512
      %p516 = pneg %p510
      %p517 = scmp.eq.s32.totalorder %s26, 1
      %p518 = por %p516, %p517
      %p519 = scmp.ne.s32.totalorder %s511, %s514
      %p520 = scmp.eq.s32.totalorder %s26, 0
      %p521 = por %p519, %p520
      %p522 = scmp.ne.s32.totalorder %s511, %s514
      %p523 = scmp.eq.s32.totalorder %s31, 1
      %p524 = por %p522, %p523
      %p525 = scmp.ne.s32.totalorder %s514, %s515
      %p526 = scmp.eq.s32.totalorder %s31, 0
      %p527 = por %p525, %p526
      %p528 = scmp.ne.s32.totalorder %s514, %s515
      %p529 = scmp.eq.s32.totalorder %s32, 1
      %p530 = por %p528, %p529
      %p532 = scmp.ne.s32.totalorder %s515, %s531
      %p533 = scmp.eq.s32.totalorder %s32, 0
      %p534 = por %p532, %p533
      %s535 = ssub.s32 %s33, %s45
      %p536 = scmp.eq.s32.totalorder %s535, 0
      %s538 = sadd.s32 %s537, 1
      %s539 = scalar_select %p536, %s537, %s538
      %p542 = pneg %p536
      %p543 = scmp.eq.s32.totalorder %s26, 1
      %p544 = por %p542, %p543
      %p545 = scmp.ne.s32.totalorder %s537, %s540
      %p546 = scmp.eq.s32.totalorder %s26, 0
      %p547 = por %p545, %p546
      %p548 = scmp.ne.s32.totalorder %s537, %s540
      %p549 = scmp.eq.s32.totalorder %s31, 1
      %p550 = por %p548, %p549
      %p551 = scmp.ne.s32.totalorder %s540, %s541
      %p552 = scmp.eq.s32.totalorder %s31, 0
      %p553 = por %p551, %p552
      %p554 = scmp.ne.s32.totalorder %s540, %s541
      %p555 = scmp.eq.s32.totalorder %s32, 1
      %p556 = por %p554, %p555
      %p558 = scmp.ne.s32.totalorder %s541, %s557
      %p559 = scmp.eq.s32.totalorder %s32, 0
      %p560 = por %p558, %p559
      %p561 = scmp.le.s32.totalorder 1, %s26
      %p562 = scmp.lt.s32.totalorder %s26, 3
      %p563 = pnand %p561, %p562
      %p564 = pneg %p563
      // Predicated region
      $region9: #{tpu_custom_call.1} parent=5 // pred_check
        _
      $region10: #{tpu_custom_call.1} parent=5 // pred_check_branch
        %566 = sbr.rel (%p563) target = $region12
      $region11: #{tpu_custom_call.1} parent=5 // pred_region
        %s567 = ssub.s32 %s26, 1
        // Predicated region
        $region13: #{tpu_custom_call.1} parent=11 // pred_check
          %p568 = pneg %p64
        $region14: #{tpu_custom_call.1} parent=11 // pred_check_branch
          %570 = sbr.rel (%p568) target = $region16
        $region15: #{tpu_custom_call.1} parent=11 // pred_region
          %s571 = smul.u32 2, %s35
          %p572 = scmp.lt.s32.totalorder %s571, 1
          %s573 = scalar_select %p572, %s571, 1
          %s574 = smul.addr %s573, 8
          %s575 = scalar_lea.vmem %s0, %s574
          %s576 = smul.u32 2, %s35
        $region16: #{tpu_custom_call.1} parent=11 // pred_fallthru
          _
        // Predicated region
        $region17: #{tpu_custom_call.1} parent=11 // pred_check
          %p577 = pneg %p85
        $region18: #{tpu_custom_call.1} parent=11 // pred_check_branch
          %579 = sbr.rel (%p577) target = $region20
        $region19: #{tpu_custom_call.1} parent=11 // pred_region
          _
        $region20: #{tpu_custom_call.1} parent=11 // pred_fallthru
          _
        // Predicated region
        $region21: #{tpu_custom_call.1} parent=11 // pred_check
          %p580 = pneg %p111
        $region22: #{tpu_custom_call.1} parent=11 // pred_check_branch
          %582 = sbr.rel (%p580) target = $region24
        $region23: #{tpu_custom_call.1} parent=11 // pred_region
          %s583 = smul.u32 2, %s35
          %p584 = scmp.lt.s32.totalorder %s583, 1
          %s585 = scalar_select %p584, %s583, 1
          %s586 = smul.addr %s585, 8
          %s587 = scalar_lea.vmem %s2, %s586
          %s588 = smul.u32 2, %s35
        $region24: #{tpu_custom_call.1} parent=11 // pred_fallthru
          _
      $region12: #{tpu_custom_call.1} parent=5 // pred_fallthru
        _
      %p589 = scmp.lt.s32.totalorder %s26, 2
      // Predicated region
      $region25: #{tpu_custom_call.1} parent=5 // pred_check
        %p590 = pneg %p589
      $region26: #{tpu_custom_call.1} parent=5 // pred_check_branch
        %592 = sbr.rel (%p590) target = $region28
      $region27: #{tpu_custom_call.1} parent=5 // pred_region
        // Predicated region
        $region29: #{tpu_custom_call.1} parent=27 // pred_check
          %p593 = pneg %p131
        $region30: #{tpu_custom_call.1} parent=27 // pred_check_branch
          %595 = sbr.rel (%p593) target = $region32
        $region31: #{tpu_custom_call.1} parent=27 // pred_region
          %p596 = scmp.lt.s32.totalorder %s34, 1
          %s597 = scalar_select %p596, %s34, 1
          %s598 = smul.addr %s597, 16
          %s599 = smul.addr %s598, 8
          %s600 = scalar_lea.vmem %s3, %s599
        $region32: #{tpu_custom_call.1} parent=27 // pred_fallthru
          _
        // Predicated region
        $region33: #{tpu_custom_call.1} parent=27 // pred_check
          %p601 = pneg %p157
        $region34: #{tpu_custom_call.1} parent=27 // pred_check_branch
          %603 = sbr.rel (%p601) target = $region36
        $region35: #{tpu_custom_call.1} parent=27 // pred_region
          %p604 = scmp.lt.s32.totalorder %s34, 1
          %s605 = scalar_select %p604, %s34, 1
          %s606 = smul.addr %s605, 4
          %s607 = scalar_lea.vmem %s4, %s606
        $region36: #{tpu_custom_call.1} parent=27 // pred_fallthru
          _
        // Predicated region
        $region37: #{tpu_custom_call.1} parent=27 // pred_check
          %p608 = pneg %p183
        $region38: #{tpu_custom_call.1} parent=27 // pred_check_branch
          %610 = sbr.rel (%p608) target = $region40
        $region39: #{tpu_custom_call.1} parent=27 // pred_region
          %p611 = scmp.lt.s32.totalorder %s34, 1
          %s612 = scalar_select %p611, %s34, 1
          %s613 = smul.addr %s612, 16
          %s614 = smul.addr %s613, 8
          %s615 = scalar_lea.vmem %s5, %s614
        $region40: #{tpu_custom_call.1} parent=27 // pred_fallthru
          _
        // Predicated region
        $region41: #{tpu_custom_call.1} parent=27 // pred_check
          %p616 = pneg %p209
        $region42: #{tpu_custom_call.1} parent=27 // pred_check_branch
          %618 = sbr.rel (%p616) target = $region44
        $region43: #{tpu_custom_call.1} parent=27 // pred_region
          %p619 = scmp.lt.s32.totalorder %s34, 1
          %s620 = scalar_select %p619, %s34, 1
          %s621 = smul.addr %s620, 4
          %s622 = scalar_lea.vmem %s6, %s621
        $region44: #{tpu_custom_call.1} parent=27 // pred_fallthru
          _
        // Predicated region
        $region45: #{tpu_custom_call.1} parent=27 // pred_check
          %p623 = pneg %p235
        $region46: #{tpu_custom_call.1} parent=27 // pred_check_branch
          %625 = sbr.rel (%p623) target = $region48
        $region47: #{tpu_custom_call.1} parent=27 // pred_region
          %p626 = scmp.lt.s32.totalorder %s34, 1
          %s627 = scalar_select %p626, %s34, 1
          %s628 = smul.addr %s627, 16
          %s629 = smul.addr %s628, 8
          %s630 = scalar_lea.vmem %s7, %s629
        $region48: #{tpu_custom_call.1} parent=27 // pred_fallthru
          _
        // Predicated region
        $region49: #{tpu_custom_call.1} parent=27 // pred_check
          %p631 = pneg %p261
        $region50: #{tpu_custom_call.1} parent=27 // pred_check_branch
          %633 = sbr.rel (%p631) target = $region52
        $region51: #{tpu_custom_call.1} parent=27 // pred_region
          %p634 = scmp.lt.s32.totalorder %s34, 1
          %s635 = scalar_select %p634, %s34, 1
          %s636 = smul.addr %s635, 4
          %s637 = scalar_lea.vmem %s8, %s636
        $region52: #{tpu_custom_call.1} parent=27 // pred_fallthru
          _
        // Predicated region
        $region53: #{tpu_custom_call.1} parent=27 // pred_check
          %p638 = pneg %p287
        $region54: #{tpu_custom_call.1} parent=27 // pred_check_branch
          %640 = sbr.rel (%p638) target = $region56
        $region55: #{tpu_custom_call.1} parent=27 // pred_region
          %p641 = scmp.lt.s32.totalorder %s34, 1
          %s642 = scalar_select %p641, %s34, 1
          %s643 = smul.addr %s642, 4
          %s644 = smul.addr %s643, 8
          %s645 = scalar_lea.vmem %s9, %s644
        $region56: #{tpu_custom_call.1} parent=27 // pred_fallthru
          _
        // Predicated region
        $region57: #{tpu_custom_call.1} parent=27 // pred_check
          %p646 = pneg %p313
        $region58: #{tpu_custom_call.1} parent=27 // pred_check_branch
          %648 = sbr.rel (%p646) target = $region60
        $region59: #{tpu_custom_call.1} parent=27 // pred_region
          %p649 = scmp.lt.s32.totalorder %s34, 1
          %s650 = scalar_select %p649, %s34, 1
          %s651 = scalar_lea.vmem %s10, %s650
        $region60: #{tpu_custom_call.1} parent=27 // pred_fallthru
          _
        // Predicated region
        $region61: #{tpu_custom_call.1} parent=27 // pred_check
          %p652 = pneg %p339
        $region62: #{tpu_custom_call.1} parent=27 // pred_check_branch
          %654 = sbr.rel (%p652) target = $region64
        $region63: #{tpu_custom_call.1} parent=27 // pred_region
          %p655 = scmp.lt.s32.totalorder %s34, 1
          %s656 = scalar_select %p655, %s34, 1
          %s657 = smul.addr %s656, 4
          %s658 = smul.addr %s657, 8
          %s659 = scalar_lea.vmem %s11, %s658
        $region64: #{tpu_custom_call.1} parent=27 // pred_fallthru
          _
        // Predicated region
        $region65: #{tpu_custom_call.1} parent=27 // pred_check
          %p660 = pneg %p365
        $region66: #{tpu_custom_call.1} parent=27 // pred_check_branch
          %662 = sbr.rel (%p660) target = $region68
        $region67: #{tpu_custom_call.1} parent=27 // pred_region
          %p663 = scmp.lt.s32.totalorder %s34, 1
          %s664 = scalar_select %p663, %s34, 1
          %s665 = scalar_lea.vmem %s12, %s664
        $region68: #{tpu_custom_call.1} parent=27 // pred_fallthru
          _
        // Predicated region
        $region69: #{tpu_custom_call.1} parent=27 // pred_check
          %p666 = pneg %p391
        $region70: #{tpu_custom_call.1} parent=27 // pred_check_branch
          %668 = sbr.rel (%p666) target = $region72
        $region71: #{tpu_custom_call.1} parent=27 // pred_region
          %p669 = scmp.lt.s32.totalorder %s34, 1
          %s670 = scalar_select %p669, %s34, 1
          %s671 = smul.addr %s670, 8
          %s672 = smul.addr %s671, 8
          %s673 = scalar_lea.vmem %s13, %s672
        $region72: #{tpu_custom_call.1} parent=27 // pred_fallthru
          _
        // Predicated region
        $region73: #{tpu_custom_call.1} parent=27 // pred_check
          %p674 = pneg %p417
        $region74: #{tpu_custom_call.1} parent=27 // pred_check_branch
          %676 = sbr.rel (%p674) target = $region76
        $region75: #{tpu_custom_call.1} parent=27 // pred_region
          %p677 = scmp.lt.s32.totalorder %s34, 1
          %s678 = scalar_select %p677, %s34, 1
          %s679 = scalar_lea.vmem %s14, %s678
        $region76: #{tpu_custom_call.1} parent=27 // pred_fallthru
          _
        // Predicated region
        $region77: #{tpu_custom_call.1} parent=27 // pred_check
          %p680 = pneg %p443
        $region78: #{tpu_custom_call.1} parent=27 // pred_check_branch
          %682 = sbr.rel (%p680) target = $region80
        $region79: #{tpu_custom_call.1} parent=27 // pred_region
          %p683 = scmp.lt.s32.totalorder %s34, 1
          %s684 = scalar_select %p683, %s34, 1
          %s685 = scalar_lea.vmem %s15, %s684
        $region80: #{tpu_custom_call.1} parent=27 // pred_fallthru
          _
        // Predicated region
        $region81: #{tpu_custom_call.1} parent=27 // pred_check
          %p686 = pneg %p469
        $region82: #{tpu_custom_call.1} parent=27 // pred_check_branch
          %688 = sbr.rel (%p686) target = $region84
        $region83: #{tpu_custom_call.1} parent=27 // pred_region
          %p689 = scmp.lt.s32.totalorder %s34, 1
          %s690 = scalar_select %p689, %s34, 1
          %s691 = scalar_lea.vmem %s16, %s690
        $region84: #{tpu_custom_call.1} parent=27 // pred_fallthru
          _
        // Predicated region
        $region85: #{tpu_custom_call.1} parent=27 // pred_check
          %p692 = pneg %p495
        $region86: #{tpu_custom_call.1} parent=27 // pred_check_branch
          %694 = sbr.rel (%p692) target = $region88
        $region87: #{tpu_custom_call.1} parent=27 // pred_region
          %p695 = scmp.lt.s32.totalorder %s34, 1
          %s696 = scalar_select %p695, %s34, 1
          %s697 = scalar_lea.vmem %s17, %s696
        $region88: #{tpu_custom_call.1} parent=27 // pred_fallthru
          _
        // Predicated region
        $region89: #{tpu_custom_call.1} parent=27 // pred_check
          %p698 = pneg %p521
        $region90: #{tpu_custom_call.1} parent=27 // pred_check_branch
          %700 = sbr.rel (%p698) target = $region92
        $region91: #{tpu_custom_call.1} parent=27 // pred_region
          %p701 = scmp.lt.s32.totalorder %s34, 1
          %s702 = scalar_select %p701, %s34, 1
          %s703 = scalar_lea.vmem %s18, %s702
        $region92: #{tpu_custom_call.1} parent=27 // pred_fallthru
          _
      $region28: #{tpu_custom_call.1} parent=5 // pred_fallthru
        _
      %p704 = scmp.le.s32.totalorder 1, %s26
      %p705 = scmp.lt.s32.totalorder %s26, 3
      %p706 = pnand %p704, %p705
      %p707 = pneg %p706
      // Predicated region
      $region93: #{tpu_custom_call.1} parent=5 // pred_check
        _
      $region94: #{tpu_custom_call.1} parent=5 // pred_check_branch
        %709 = sbr.rel (%p706) target = $region96
      $region95: #{tpu_custom_call.1} parent=5 // pred_region
        %s710 = ssub.s32 %s26, 1
        %s711 = smul.u32 2, %s35
        %p712 = scmp.lt.s32.totalorder %s711, 1
        %s713 = scalar_select %p712, %s711, 1
        %s714 = smul.addr %s713, 8
        %s715 = scalar_lea.vmem %s0, %s714
        %p716 = pneg %p64
        %p717 = pneg %p61
        %p718 = pneg %p85
        %p719 = pneg %p82
        %s720 = smul.u32 2, %s35
        %p721 = scmp.lt.s32.totalorder %s720, 1
        %s722 = scalar_select %p721, %s720, 1
        %s723 = smul.addr %s722, 8
        %s724 = scalar_lea.vmem %s2, %s723
        %p725 = pneg %p111
        %p726 = pneg %p108
        %p727 = scmp.lt.s32.totalorder %s36, 1
        %s728 = scalar_select %p727, %s36, 1
        %s729 = smul.addr %s728, 16
        %s730 = smul.addr %s729, 8
        %s731 = scalar_lea.vmem %s3, %s730
        %p732 = pneg %p137
        %p733 = pneg %p134
        %p734 = scmp.lt.s32.totalorder %s36, 1
        %s735 = scalar_select %p734, %s36, 1
        %s736 = smul.addr %s735, 4
        %s737 = scalar_lea.vmem %s4, %s736
        %p738 = pneg %p163
        %p739 = pneg %p160
        %p740 = scmp.lt.s32.totalorder %s36, 1
        %s741 = scalar_select %p740, %s36, 1
        %s742 = smul.addr %s741, 16
        %s743 = smul.addr %s742, 8
        %s744 = scalar_lea.vmem %s5, %s743
        %p745 = pneg %p189
        %p746 = pneg %p186
        %p747 = scmp.lt.s32.totalorder %s36, 1
        %s748 = scalar_select %p747, %s36, 1
        %s749 = smul.addr %s748, 4
        %s750 = scalar_lea.vmem %s6, %s749
        %p751 = pneg %p215
        %p752 = pneg %p212
        %p753 = scmp.lt.s32.totalorder %s36, 1
        %s754 = scalar_select %p753, %s36, 1
        %s755 = smul.addr %s754, 16
        %s756 = smul.addr %s755, 8
        %s757 = scalar_lea.vmem %s7, %s756
        %p758 = pneg %p241
        %p759 = pneg %p238
        %p760 = scmp.lt.s32.totalorder %s36, 1
        %s761 = scalar_select %p760, %s36, 1
        %s762 = smul.addr %s761, 4
        %s763 = scalar_lea.vmem %s8, %s762
        %p764 = pneg %p267
        %p765 = pneg %p264
        %p766 = scmp.lt.s32.totalorder %s36, 1
        %s767 = scalar_select %p766, %s36, 1
        %s768 = smul.addr %s767, 4
        %s769 = smul.addr %s768, 8
        %s770 = scalar_lea.vmem %s9, %s769
        %p771 = pneg %p293
        %p772 = pneg %p290
        %p773 = scmp.lt.s32.totalorder %s36, 1
        %s774 = scalar_select %p773, %s36, 1
        %s775 = scalar_lea.vmem %s10, %s774
        %p776 = pneg %p319
        %p777 = pneg %p316
        %p778 = scmp.lt.s32.totalorder %s36, 1
        %s779 = scalar_select %p778, %s36, 1
        %s780 = smul.addr %s779, 4
        %s781 = smul.addr %s780, 8
        %s782 = scalar_lea.vmem %s11, %s781
        %p783 = pneg %p345
        %p784 = pneg %p342
        %p785 = scmp.lt.s32.totalorder %s36, 1
        %s786 = scalar_select %p785, %s36, 1
        %s787 = scalar_lea.vmem %s12, %s786
        %p788 = pneg %p371
        %p789 = pneg %p368
        %p790 = scmp.lt.s32.totalorder %s36, 1
        %s791 = scalar_select %p790, %s36, 1
        %s792 = smul.addr %s791, 8
        %s793 = smul.addr %s792, 8
        %s794 = scalar_lea.vmem %s13, %s793
        %p795 = pneg %p397
        %p796 = pneg %p394
        %p797 = scmp.lt.s32.totalorder %s36, 1
        %s798 = scalar_select %p797, %s36, 1
        %s799 = scalar_lea.vmem %s14, %s798
        %p800 = pneg %p423
        %p801 = pneg %p420
        %p802 = scmp.lt.s32.totalorder %s36, 1
        %s803 = scalar_select %p802, %s36, 1
        %s804 = scalar_lea.vmem %s15, %s803
        %p805 = pneg %p449
        %p806 = pneg %p446
        %p807 = scmp.lt.s32.totalorder %s36, 1
        %s808 = scalar_select %p807, %s36, 1
        %s809 = scalar_lea.vmem %s16, %s808
        %p810 = pneg %p475
        %p811 = pneg %p472
        %p812 = scmp.lt.s32.totalorder %s36, 1
        %s813 = scalar_select %p812, %s36, 1
        %s814 = scalar_lea.vmem %s17, %s813
        %p815 = pneg %p501
        %p816 = pneg %p498
        %p817 = scmp.lt.s32.totalorder %s36, 1
        %s818 = scalar_select %p817, %s36, 1
        %s819 = scalar_lea.vmem %s18, %s818
        %p820 = pneg %p527
        %p821 = pneg %p524
        %p822 = pneg %p553
        %p823 = pneg %p550
        %s824 = smul.u32 2, %s35
        %p825 = scmp.lt.s32.totalorder %s824, 1
        %s826 = scalar_select %p825, %s824, 1
        %s827 = smul.addr %s826, 8
        %s828 = scalar_lea.vmem %s0, %s827
        %s829 = smul.u32 2, %s35
        %s830 = smul.u32 2, %s35
        %p831 = scmp.lt.s32.totalorder %s830, 1
        %s832 = scalar_select %p831, %s830, 1
        %s833 = smul.addr %s832, 8
        %s834 = scalar_lea.vmem %s2, %s833
        %s835 = smul.u32 2, %s35
        %p836 = scmp.lt.s32.totalorder %s36, 1
        %s837 = scalar_select %p836, %s36, 1
        %s838 = smul.addr %s837, 16
        %s839 = smul.addr %s838, 8
        %s840 = scalar_lea.vmem %s3, %s839
        %p841 = scmp.lt.s32.totalorder %s36, 1
        %s842 = scalar_select %p841, %s36, 1
        %s843 = smul.addr %s842, 4
        %s844 = scalar_lea.vmem %s4, %s843
        %p845 = scmp.lt.s32.totalorder %s36, 1
        %s846 = scalar_select %p845, %s36, 1
        %s847 = smul.addr %s846, 16
        %s848 = smul.addr %s847, 8
        %s849 = scalar_lea.vmem %s5, %s848
        %p850 = scmp.lt.s32.totalorder %s36, 1
        %s851 = scalar_select %p850, %s36, 1
        %s852 = smul.addr %s851, 4
        %s853 = scalar_lea.vmem %s6, %s852
        %p854 = scmp.lt.s32.totalorder %s36, 1
        %s855 = scalar_select %p854, %s36, 1
        %s856 = smul.addr %s855, 16
        %s857 = smul.addr %s856, 8
        %s858 = scalar_lea.vmem %s7, %s857
        %p859 = scmp.lt.s32.totalorder %s36, 1
        %s860 = scalar_select %p859, %s36, 1
        %s861 = smul.addr %s860, 4
        %s862 = scalar_lea.vmem %s8, %s861
        %p863 = scmp.lt.s32.totalorder %s36, 1
        %s864 = scalar_select %p863, %s36, 1
        %s865 = smul.addr %s864, 4
        %s866 = smul.addr %s865, 8
        %s867 = scalar_lea.vmem %s9, %s866
        %p868 = scmp.lt.s32.totalorder %s36, 1
        %s869 = scalar_select %p868, %s36, 1
        %s870 = scalar_lea.vmem %s10, %s869
        %p871 = scmp.lt.s32.totalorder %s36, 1
        %s872 = scalar_select %p871, %s36, 1
        %s873 = smul.addr %s872, 4
        %s874 = smul.addr %s873, 8
        %s875 = scalar_lea.vmem %s11, %s874
        %p876 = scmp.lt.s32.totalorder %s36, 1
        %s877 = scalar_select %p876, %s36, 1
        %s878 = scalar_lea.vmem %s12, %s877
        %p879 = scmp.lt.s32.totalorder %s36, 1
        %s880 = scalar_select %p879, %s36, 1
        %s881 = smul.addr %s880, 8
        %s882 = smul.addr %s881, 8
        %s883 = scalar_lea.vmem %s13, %s882
        %p884 = scmp.lt.s32.totalorder %s36, 1
        %s885 = scalar_select %p884, %s36, 1
        %s886 = scalar_lea.vmem %s14, %s885
        %p887 = scmp.lt.s32.totalorder %s36, 1
        %s888 = scalar_select %p887, %s36, 1
        %s889 = scalar_lea.vmem %s15, %s888
        %p890 = scmp.lt.s32.totalorder %s36, 1
        %s891 = scalar_select %p890, %s36, 1
        %s892 = scalar_lea.vmem %s16, %s891
        %p893 = scmp.lt.s32.totalorder %s36, 1
        %s894 = scalar_select %p893, %s36, 1
        %s895 = scalar_lea.vmem %s17, %s894
        %p896 = scmp.lt.s32.totalorder %s36, 1
        %s897 = scalar_select %p896, %s36, 1
        %s898 = scalar_lea.vmem %s18, %s897
        %s899 = smul.u32 2, %s35
        %v900 = vld [vmem:[%s1] sm:$0xff]
        %v901 = vld [vmem:[%s840] sm:$0xff]
        %v902 = vld [vmem:[%s840 + $0x8] sm:$0xff]
        %v903 = vld [vmem:[%s840 + $0x10] sm:$0xff]
        %v904 = vld [vmem:[%s840 + $0x18] sm:$0xff]
        %v905 = vld [vmem:[%s840 + $0x20] sm:$0xff]
        %v906 = vld [vmem:[%s840 + $0x28] sm:$0xff]
        %v907 = vld [vmem:[%s840 + $0x30] sm:$0xff]
        %v908 = vld [vmem:[%s840 + $0x38] sm:$0xff]
        %v909 = vld [vmem:[%s840 + $0x40] sm:$0xff]
        %v910 = vld [vmem:[%s840 + $0x48] sm:$0xff]
        %v911 = vld [vmem:[%s840 + $0x50] sm:$0xff]
        %v912 = vld [vmem:[%s840 + $0x58] sm:$0xff]
        %v913 = vld [vmem:[%s840 + $0x60] sm:$0xff]
        %v914 = vld [vmem:[%s840 + $0x68] sm:$0xff]
        %v915 = vld [vmem:[%s840 + $0x70] sm:$0xff]
        %v916 = vld [vmem:[%s840 + $0x78] sm:$0xff]
        %v917 = vld [vmem:[%s844] sm:$0x1]
        %v918 = vld [vmem:[%s844 + $0x1] sm:$0x1]
        %v919 = vld [vmem:[%s844 + $0x2] sm:$0x1]
        %v920 = vld [vmem:[%s844 + $0x3] sm:$0x1]
        %v921 = vld [vmem:[%s849] sm:$0xff]
        %v922 = vld [vmem:[%s849 + $0x8] sm:$0xff]
        %v923 = vld [vmem:[%s849 + $0x10] sm:$0xff]
        %v924 = vld [vmem:[%s849 + $0x18] sm:$0xff]
        %v925 = vld [vmem:[%s849 + $0x20] sm:$0xff]
        %v926 = vld [vmem:[%s849 + $0x28] sm:$0xff]
        %v927 = vld [vmem:[%s849 + $0x30] sm:$0xff]
        %v928 = vld [vmem:[%s849 + $0x38] sm:$0xff]
        %v929 = vld [vmem:[%s849 + $0x40] sm:$0xff]
        %v930 = vld [vmem:[%s849 + $0x48] sm:$0xff]
        %v931 = vld [vmem:[%s849 + $0x50] sm:$0xff]
        %v932 = vld [vmem:[%s849 + $0x58] sm:$0xff]
        %v933 = vld [vmem:[%s849 + $0x60] sm:$0xff]
        %v934 = vld [vmem:[%s849 + $0x68] sm:$0xff]
        %v935 = vld [vmem:[%s849 + $0x70] sm:$0xff]
        %v936 = vld [vmem:[%s849 + $0x78] sm:$0xff]
        %v937 = vld [vmem:[%s853] sm:$0x1]
        %v938 = vld [vmem:[%s853 + $0x1] sm:$0x1]
        %v939 = vld [vmem:[%s853 + $0x2] sm:$0x1]
        %v940 = vld [vmem:[%s853 + $0x3] sm:$0x1]
        %v941 = vld [vmem:[%s858] sm:$0xff]
        %v942 = vld [vmem:[%s858 + $0x8] sm:$0xff]
        %v943 = vld [vmem:[%s858 + $0x10] sm:$0xff]
        %v944 = vld [vmem:[%s858 + $0x18] sm:$0xff]
        %v945 = vld [vmem:[%s858 + $0x20] sm:$0xff]
        %v946 = vld [vmem:[%s858 + $0x28] sm:$0xff]
        %v947 = vld [vmem:[%s858 + $0x30] sm:$0xff]
        %v948 = vld [vmem:[%s858 + $0x38] sm:$0xff]
        %v949 = vld [vmem:[%s858 + $0x40] sm:$0xff]
        %v950 = vld [vmem:[%s858 + $0x48] sm:$0xff]
        %v951 = vld [vmem:[%s858 + $0x50] sm:$0xff]
        %v952 = vld [vmem:[%s858 + $0x58] sm:$0xff]
        %v953 = vld [vmem:[%s858 + $0x60] sm:$0xff]
        %v954 = vld [vmem:[%s858 + $0x68] sm:$0xff]
        %v955 = vld [vmem:[%s858 + $0x70] sm:$0xff]
        %v956 = vld [vmem:[%s858 + $0x78] sm:$0xff]
        %v957 = vld [vmem:[%s862] sm:$0x1]
        %v958 = vld [vmem:[%s862 + $0x1] sm:$0x1]
        %v959 = vld [vmem:[%s862 + $0x2] sm:$0x1]
        %v960 = vld [vmem:[%s862 + $0x3] sm:$0x1]
        %v961 = vld [vmem:[%s867] sm:$0xff]
        %v962 = vld [vmem:[%s867 + $0x8] sm:$0xff]
        %v963 = vld [vmem:[%s867 + $0x10] sm:$0xff]
        %v964 = vld [vmem:[%s867 + $0x18] sm:$0xff]
        %v965 = vld [vmem:[%s870] sm:$0x1]
        %v966 = vld [vmem:[%s875] sm:$0xff]
        %v967 = vld [vmem:[%s875 + $0x8] sm:$0xff]
        %v968 = vld [vmem:[%s875 + $0x10] sm:$0xff]
        %v969 = vld [vmem:[%s875 + $0x18] sm:$0xff]
        %v970 = vld [vmem:[%s878] sm:$0x1]
        %v971 = vld [vmem:[%s883] sm:$0xff]
        %v972 = vld [vmem:[%s883 + $0x8] sm:$0xff]
        %v973 = vld [vmem:[%s883 + $0x10] sm:$0xff]
        %v974 = vld [vmem:[%s883 + $0x18] sm:$0xff]
        %v975 = vld [vmem:[%s883 + $0x20] sm:$0xff]
        %v976 = vld [vmem:[%s883 + $0x28] sm:$0xff]
        %v977 = vld [vmem:[%s883 + $0x30] sm:$0xff]
        %v978 = vld [vmem:[%s883 + $0x38] sm:$0xff]
        %v979 = vld [vmem:[%s886] sm:$0x1]
        %v980 = vld [vmem:[%s889] sm:$0x1]
        %v981 = vld [vmem:[%s892] sm:$0x1]
        %v982 = vld [vmem:[%s895] sm:$0x1]
        %v983 = vld [vmem:[%s898] sm:$0x1]
        %v984 = vld [vmem:[%s828] sm:$0xff]
        %v985 = vadd.f32 %v984, %v900
        %v986 = vld [vmem:[%s834] sm:$0xff]
        %v991 = vlaneseq
        %v992 = vshrl.u32 %v991, 7
        %v993 = vsub.s32 0, %v992
        %v994 = vrot.slane %v917, %v993
        %v995 = vlaneseq
        %v996 = vshrl.u32 %v995, 7
        %v997 = vsub.s32 0, %v996
        %v998 = vrot.slane %v918, %v997
        %v999 = vlaneseq
        %v1000 = vshrl.u32 %v999, 7
        %v1001 = vsub.s32 0, %v1000
        %v1002 = vrot.slane %v919, %v1001
        %v1003 = vlaneseq
        %v1004 = vshrl.u32 %v1003, 7
        %v1005 = vsub.s32 0, %v1004
        %v1006 = vrot.slane %v920, %v1005
        %vm1011 = vcmask 261120
        %v1013 = vsel %vm1011, %v985, 0
        %1015 = vmatprep.subr.mxu0 0.0
        %1016 = vmatpush1.msra.mxu0 %v901
        %1017 = vmatprep.subr.mxu0 0.0
        %1018 = vmatpush1.msra.mxu0 %v902
        %1019 = vmatprep.subr.mxu0 0.0
        %1020 = vmatpush1.msra.mxu0 %v903
        %1021 = vmatprep.subr.mxu0 0.0
        %1022 = vmatpush1.msra.mxu0 %v904
        %1023 = vmatprep.subr.mxu0 0.0
        %1024 = vmatpush1.msra.mxu0 0.0
        %1025 = vmatprep.subr.mxu0 0.0
        %1026 = vmatpush1.msra.mxu0 0.0
        %1027 = vmatprep.subr.mxu0 0.0
        %1028 = vmatpush1.msra.mxu0 0.0
        %1029 = vmatprep.subr.mxu0 0.0
        %1030 = vmatpush1.msra.mxu0 0.0
        %1031 = vmatprep.subr.mxu0 0.0
        %1032 = vmatpush1.msra.mxu0 0.0
        %1033 = vmatprep.subr.mxu0 0.0
        %1034 = vmatpush1.msra.mxu0 0.0
        %1035 = vmatprep.subr.mxu0 0.0
        %1036 = vmatpush1.msra.mxu0 0.0
        %1037 = vmatprep.subr.mxu0 0.0
        %1038 = vmatpush1.msra.mxu0 0.0
        %1039 = vmatprep.subr.mxu0 0.0
        %1040 = vmatpush1.msra.mxu0 0.0
        %1041 = vmatprep.subr.mxu0 0.0
        %1042 = vmatpush1.msra.mxu0 0.0
        %1043 = vmatprep.subr.mxu0 0.0
        %1044 = vmatpush1.msra.mxu0 0.0
        %1045 = vmatprep.subr.mxu0 0.0
        %1046 = vmatpush1.msra.mxu0 0.0
        %1047 = vmatprep.subr.mxu0 0.0
        %1048 = vmatpush1.msra.mxu0 0.0
        %1049 = vmatprep.subr.mxu0 0.0
        %1050 = vmatpush1.msra.mxu0 0.0
        %1051 = vmatprep.subr.mxu0 0.0
        %1052 = vmatpush1.msra.mxu0 0.0
        %1053 = vmatprep.subr.mxu0 0.0
        %1054 = vmatpush1.msra.mxu0 0.0
        %1055 = vmatprep.subr.mxu0 0.0
        %1056 = vmatpush1.msra.mxu0 0.0
        %1057 = vmatprep.subr.mxu0 0.0
        %1058 = vmatpush1.msra.mxu0 0.0
        %1059 = vmatprep.subr.mxu0 0.0
        %1060 = vmatpush1.msra.mxu0 0.0
        %1061 = vmatprep.subr.mxu0 0.0
        %1062 = vmatpush1.msra.mxu0 0.0
        %1063 = vmatprep.subr.mxu0 0.0
        %1064 = vmatpush1.msra.mxu0 0.0
        %1065 = vmatprep.subr.mxu0 0.0
        %1066 = vmatpush1.msra.mxu0 0.0
        %1067 = vmatprep.subr.mxu0 0.0
        %1068 = vmatpush1.msra.mxu0 0.0
        %1069 = vmatprep.subr.mxu0 0.0
        %1070 = vmatpush1.msra.mxu0 0.0
        %1071 = vmatprep.subr.mxu0 0.0
        %1072 = vmatpush1.msra.mxu0 0.0
        %1073 = vmatprep.subr.mxu0 0.0
        %1074 = vmatpush1.msra.mxu0 0.0
        %1075 = vmatprep.subr.mxu0 0.0
        %1076 = vmatpush1.msra.mxu0 0.0
        %1077 = vmatprep.subr.mxu0 0.0
        %1078 = vmatpush1.msra.mxu0 0.0
        %1079 = vmatprep.mubr.f32.mxu0 0.0
        %1080 = vmatmul.mubr.f32.gmra.mrb[0].mxu0 %v1013
        %v1081 = vpop.f32.mrb[0].mxu0
        %v1082 = vadd.f32 %v994, %v1081
        %v1083 = vpop.f32.mrb[0].mxu0
        %1084 = vdwg.mxu0
        %1085 = vmatprep.subr.mxu0 0.0
        %1086 = vmatpush1.msra.mxu0 %v905
        %1087 = vmatprep.subr.mxu0 0.0
        %1088 = vmatpush1.msra.mxu0 %v906
        %1089 = vmatprep.subr.mxu0 0.0
        %1090 = vmatpush1.msra.mxu0 %v907
        %1091 = vmatprep.subr.mxu0 0.0
        %1092 = vmatpush1.msra.mxu0 %v908
        %1093 = vmatprep.subr.mxu0 0.0
        %1094 = vmatpush1.msra.mxu0 0.0
        %1095 = vmatprep.subr.mxu0 0.0
        %1096 = vmatpush1.msra.mxu0 0.0
        %1097 = vmatprep.subr.mxu0 0.0
        %1098 = vmatpush1.msra.mxu0 0.0
        %1099 = vmatprep.subr.mxu0 0.0
        %1100 = vmatpush1.msra.mxu0 0.0
        %1101 = vmatprep.subr.mxu0 0.0
        %1102 = vmatpush1.msra.mxu0 0.0
        %1103 = vmatprep.subr.mxu0 0.0
        %1104 = vmatpush1.msra.mxu0 0.0
        %1105 = vmatprep.subr.mxu0 0.0
        %1106 = vmatpush1.msra.mxu0 0.0
        %1107 = vmatprep.subr.mxu0 0.0
        %1108 = vmatpush1.msra.mxu0 0.0
        %1109 = vmatprep.subr.mxu0 0.0
        %1110 = vmatpush1.msra.mxu0 0.0
        %1111 = vmatprep.subr.mxu0 0.0
        %1112 = vmatpush1.msra.mxu0 0.0
        %1113 = vmatprep.subr.mxu0 0.0
        %1114 = vmatpush1.msra.mxu0 0.0
        %1115 = vmatprep.subr.mxu0 0.0
        %1116 = vmatpush1.msra.mxu0 0.0
        %1117 = vmatprep.subr.mxu0 0.0
        %1118 = vmatpush1.msra.mxu0 0.0
        %1119 = vmatprep.subr.mxu0 0.0
        %1120 = vmatpush1.msra.mxu0 0.0
        %1121 = vmatprep.subr.mxu0 0.0
        %1122 = vmatpush1.msra.mxu0 0.0
        %1123 = vmatprep.subr.mxu0 0.0
        %1124 = vmatpush1.msra.mxu0 0.0
        %1125 = vmatprep.subr.mxu0 0.0
        %1126 = vmatpush1.msra.mxu0 0.0
        %1127 = vmatprep.subr.mxu0 0.0
        %1128 = vmatpush1.msra.mxu0 0.0
        %1129 = vmatprep.subr.mxu0 0.0
        %1130 = vmatpush1.msra.mxu0 0.0
        %1131 = vmatprep.subr.mxu0 0.0
        %1132 = vmatpush1.msra.mxu0 0.0
        %1133 = vmatprep.subr.mxu0 0.0
        %1134 = vmatpush1.msra.mxu0 0.0
        %1135 = vmatprep.subr.mxu0 0.0
        %1136 = vmatpush1.msra.mxu0 0.0
        %1137 = vmatprep.subr.mxu0 0.0
        %1138 = vmatpush1.msra.mxu0 0.0
        %1139 = vmatprep.subr.mxu0 0.0
        %1140 = vmatpush1.msra.mxu0 0.0
        %1141 = vmatprep.subr.mxu0 0.0
        %1142 = vmatpush1.msra.mxu0 0.0
        %1143 = vmatprep.subr.mxu0 0.0
        %1144 = vmatpush1.msra.mxu0 0.0
        %1145 = vmatprep.subr.mxu0 0.0
        %1146 = vmatpush1.msra.mxu0 0.0
        %1147 = vmatprep.subr.mxu0 0.0
        %1148 = vmatpush1.msra.mxu0 0.0
        %1149 = vmatprep.mubr.f32.mxu0 0.0
        %1150 = vmatmul.mubr.f32.gmra.mrb[0].mxu0 %v1013
        %v1151 = vpop.f32.mrb[0].mxu0
        %v1152 = vadd.f32 %v998, %v1151
        %v1153 = vpop.f32.mrb[0].mxu0
        %1154 = vdwg.mxu0
        %1155 = vmatprep.subr.mxu0 0.0
        %1156 = vmatpush1.msra.mxu0 %v909
        %1157 = vmatprep.subr.mxu0 0.0
        %1158 = vmatpush1.msra.mxu0 %v910
        %1159 = vmatprep.subr.mxu0 0.0
        %1160 = vmatpush1.msra.mxu0 %v911
        %1161 = vmatprep.subr.mxu0 0.0
        %1162 = vmatpush1.msra.mxu0 %v912
        %1163 = vmatprep.subr.mxu0 0.0
        %1164 = vmatpush1.msra.mxu0 0.0
        %1165 = vmatprep.subr.mxu0 0.0
        %1166 = vmatpush1.msra.mxu0 0.0
        %1167 = vmatprep.subr.mxu0 0.0
        %1168 = vmatpush1.msra.mxu0 0.0
        %1169 = vmatprep.subr.mxu0 0.0
        %1170 = vmatpush1.msra.mxu0 0.0
        %1171 = vmatprep.subr.mxu0 0.0
        %1172 = vmatpush1.msra.mxu0 0.0
        %1173 = vmatprep.subr.mxu0 0.0
        %1174 = vmatpush1.msra.mxu0 0.0
        %1175 = vmatprep.subr.mxu0 0.0
        %1176 = vmatpush1.msra.mxu0 0.0
        %1177 = vmatprep.subr.mxu0 0.0
        %1178 = vmatpush1.msra.mxu0 0.0
        %1179 = vmatprep.subr.mxu0 0.0
        %1180 = vmatpush1.msra.mxu0 0.0
        %1181 = vmatprep.subr.mxu0 0.0
        %1182 = vmatpush1.msra.mxu0 0.0
        %1183 = vmatprep.subr.mxu0 0.0
        %1184 = vmatpush1.msra.mxu0 0.0
        %1185 = vmatprep.subr.mxu0 0.0
        %1186 = vmatpush1.msra.mxu0 0.0
        %1187 = vmatprep.subr.mxu0 0.0
        %1188 = vmatpush1.msra.mxu0 0.0
        %1189 = vmatprep.subr.mxu0 0.0
        %1190 = vmatpush1.msra.mxu0 0.0
        %1191 = vmatprep.subr.mxu0 0.0
        %1192 = vmatpush1.msra.mxu0 0.0
        %1193 = vmatprep.subr.mxu0 0.0
        %1194 = vmatpush1.msra.mxu0 0.0
        %1195 = vmatprep.subr.mxu0 0.0
        %1196 = vmatpush1.msra.mxu0 0.0
        %1197 = vmatprep.subr.mxu0 0.0
        %1198 = vmatpush1.msra.mxu0 0.0
        %1199 = vmatprep.subr.mxu0 0.0
        %1200 = vmatpush1.msra.mxu0 0.0
        %1201 = vmatprep.subr.mxu0 0.0
        %1202 = vmatpush1.msra.mxu0 0.0
        %1203 = vmatprep.subr.mxu0 0.0
        %1204 = vmatpush1.msra.mxu0 0.0
        %1205 = vmatprep.subr.mxu0 0.0
        %1206 = vmatpush1.msra.mxu0 0.0
        %1207 = vmatprep.subr.mxu0 0.0
        %1208 = vmatpush1.msra.mxu0 0.0
        %1209 = vmatprep.subr.mxu0 0.0
        %1210 = vmatpush1.msra.mxu0 0.0
        %1211 = vmatprep.subr.mxu0 0.0
        %1212 = vmatpush1.msra.mxu0 0.0
        %1213 = vmatprep.subr.mxu0 0.0
        %1214 = vmatpush1.msra.mxu0 0.0
        %1215 = vmatprep.subr.mxu0 0.0
        %1216 = vmatpush1.msra.mxu0 0.0
        %1217 = vmatprep.subr.mxu0 0.0
        %1218 = vmatpush1.msra.mxu0 0.0
        %1219 = vmatprep.mubr.f32.mxu0 0.0
        %1220 = vmatmul.mubr.f32.gmra.mrb[0].mxu0 %v1013
        %v1221 = vpop.f32.mrb[0].mxu0
        %v1222 = vadd.f32 %v1002, %v1221
        %v1223 = vpop.f32.mrb[0].mxu0
        %1224 = vdwg.mxu0
        %1225 = vmatprep.subr.mxu0 0.0
        %1226 = vmatpush1.msra.mxu0 %v913
        %1227 = vmatprep.subr.mxu0 0.0
        %1228 = vmatpush1.msra.mxu0 %v914
        %1229 = vmatprep.subr.mxu0 0.0
        %1230 = vmatpush1.msra.mxu0 %v915
        %1231 = vmatprep.subr.mxu0 0.0
        %1232 = vmatpush1.msra.mxu0 %v916
        %1233 = vmatprep.subr.mxu0 0.0
        %1234 = vmatpush1.msra.mxu0 0.0
        %1235 = vmatprep.subr.mxu0 0.0
        %1236 = vmatpush1.msra.mxu0 0.0
        %1237 = vmatprep.subr.mxu0 0.0
        %1238 = vmatpush1.msra.mxu0 0.0
        %1239 = vmatprep.subr.mxu0 0.0
        %1240 = vmatpush1.msra.mxu0 0.0
        %1241 = vmatprep.subr.mxu0 0.0
        %1242 = vmatpush1.msra.mxu0 0.0
        %1243 = vmatprep.subr.mxu0 0.0
        %1244 = vmatpush1.msra.mxu0 0.0
        %1245 = vmatprep.subr.mxu0 0.0
        %1246 = vmatpush1.msra.mxu0 0.0
        %1247 = vmatprep.subr.mxu0 0.0
        %1248 = vmatpush1.msra.mxu0 0.0
        %1249 = vmatprep.subr.mxu0 0.0
        %1250 = vmatpush1.msra.mxu0 0.0
        %1251 = vmatprep.subr.mxu0 0.0
        %1252 = vmatpush1.msra.mxu0 0.0
        %1253 = vmatprep.subr.mxu0 0.0
        %1254 = vmatpush1.msra.mxu0 0.0
        %1255 = vmatprep.subr.mxu0 0.0
        %1256 = vmatpush1.msra.mxu0 0.0
        %1257 = vmatprep.subr.mxu0 0.0
        %1258 = vmatpush1.msra.mxu0 0.0
        %1259 = vmatprep.subr.mxu0 0.0
        %1260 = vmatpush1.msra.mxu0 0.0
        %1261 = vmatprep.subr.mxu0 0.0
        %1262 = vmatpush1.msra.mxu0 0.0
        %1263 = vmatprep.subr.mxu0 0.0
        %1264 = vmatpush1.msra.mxu0 0.0
        %1265 = vmatprep.subr.mxu0 0.0
        %1266 = vmatpush1.msra.mxu0 0.0
        %1267 = vmatprep.subr.mxu0 0.0
        %1268 = vmatpush1.msra.mxu0 0.0
        %1269 = vmatprep.subr.mxu0 0.0
        %1270 = vmatpush1.msra.mxu0 0.0
        %1271 = vmatprep.subr.mxu0 0.0
        %1272 = vmatpush1.msra.mxu0 0.0
        %1273 = vmatprep.subr.mxu0 0.0
        %1274 = vmatpush1.msra.mxu0 0.0
        %1275 = vmatprep.subr.mxu0 0.0
        %1276 = vmatpush1.msra.mxu0 0.0
        %1277 = vmatprep.subr.mxu0 0.0
        %1278 = vmatpush1.msra.mxu0 0.0
        %1279 = vmatprep.subr.mxu0 0.0
        %1280 = vmatpush1.msra.mxu0 0.0
        %1281 = vmatprep.subr.mxu0 0.0
        %1282 = vmatpush1.msra.mxu0 0.0
        %1283 = vmatprep.subr.mxu0 0.0
        %1284 = vmatpush1.msra.mxu0 0.0
        %1285 = vmatprep.subr.mxu0 0.0
        %1286 = vmatpush1.msra.mxu0 0.0
        %1287 = vmatprep.subr.mxu0 0.0
        %1288 = vmatpush1.msra.mxu0 0.0
        %1289 = vmatprep.mubr.f32.mxu0 0.0
        %1290 = vmatmul.mubr.f32.gmra.mrb[0].mxu0 %v1013
        %v1291 = vpop.f32.mrb[0].mxu0
        %v1292 = vadd.f32 %v1006, %v1291
        %v1293 = vpop.f32.mrb[0].mxu0
        %1294 = vdwg.mxu0
        %v1299 = vlaneseq
        %v1300 = vshrl.u32 %v1299, 7
        %v1301 = vsub.s32 0, %v1300
        %v1302 = vrot.slane %v937, %v1301
        %v1303 = vlaneseq
        %v1304 = vshrl.u32 %v1303, 7
        %v1305 = vsub.s32 0, %v1304
        %v1306 = vrot.slane %v938, %v1305
        %v1307 = vlaneseq
        %v1308 = vshrl.u32 %v1307, 7
        %v1309 = vsub.s32 0, %v1308
        %v1310 = vrot.slane %v939, %v1309
        %v1311 = vlaneseq
        %v1312 = vshrl.u32 %v1311, 7
        %v1313 = vsub.s32 0, %v1312
        %v1314 = vrot.slane %v940, %v1313
        %1319 = vmatprep.subr.mxu0 0.0
        %1320 = vmatpush1.msra.mxu0 %v921
        %1321 = vmatprep.subr.mxu0 0.0
        %1322 = vmatpush1.msra.mxu0 %v922
        %1323 = vmatprep.subr.mxu0 0.0
        %1324 = vmatpush1.msra.mxu0 %v923
        %1325 = vmatprep.subr.mxu0 0.0
        %1326 = vmatpush1.msra.mxu0 %v924
        %1327 = vmatprep.subr.mxu0 0.0
        %1328 = vmatpush1.msra.mxu0 0.0
        %1329 = vmatprep.subr.mxu0 0.0
        %1330 = vmatpush1.msra.mxu0 0.0
        %1331 = vmatprep.subr.mxu0 0.0
        %1332 = vmatpush1.msra.mxu0 0.0
        %1333 = vmatprep.subr.mxu0 0.0
        %1334 = vmatpush1.msra.mxu0 0.0
        %1335 = vmatprep.subr.mxu0 0.0
        %1336 = vmatpush1.msra.mxu0 0.0
        %1337 = vmatprep.subr.mxu0 0.0
        %1338 = vmatpush1.msra.mxu0 0.0
        %1339 = vmatprep.subr.mxu0 0.0
        %1340 = vmatpush1.msra.mxu0 0.0
        %1341 = vmatprep.subr.mxu0 0.0
        %1342 = vmatpush1.msra.mxu0 0.0
        %1343 = vmatprep.subr.mxu0 0.0
        %1344 = vmatpush1.msra.mxu0 0.0
        %1345 = vmatprep.subr.mxu0 0.0
        %1346 = vmatpush1.msra.mxu0 0.0
        %1347 = vmatprep.subr.mxu0 0.0
        %1348 = vmatpush1.msra.mxu0 0.0
        %1349 = vmatprep.subr.mxu0 0.0
        %1350 = vmatpush1.msra.mxu0 0.0
        %1351 = vmatprep.subr.mxu0 0.0
        %1352 = vmatpush1.msra.mxu0 0.0
        %1353 = vmatprep.subr.mxu0 0.0
        %1354 = vmatpush1.msra.mxu0 0.0
        %1355 = vmatprep.subr.mxu0 0.0
        %1356 = vmatpush1.msra.mxu0 0.0
        %1357 = vmatprep.subr.mxu0 0.0
        %1358 = vmatpush1.msra.mxu0 0.0
        %1359 = vmatprep.subr.mxu0 0.0
        %1360 = vmatpush1.msra.mxu0 0.0
        %1361 = vmatprep.subr.mxu0 0.0
        %1362 = vmatpush1.msra.mxu0 0.0
        %1363 = vmatprep.subr.mxu0 0.0
        %1364 = vmatpush1.msra.mxu0 0.0
        %1365 = vmatprep.subr.mxu0 0.0
        %1366 = vmatpush1.msra.mxu0 0.0
        %1367 = vmatprep.subr.mxu0 0.0
        %1368 = vmatpush1.msra.mxu0 0.0
        %1369 = vmatprep.subr.mxu0 0.0
        %1370 = vmatpush1.msra.mxu0 0.0
        %1371 = vmatprep.subr.mxu0 0.0
        %1372 = vmatpush1.msra.mxu0 0.0
        %1373 = vmatprep.subr.mxu0 0.0
        %1374 = vmatpush1.msra.mxu0 0.0
        %1375 = vmatprep.subr.mxu0 0.0
        %1376 = vmatpush1.msra.mxu0 0.0
        %1377 = vmatprep.subr.mxu0 0.0
        %1378 = vmatpush1.msra.mxu0 0.0
        %1379 = vmatprep.subr.mxu0 0.0
        %1380 = vmatpush1.msra.mxu0 0.0
        %1381 = vmatprep.subr.mxu0 0.0
        %1382 = vmatpush1.msra.mxu0 0.0
        %1383 = vmatprep.mubr.f32.mxu0 0.0
        %1384 = vmatmul.mubr.f32.gmra.mrb[0].mxu0 %v1013
        %v1385 = vpop.f32.mrb[0].mxu0
        %v1386 = vadd.f32 %v1302, %v1385
        %v1387 = vpop.f32.mrb[0].mxu0
        %1388 = vdwg.mxu0
        %1389 = vmatprep.subr.mxu0 0.0
        %1390 = vmatpush1.msra.mxu0 %v925
        %1391 = vmatprep.subr.mxu0 0.0
        %1392 = vmatpush1.msra.mxu0 %v926
        %1393 = vmatprep.subr.mxu0 0.0
        %1394 = vmatpush1.msra.mxu0 %v927
        %1395 = vmatprep.subr.mxu0 0.0
        %1396 = vmatpush1.msra.mxu0 %v928
        %1397 = vmatprep.subr.mxu0 0.0
        %1398 = vmatpush1.msra.mxu0 0.0
        %1399 = vmatprep.subr.mxu0 0.0
        %1400 = vmatpush1.msra.mxu0 0.0
        %1401 = vmatprep.subr.mxu0 0.0
        %1402 = vmatpush1.msra.mxu0 0.0
        %1403 = vmatprep.subr.mxu0 0.0
        %1404 = vmatpush1.msra.mxu0 0.0
        %1405 = vmatprep.subr.mxu0 0.0
        %1406 = vmatpush1.msra.mxu0 0.0
        %1407 = vmatprep.subr.mxu0 0.0
        %1408 = vmatpush1.msra.mxu0 0.0
        %1409 = vmatprep.subr.mxu0 0.0
        %1410 = vmatpush1.msra.mxu0 0.0
        %1411 = vmatprep.subr.mxu0 0.0
        %1412 = vmatpush1.msra.mxu0 0.0
        %1413 = vmatprep.subr.mxu0 0.0
        %1414 = vmatpush1.msra.mxu0 0.0
        %1415 = vmatprep.subr.mxu0 0.0
        %1416 = vmatpush1.msra.mxu0 0.0
        %1417 = vmatprep.subr.mxu0 0.0
        %1418 = vmatpush1.msra.mxu0 0.0
        %1419 = vmatprep.subr.mxu0 0.0
        %1420 = vmatpush1.msra.mxu0 0.0
        %1421 = vmatprep.subr.mxu0 0.0
        %1422 = vmatpush1.msra.mxu0 0.0
        %1423 = vmatprep.subr.mxu0 0.0
        %1424 = vmatpush1.msra.mxu0 0.0
        %1425 = vmatprep.subr.mxu0 0.0
        %1426 = vmatpush1.msra.mxu0 0.0
        %1427 = vmatprep.subr.mxu0 0.0
        %1428 = vmatpush1.msra.mxu0 0.0
        %1429 = vmatprep.subr.mxu0 0.0
        %1430 = vmatpush1.msra.mxu0 0.0
        %1431 = vmatprep.subr.mxu0 0.0
        %1432 = vmatpush1.msra.mxu0 0.0
        %1433 = vmatprep.subr.mxu0 0.0
        %1434 = vmatpush1.msra.mxu0 0.0
        %1435 = vmatprep.subr.mxu0 0.0
        %1436 = vmatpush1.msra.mxu0 0.0
        %1437 = vmatprep.subr.mxu0 0.0
        %1438 = vmatpush1.msra.mxu0 0.0
        %1439 = vmatprep.subr.mxu0 0.0
        %1440 = vmatpush1.msra.mxu0 0.0
        %1441 = vmatprep.subr.mxu0 0.0
        %1442 = vmatpush1.msra.mxu0 0.0
        %1443 = vmatprep.subr.mxu0 0.0
        %1444 = vmatpush1.msra.mxu0 0.0
        %1445 = vmatprep.subr.mxu0 0.0
        %1446 = vmatpush1.msra.mxu0 0.0
        %1447 = vmatprep.subr.mxu0 0.0
        %1448 = vmatpush1.msra.mxu0 0.0
        %1449 = vmatprep.subr.mxu0 0.0
        %1450 = vmatpush1.msra.mxu0 0.0
        %1451 = vmatprep.subr.mxu0 0.0
        %1452 = vmatpush1.msra.mxu0 0.0
        %1453 = vmatprep.mubr.f32.mxu0 0.0
        %1454 = vmatmul.mubr.f32.gmra.mrb[0].mxu0 %v1013
        %v1455 = vpop.f32.mrb[0].mxu0
        %v1456 = vadd.f32 %v1306, %v1455
        %v1457 = vpop.f32.mrb[0].mxu0
        %1458 = vdwg.mxu0
        %1459 = vmatprep.subr.mxu0 0.0
        %1460 = vmatpush1.msra.mxu0 %v929
        %1461 = vmatprep.subr.mxu0 0.0
        %1462 = vmatpush1.msra.mxu0 %v930
        %1463 = vmatprep.subr.mxu0 0.0
        %1464 = vmatpush1.msra.mxu0 %v931
        %1465 = vmatprep.subr.mxu0 0.0
        %1466 = vmatpush1.msra.mxu0 %v932
        %1467 = vmatprep.subr.mxu0 0.0
        %1468 = vmatpush1.msra.mxu0 0.0
        %1469 = vmatprep.subr.mxu0 0.0
        %1470 = vmatpush1.msra.mxu0 0.0
        %1471 = vmatprep.subr.mxu0 0.0
        %1472 = vmatpush1.msra.mxu0 0.0
        %1473 = vmatprep.subr.mxu0 0.0
        %1474 = vmatpush1.msra.mxu0 0.0
        %1475 = vmatprep.subr.mxu0 0.0
        %1476 = vmatpush1.msra.mxu0 0.0
        %1477 = vmatprep.subr.mxu0 0.0
        %1478 = vmatpush1.msra.mxu0 0.0
        %1479 = vmatprep.subr.mxu0 0.0
        %1480 = vmatpush1.msra.mxu0 0.0
        %1481 = vmatprep.subr.mxu0 0.0
        %1482 = vmatpush1.msra.mxu0 0.0
        %1483 = vmatprep.subr.mxu0 0.0
        %1484 = vmatpush1.msra.mxu0 0.0
        %1485 = vmatprep.subr.mxu0 0.0
        %1486 = vmatpush1.msra.mxu0 0.0
        %1487 = vmatprep.subr.mxu0 0.0
        %1488 = vmatpush1.msra.mxu0 0.0
        %1489 = vmatprep.subr.mxu0 0.0
        %1490 = vmatpush1.msra.mxu0 0.0
        %1491 = vmatprep.subr.mxu0 0.0
        %1492 = vmatpush1.msra.mxu0 0.0
        %1493 = vmatprep.subr.mxu0 0.0
        %1494 = vmatpush1.msra.mxu0 0.0
        %1495 = vmatprep.subr.mxu0 0.0
        %1496 = vmatpush1.msra.mxu0 0.0
        %1497 = vmatprep.subr.mxu0 0.0
        %1498 = vmatpush1.msra.mxu0 0.0
        %1499 = vmatprep.subr.mxu0 0.0
        %1500 = vmatpush1.msra.mxu0 0.0
        %1501 = vmatprep.subr.mxu0 0.0
        %1502 = vmatpush1.msra.mxu0 0.0
        %1503 = vmatprep.subr.mxu0 0.0
        %1504 = vmatpush1.msra.mxu0 0.0
        %1505 = vmatprep.subr.mxu0 0.0
        %1506 = vmatpush1.msra.mxu0 0.0
        %1507 = vmatprep.subr.mxu0 0.0
        %1508 = vmatpush1.msra.mxu0 0.0
        %1509 = vmatprep.subr.mxu0 0.0
        %1510 = vmatpush1.msra.mxu0 0.0
        %1511 = vmatprep.subr.mxu0 0.0
        %1512 = vmatpush1.msra.mxu0 0.0
        %1513 = vmatprep.subr.mxu0 0.0
        %1514 = vmatpush1.msra.mxu0 0.0
        %1515 = vmatprep.subr.mxu0 0.0
        %1516 = vmatpush1.msra.mxu0 0.0
        %1517 = vmatprep.subr.mxu0 0.0
        %1518 = vmatpush1.msra.mxu0 0.0
        %1519 = vmatprep.subr.mxu0 0.0
        %1520 = vmatpush1.msra.mxu0 0.0
        %1521 = vmatprep.subr.mxu0 0.0
        %1522 = vmatpush1.msra.mxu0 0.0
        %1523 = vmatprep.mubr.f32.mxu0 0.0
        %1524 = vmatmul.mubr.f32.gmra.mrb[0].mxu0 %v1013
        %v1525 = vpop.f32.mrb[0].mxu0
        %v1526 = vadd.f32 %v1310, %v1525
        %v1527 = vpop.f32.mrb[0].mxu0
        %1528 = vdwg.mxu0
        %1529 = vmatprep.subr.mxu0 0.0
        %1530 = vmatpush1.msra.mxu0 %v933
        %1531 = vmatprep.subr.mxu0 0.0
        %1532 = vmatpush1.msra.mxu0 %v934
        %1533 = vmatprep.subr.mxu0 0.0
        %1534 = vmatpush1.msra.mxu0 %v935
        %1535 = vmatprep.subr.mxu0 0.0
        %1536 = vmatpush1.msra.mxu0 %v936
        %1537 = vmatprep.subr.mxu0 0.0
        %1538 = vmatpush1.msra.mxu0 0.0
        %1539 = vmatprep.subr.mxu0 0.0
        %1540 = vmatpush1.msra.mxu0 0.0
        %1541 = vmatprep.subr.mxu0 0.0
        %1542 = vmatpush1.msra.mxu0 0.0
        %1543 = vmatprep.subr.mxu0 0.0
        %1544 = vmatpush1.msra.mxu0 0.0
        %1545 = vmatprep.subr.mxu0 0.0
        %1546 = vmatpush1.msra.mxu0 0.0
        %1547 = vmatprep.subr.mxu0 0.0
        %1548 = vmatpush1.msra.mxu0 0.0
        %1549 = vmatprep.subr.mxu0 0.0
        %1550 = vmatpush1.msra.mxu0 0.0
        %1551 = vmatprep.subr.mxu0 0.0
        %1552 = vmatpush1.msra.mxu0 0.0
        %1553 = vmatprep.subr.mxu0 0.0
        %1554 = vmatpush1.msra.mxu0 0.0
        %1555 = vmatprep.subr.mxu0 0.0
        %1556 = vmatpush1.msra.mxu0 0.0
        %1557 = vmatprep.subr.mxu0 0.0
        %1558 = vmatpush1.msra.mxu0 0.0
        %1559 = vmatprep.subr.mxu0 0.0
        %1560 = vmatpush1.msra.mxu0 0.0
        %1561 = vmatprep.subr.mxu0 0.0
        %1562 = vmatpush1.msra.mxu0 0.0
        %1563 = vmatprep.subr.mxu0 0.0
        %1564 = vmatpush1.msra.mxu0 0.0
        %1565 = vmatprep.subr.mxu0 0.0
        %1566 = vmatpush1.msra.mxu0 0.0
        %1567 = vmatprep.subr.mxu0 0.0
        %1568 = vmatpush1.msra.mxu0 0.0
        %1569 = vmatprep.subr.mxu0 0.0
        %1570 = vmatpush1.msra.mxu0 0.0
        %1571 = vmatprep.subr.mxu0 0.0
        %1572 = vmatpush1.msra.mxu0 0.0
        %1573 = vmatprep.subr.mxu0 0.0
        %1574 = vmatpush1.msra.mxu0 0.0
        %1575 = vmatprep.subr.mxu0 0.0
        %1576 = vmatpush1.msra.mxu0 0.0
        %1577 = vmatprep.subr.mxu0 0.0
        %1578 = vmatpush1.msra.mxu0 0.0
        %1579 = vmatprep.subr.mxu0 0.0
        %1580 = vmatpush1.msra.mxu0 0.0
        %1581 = vmatprep.subr.mxu0 0.0
        %1582 = vmatpush1.msra.mxu0 0.0
        %1583 = vmatprep.subr.mxu0 0.0
        %1584 = vmatpush1.msra.mxu0 0.0
        %1585 = vmatprep.subr.mxu0 0.0
        %1586 = vmatpush1.msra.mxu0 0.0
        %1587 = vmatprep.subr.mxu0 0.0
        %1588 = vmatpush1.msra.mxu0 0.0
        %1589 = vmatprep.subr.mxu0 0.0
        %1590 = vmatpush1.msra.mxu0 0.0
        %1591 = vmatprep.subr.mxu0 0.0
        %1592 = vmatpush1.msra.mxu0 0.0
        %1593 = vmatprep.mubr.f32.mxu0 0.0
        %1594 = vmatmul.mubr.f32.gmra.mrb[0].mxu0 %v1013
        %v1595 = vpop.f32.mrb[0].mxu0
        %v1596 = vadd.f32 %v1314, %v1595
        %v1597 = vpop.f32.mrb[0].mxu0
        %1598 = vdwg.mxu0
        %v1603 = vlaneseq
        %v1604 = vshrl.u32 %v1603, 7
        %v1605 = vsub.s32 0, %v1604
        %v1606 = vrot.slane %v957, %v1605
        %v1607 = vlaneseq
        %v1608 = vshrl.u32 %v1607, 7
        %v1609 = vsub.s32 0, %v1608
        %v1610 = vrot.slane %v958, %v1609
        %v1611 = vlaneseq
        %v1612 = vshrl.u32 %v1611, 7
        %v1613 = vsub.s32 0, %v1612
        %v1614 = vrot.slane %v959, %v1613
        %v1615 = vlaneseq
        %v1616 = vshrl.u32 %v1615, 7
        %v1617 = vsub.s32 0, %v1616
        %v1618 = vrot.slane %v960, %v1617
        %1623 = vmatprep.subr.mxu0 0.0
        %1624 = vmatpush1.msra.mxu0 %v941
        %1625 = vmatprep.subr.mxu0 0.0
        %1626 = vmatpush1.msra.mxu0 %v942
        %1627 = vmatprep.subr.mxu0 0.0
        %1628 = vmatpush1.msra.mxu0 %v943
        %1629 = vmatprep.subr.mxu0 0.0
        %1630 = vmatpush1.msra.mxu0 %v944
        %1631 = vmatprep.subr.mxu0 0.0
        %1632 = vmatpush1.msra.mxu0 0.0
        %1633 = vmatprep.subr.mxu0 0.0
        %1634 = vmatpush1.msra.mxu0 0.0
        %1635 = vmatprep.subr.mxu0 0.0
        %1636 = vmatpush1.msra.mxu0 0.0
        %1637 = vmatprep.subr.mxu0 0.0
        %1638 = vmatpush1.msra.mxu0 0.0
        %1639 = vmatprep.subr.mxu0 0.0
        %1640 = vmatpush1.msra.mxu0 0.0
        %1641 = vmatprep.subr.mxu0 0.0
        %1642 = vmatpush1.msra.mxu0 0.0
        %1643 = vmatprep.subr.mxu0 0.0
        %1644 = vmatpush1.msra.mxu0 0.0
        %1645 = vmatprep.subr.mxu0 0.0
        %1646 = vmatpush1.msra.mxu0 0.0
        %1647 = vmatprep.subr.mxu0 0.0
        %1648 = vmatpush1.msra.mxu0 0.0
        %1649 = vmatprep.subr.mxu0 0.0
        %1650 = vmatpush1.msra.mxu0 0.0
        %1651 = vmatprep.subr.mxu0 0.0
        %1652 = vmatpush1.msra.mxu0 0.0
        %1653 = vmatprep.subr.mxu0 0.0
        %1654 = vmatpush1.msra.mxu0 0.0
        %1655 = vmatprep.subr.mxu0 0.0
        %1656 = vmatpush1.msra.mxu0 0.0
        %1657 = vmatprep.subr.mxu0 0.0
        %1658 = vmatpush1.msra.mxu0 0.0
        %1659 = vmatprep.subr.mxu0 0.0
        %1660 = vmatpush1.msra.mxu0 0.0
        %1661 = vmatprep.subr.mxu0 0.0
        %1662 = vmatpush1.msra.mxu0 0.0
        %1663 = vmatprep.subr.mxu0 0.0
        %1664 = vmatpush1.msra.mxu0 0.0
        %1665 = vmatprep.subr.mxu0 0.0
        %1666 = vmatpush1.msra.mxu0 0.0
        %1667 = vmatprep.subr.mxu0 0.0
        %1668 = vmatpush1.msra.mxu0 0.0
        %1669 = vmatprep.subr.mxu0 0.0
        %1670 = vmatpush1.msra.mxu0 0.0
        %1671 = vmatprep.subr.mxu0 0.0
        %1672 = vmatpush1.msra.mxu0 0.0
        %1673 = vmatprep.subr.mxu0 0.0
        %1674 = vmatpush1.msra.mxu0 0.0
        %1675 = vmatprep.subr.mxu0 0.0
        %1676 = vmatpush1.msra.mxu0 0.0
        %1677 = vmatprep.subr.mxu0 0.0
        %1678 = vmatpush1.msra.mxu0 0.0
        %1679 = vmatprep.subr.mxu0 0.0
        %1680 = vmatpush1.msra.mxu0 0.0
        %1681 = vmatprep.subr.mxu0 0.0
        %1682 = vmatpush1.msra.mxu0 0.0
        %1683 = vmatprep.subr.mxu0 0.0
        %1684 = vmatpush1.msra.mxu0 0.0
        %1685 = vmatprep.subr.mxu0 0.0
        %1686 = vmatpush1.msra.mxu0 0.0
        %1687 = vmatprep.mubr.f32.mxu0 0.0
        %1688 = vmatmul.mubr.f32.gmra.mrb[0].mxu0 %v1013
        %v1689 = vpop.f32.mrb[0].mxu0
        %v1690 = vadd.f32 %v1606, %v1689
        %v1691 = vpop.f32.mrb[0].mxu0
        %1692 = vdwg.mxu0
        %1693 = vmatprep.subr.mxu0 0.0
        %1694 = vmatpush1.msra.mxu0 %v945
        %1695 = vmatprep.subr.mxu0 0.0
        %1696 = vmatpush1.msra.mxu0 %v946
        %1697 = vmatprep.subr.mxu0 0.0
        %1698 = vmatpush1.msra.mxu0 %v947
        %1699 = vmatprep.subr.mxu0 0.0
        %1700 = vmatpush1.msra.mxu0 %v948
        %1701 = vmatprep.subr.mxu0 0.0
        %1702 = vmatpush1.msra.mxu0 0.0
        %1703 = vmatprep.subr.mxu0 0.0
        %1704 = vmatpush1.msra.mxu0 0.0
        %1705 = vmatprep.subr.mxu0 0.0
        %1706 = vmatpush1.msra.mxu0 0.0
        %1707 = vmatprep.subr.mxu0 0.0
        %1708 = vmatpush1.msra.mxu0 0.0
        %1709 = vmatprep.subr.mxu0 0.0
        %1710 = vmatpush1.msra.mxu0 0.0
        %1711 = vmatprep.subr.mxu0 0.0
        %1712 = vmatpush1.msra.mxu0 0.0
        %1713 = vmatprep.subr.mxu0 0.0
        %1714 = vmatpush1.msra.mxu0 0.0
        %1715 = vmatprep.subr.mxu0 0.0
        %1716 = vmatpush1.msra.mxu0 0.0
        %1717 = vmatprep.subr.mxu0 0.0
        %1718 = vmatpush1.msra.mxu0 0.0
        %1719 = vmatprep.subr.mxu0 0.0
        %1720 = vmatpush1.msra.mxu0 0.0
        %1721 = vmatprep.subr.mxu0 0.0
        %1722 = vmatpush1.msra.mxu0 0.0
        %1723 = vmatprep.subr.mxu0 0.0
        %1724 = vmatpush1.msra.mxu0 0.0
        %1725 = vmatprep.subr.mxu0 0.0
        %1726 = vmatpush1.msra.mxu0 0.0
        %1727 = vmatprep.subr.mxu0 0.0
        %1728 = vmatpush1.msra.mxu0 0.0
        %1729 = vmatprep.subr.mxu0 0.0
        %1730 = vmatpush1.msra.mxu0 0.0
        %1731 = vmatprep.subr.mxu0 0.0
        %1732 = vmatpush1.msra.mxu0 0.0
        %1733 = vmatprep.subr.mxu0 0.0
        %1734 = vmatpush1.msra.mxu0 0.0
        %1735 = vmatprep.subr.mxu0 0.0
        %1736 = vmatpush1.msra.mxu0 0.0
        %1737 = vmatprep.subr.mxu0 0.0
        %1738 = vmatpush1.msra.mxu0 0.0
        %1739 = vmatprep.subr.mxu0 0.0
        %1740 = vmatpush1.msra.mxu0 0.0
        %1741 = vmatprep.subr.mxu0 0.0
        %1742 = vmatpush1.msra.mxu0 0.0
        %1743 = vmatprep.subr.mxu0 0.0
        %1744 = vmatpush1.msra.mxu0 0.0
        %1745 = vmatprep.subr.mxu0 0.0
        %1746 = vmatpush1.msra.mxu0 0.0
        %1747 = vmatprep.subr.mxu0 0.0
        %1748 = vmatpush1.msra.mxu0 0.0
        %1749 = vmatprep.subr.mxu0 0.0
        %1750 = vmatpush1.msra.mxu0 0.0
        %1751 = vmatprep.subr.mxu0 0.0
        %1752 = vmatpush1.msra.mxu0 0.0
        %1753 = vmatprep.subr.mxu0 0.0
        %1754 = vmatpush1.msra.mxu0 0.0
        %1755 = vmatprep.subr.mxu0 0.0
        %1756 = vmatpush1.msra.mxu0 0.0
        %1757 = vmatprep.mubr.f32.mxu0 0.0
        %1758 = vmatmul.mubr.f32.gmra.mrb[0].mxu0 %v1013
        %v1759 = vpop.f32.mrb[0].mxu0
        %v1760 = vadd.f32 %v1610, %v1759
        %v1761 = vpop.f32.mrb[0].mxu0
        %1762 = vdwg.mxu0
        %1763 = vmatprep.subr.mxu0 0.0
        %1764 = vmatpush1.msra.mxu0 %v949
        %1765 = vmatprep.subr.mxu0 0.0
        %1766 = vmatpush1.msra.mxu0 %v950
        %1767 = vmatprep.subr.mxu0 0.0
        %1768 = vmatpush1.msra.mxu0 %v951
        %1769 = vmatprep.subr.mxu0 0.0
        %1770 = vmatpush1.msra.mxu0 %v952
        %1771 = vmatprep.subr.mxu0 0.0
        %1772 = vmatpush1.msra.mxu0 0.0
        %1773 = vmatprep.subr.mxu0 0.0
        %1774 = vmatpush1.msra.mxu0 0.0
        %1775 = vmatprep.subr.mxu0 0.0
        %1776 = vmatpush1.msra.mxu0 0.0
        %1777 = vmatprep.subr.mxu0 0.0
        %1778 = vmatpush1.msra.mxu0 0.0
        %1779 = vmatprep.subr.mxu0 0.0
        %1780 = vmatpush1.msra.mxu0 0.0
        %1781 = vmatprep.subr.mxu0 0.0
        %1782 = vmatpush1.msra.mxu0 0.0
        %1783 = vmatprep.subr.mxu0 0.0
        %1784 = vmatpush1.msra.mxu0 0.0
        %1785 = vmatprep.subr.mxu0 0.0
        %1786 = vmatpush1.msra.mxu0 0.0
        %1787 = vmatprep.subr.mxu0 0.0
        %1788 = vmatpush1.msra.mxu0 0.0
        %1789 = vmatprep.subr.mxu0 0.0
        %1790 = vmatpush1.msra.mxu0 0.0
        %1791 = vmatprep.subr.mxu0 0.0
        %1792 = vmatpush1.msra.mxu0 0.0
        %1793 = vmatprep.subr.mxu0 0.0
        %1794 = vmatpush1.msra.mxu0 0.0
        %1795 = vmatprep.subr.mxu0 0.0
        %1796 = vmatpush1.msra.mxu0 0.0
        %1797 = vmatprep.subr.mxu0 0.0
        %1798 = vmatpush1.msra.mxu0 0.0
        %1799 = vmatprep.subr.mxu0 0.0
        %1800 = vmatpush1.msra.mxu0 0.0
        %1801 = vmatprep.subr.mxu0 0.0
        %1802 = vmatpush1.msra.mxu0 0.0
        %1803 = vmatprep.subr.mxu0 0.0
        %1804 = vmatpush1.msra.mxu0 0.0
        %1805 = vmatprep.subr.mxu0 0.0
        %1806 = vmatpush1.msra.mxu0 0.0
        %1807 = vmatprep.subr.mxu0 0.0
        %1808 = vmatpush1.msra.mxu0 0.0
        %1809 = vmatprep.subr.mxu0 0.0
        %1810 = vmatpush1.msra.mxu0 0.0
        %1811 = vmatprep.subr.mxu0 0.0
        %1812 = vmatpush1.msra.mxu0 0.0
        %1813 = vmatprep.subr.mxu0 0.0
        %1814 = vmatpush1.msra.mxu0 0.0
        %1815 = vmatprep.subr.mxu0 0.0
        %1816 = vmatpush1.msra.mxu0 0.0
        %1817 = vmatprep.subr.mxu0 0.0
        %1818 = vmatpush1.msra.mxu0 0.0
        %1819 = vmatprep.subr.mxu0 0.0
        %1820 = vmatpush1.msra.mxu0 0.0
        %1821 = vmatprep.subr.mxu0 0.0
        %1822 = vmatpush1.msra.mxu0 0.0
        %1823 = vmatprep.subr.mxu0 0.0
        %1824 = vmatpush1.msra.mxu0 0.0
        %1825 = vmatprep.subr.mxu0 0.0
        %1826 = vmatpush1.msra.mxu0 0.0
        %1827 = vmatprep.mubr.f32.mxu0 0.0
        %1828 = vmatmul.mubr.f32.gmra.mrb[0].mxu0 %v1013
        %v1829 = vpop.f32.mrb[0].mxu0
        %v1830 = vadd.f32 %v1614, %v1829
        %v1831 = vpop.f32.mrb[0].mxu0
        %1832 = vdwg.mxu0
        %1833 = vmatprep.subr.mxu0 0.0
        %1834 = vmatpush1.msra.mxu0 %v953
        %1835 = vmatprep.subr.mxu0 0.0
        %1836 = vmatpush1.msra.mxu0 %v954
        %1837 = vmatprep.subr.mxu0 0.0
        %1838 = vmatpush1.msra.mxu0 %v955
        %1839 = vmatprep.subr.mxu0 0.0
        %1840 = vmatpush1.msra.mxu0 %v956
        %1841 = vmatprep.subr.mxu0 0.0
        %1842 = vmatpush1.msra.mxu0 0.0
        %1843 = vmatprep.subr.mxu0 0.0
        %1844 = vmatpush1.msra.mxu0 0.0
        %1845 = vmatprep.subr.mxu0 0.0
        %1846 = vmatpush1.msra.mxu0 0.0
        %1847 = vmatprep.subr.mxu0 0.0
        %1848 = vmatpush1.msra.mxu0 0.0
        %1849 = vmatprep.subr.mxu0 0.0
        %1850 = vmatpush1.msra.mxu0 0.0
        %1851 = vmatprep.subr.mxu0 0.0
        %1852 = vmatpush1.msra.mxu0 0.0
        %1853 = vmatprep.subr.mxu0 0.0
        %1854 = vmatpush1.msra.mxu0 0.0
        %1855 = vmatprep.subr.mxu0 0.0
        %1856 = vmatpush1.msra.mxu0 0.0
        %1857 = vmatprep.subr.mxu0 0.0
        %1858 = vmatpush1.msra.mxu0 0.0
        %1859 = vmatprep.subr.mxu0 0.0
        %1860 = vmatpush1.msra.mxu0 0.0
        %1861 = vmatprep.subr.mxu0 0.0
        %1862 = vmatpush1.msra.mxu0 0.0
        %1863 = vmatprep.subr.mxu0 0.0
        %1864 = vmatpush1.msra.mxu0 0.0
        %1865 = vmatprep.subr.mxu0 0.0
        %1866 = vmatpush1.msra.mxu0 0.0
        %1867 = vmatprep.subr.mxu0 0.0
        %1868 = vmatpush1.msra.mxu0 0.0
        %1869 = vmatprep.subr.mxu0 0.0
        %1870 = vmatpush1.msra.mxu0 0.0
        %1871 = vmatprep.subr.mxu0 0.0
        %1872 = vmatpush1.msra.mxu0 0.0
        %1873 = vmatprep.subr.mxu0 0.0
        %1874 = vmatpush1.msra.mxu0 0.0
        %1875 = vmatprep.subr.mxu0 0.0
        %1876 = vmatpush1.msra.mxu0 0.0
        %1877 = vmatprep.subr.mxu0 0.0
        %1878 = vmatpush1.msra.mxu0 0.0
        %1879 = vmatprep.subr.mxu0 0.0
        %1880 = vmatpush1.msra.mxu0 0.0
        %1881 = vmatprep.subr.mxu0 0.0
        %1882 = vmatpush1.msra.mxu0 0.0
        %1883 = vmatprep.subr.mxu0 0.0
        %1884 = vmatpush1.msra.mxu0 0.0
        %1885 = vmatprep.subr.mxu0 0.0
        %1886 = vmatpush1.msra.mxu0 0.0
        %1887 = vmatprep.subr.mxu0 0.0
        %1888 = vmatpush1.msra.mxu0 0.0
        %1889 = vmatprep.subr.mxu0 0.0
        %1890 = vmatpush1.msra.mxu0 0.0
        %1891 = vmatprep.subr.mxu0 0.0
        %1892 = vmatpush1.msra.mxu0 0.0
        %1893 = vmatprep.subr.mxu0 0.0
        %1894 = vmatpush1.msra.mxu0 0.0
        %1895 = vmatprep.subr.mxu0 0.0
        %1896 = vmatpush1.msra.mxu0 0.0
        %1897 = vmatprep.mubr.f32.mxu0 0.0
        %1898 = vmatmul.mubr.f32.gmra.mrb[0].mxu0 %v1013
        %v1899 = vpop.f32.mrb[0].mxu0
        %v1900 = vadd.f32 %v1618, %v1899
        %v1901 = vpop.f32.mrb[0].mxu0
        %1902 = vdwg.mxu0
        %vm1903 = vcmask 64512
        %v1905 = vsel %vm1903, %v1082, 0
        %v1908 = vsel %vm1903, %v1386, 0
        %1910 = vmatprep.subr.mxu0 0.0
        %1911 = vmatpush1.xpose.msra.mxu0 %v1908
        %1912 = vmatprep.subr.mxu0 0.0
        %1913 = vmatpush1.xpose.msra.mxu0 0.0
        %1914 = vmatprep.subr.mxu0 0.0
        %1915 = vmatpush1.xpose.msra.mxu0 0.0
        %1916 = vmatprep.subr.mxu0 0.0
        %1917 = vmatpush1.xpose.msra.mxu0 0.0
        %1918 = vmatprep.subr.mxu0 0.0
        %1919 = vmatpush1.xpose.msra.mxu0 0.0
        %1920 = vmatprep.subr.mxu0 0.0
        %1921 = vmatpush1.xpose.msra.mxu0 0.0
        %1922 = vmatprep.subr.mxu0 0.0
        %1923 = vmatpush1.xpose.msra.mxu0 0.0
        %1924 = vmatprep.subr.mxu0 0.0
        %1925 = vmatpush1.xpose.msra.mxu0 0.0
        %1926 = vmatprep.subr.mxu0 0.0
        %1927 = vmatpush1.xpose.msra.mxu0 0.0
        %1928 = vmatprep.subr.mxu0 0.0
        %1929 = vmatpush1.xpose.msra.mxu0 0.0
        %1930 = vmatprep.subr.mxu0 0.0
        %1931 = vmatpush1.xpose.msra.mxu0 0.0
        %1932 = vmatprep.subr.mxu0 0.0
        %1933 = vmatpush1.xpose.msra.mxu0 0.0
        %1934 = vmatprep.subr.mxu0 0.0
        %1935 = vmatpush1.xpose.msra.mxu0 0.0
        %1936 = vmatprep.subr.mxu0 0.0
        %1937 = vmatpush1.xpose.msra.mxu0 0.0
        %1938 = vmatprep.subr.mxu0 0.0
        %1939 = vmatpush1.xpose.msra.mxu0 0.0
        %1940 = vmatprep.subr.mxu0 0.0
        %1941 = vmatpush1.xpose.msra.mxu0 0.0
        %1942 = vmatprep.subr.mxu0 0.0
        %1943 = vmatpush1.xpose.msra.mxu0 0.0
        %1944 = vmatprep.subr.mxu0 0.0
        %1945 = vmatpush1.xpose.msra.mxu0 0.0
        %1946 = vmatprep.subr.mxu0 0.0
        %1947 = vmatpush1.xpose.msra.mxu0 0.0
        %1948 = vmatprep.subr.mxu0 0.0
        %1949 = vmatpush1.xpose.msra.mxu0 0.0
        %1950 = vmatprep.subr.mxu0 0.0
        %1951 = vmatpush1.xpose.msra.mxu0 0.0
        %1952 = vmatprep.subr.mxu0 0.0
        %1953 = vmatpush1.xpose.msra.mxu0 0.0
        %1954 = vmatprep.subr.mxu0 0.0
        %1955 = vmatpush1.xpose.msra.mxu0 0.0
        %1956 = vmatprep.subr.mxu0 0.0
        %1957 = vmatpush1.xpose.msra.mxu0 0.0
        %1958 = vmatprep.subr.mxu0 0.0
        %1959 = vmatpush1.xpose.msra.mxu0 0.0
        %1960 = vmatprep.subr.mxu0 0.0
        %1961 = vmatpush1.xpose.msra.mxu0 0.0
        %1962 = vmatprep.subr.mxu0 0.0
        %1963 = vmatpush1.xpose.msra.mxu0 0.0
        %1964 = vmatprep.subr.mxu0 0.0
        %1965 = vmatpush1.xpose.msra.mxu0 0.0
        %1966 = vmatprep.subr.mxu0 0.0
        %1967 = vmatpush1.xpose.msra.mxu0 0.0
        %1968 = vmatprep.subr.mxu0 0.0
        %1969 = vmatpush1.xpose.msra.mxu0 0.0
        %1970 = vmatprep.subr.mxu0 0.0
        %1971 = vmatpush1.xpose.msra.mxu0 0.0
        %1972 = vmatprep.subr.mxu0 0.0
        %1973 = vmatpush1.xpose.msra.mxu0 0.0
        %1974 = vmatprep.mubr.f32.mxu0 0.0
        %1975 = vmatmul.mubr.f32.gmra.mrb[0].mxu0 %v1905
        %v1976 = vpop.f32.mrb[0].mxu0
        %v1977 = vadd.f32 %v986, %v1976
        %v1978 = vpop.f32.mrb[0].mxu0
        %1979 = vdwg.mxu0
        %v1981 = vsel %vm1903, %v1152, 0
        %v1984 = vsel %vm1903, %v1456, 0
        %1986 = vmatprep.subr.mxu0 0.0
        %1987 = vmatpush1.xpose.msra.mxu0 %v1984
        %1988 = vmatprep.subr.mxu0 0.0
        %1989 = vmatpush1.xpose.msra.mxu0 0.0
        %1990 = vmatprep.subr.mxu0 0.0
        %1991 = vmatpush1.xpose.msra.mxu0 0.0
        %1992 = vmatprep.subr.mxu0 0.0
        %1993 = vmatpush1.xpose.msra.mxu0 0.0
        %1994 = vmatprep.subr.mxu0 0.0
        %1995 = vmatpush1.xpose.msra.mxu0 0.0
        %1996 = vmatprep.subr.mxu0 0.0
        %1997 = vmatpush1.xpose.msra.mxu0 0.0
        %1998 = vmatprep.subr.mxu0 0.0
        %1999 = vmatpush1.xpose.msra.mxu0 0.0
        %2000 = vmatprep.subr.mxu0 0.0
        %2001 = vmatpush1.xpose.msra.mxu0 0.0
        %2002 = vmatprep.subr.mxu0 0.0
        %2003 = vmatpush1.xpose.msra.mxu0 0.0
        %2004 = vmatprep.subr.mxu0 0.0
        %2005 = vmatpush1.xpose.msra.mxu0 0.0
        %2006 = vmatprep.subr.mxu0 0.0
        %2007 = vmatpush1.xpose.msra.mxu0 0.0
        %2008 = vmatprep.subr.mxu0 0.0
        %2009 = vmatpush1.xpose.msra.mxu0 0.0
        %2010 = vmatprep.subr.mxu0 0.0
        %2011 = vmatpush1.xpose.msra.mxu0 0.0
        %2012 = vmatprep.subr.mxu0 0.0
        %2013 = vmatpush1.xpose.msra.mxu0 0.0
        %2014 = vmatprep.subr.mxu0 0.0
        %2015 = vmatpush1.xpose.msra.mxu0 0.0
        %2016 = vmatprep.subr.mxu0 0.0
        %2017 = vmatpush1.xpose.msra.mxu0 0.0
        %2018 = vmatprep.subr.mxu0 0.0
        %2019 = vmatpush1.xpose.msra.mxu0 0.0
        %2020 = vmatprep.subr.mxu0 0.0
        %2021 = vmatpush1.xpose.msra.mxu0 0.0
        %2022 = vmatprep.subr.mxu0 0.0
        %2023 = vmatpush1.xpose.msra.mxu0 0.0
        %2024 = vmatprep.subr.mxu0 0.0
        %2025 = vmatpush1.xpose.msra.mxu0 0.0
        %2026 = vmatprep.subr.mxu0 0.0
        %2027 = vmatpush1.xpose.msra.mxu0 0.0
        %2028 = vmatprep.subr.mxu0 0.0
        %2029 = vmatpush1.xpose.msra.mxu0 0.0
        %2030 = vmatprep.subr.mxu0 0.0
        %2031 = vmatpush1.xpose.msra.mxu0 0.0
        %2032 = vmatprep.subr.mxu0 0.0
        %2033 = vmatpush1.xpose.msra.mxu0 0.0
        %2034 = vmatprep.subr.mxu0 0.0
        %2035 = vmatpush1.xpose.msra.mxu0 0.0
        %2036 = vmatprep.subr.mxu0 0.0
        %2037 = vmatpush1.xpose.msra.mxu0 0.0
        %2038 = vmatprep.subr.mxu0 0.0
        %2039 = vmatpush1.xpose.msra.mxu0 0.0
        %2040 = vmatprep.subr.mxu0 0.0
        %2041 = vmatpush1.xpose.msra.mxu0 0.0
        %2042 = vmatprep.subr.mxu0 0.0
        %2043 = vmatpush1.xpose.msra.mxu0 0.0
        %2044 = vmatprep.subr.mxu0 0.0
        %2045 = vmatpush1.xpose.msra.mxu0 0.0
        %2046 = vmatprep.subr.mxu0 0.0
        %2047 = vmatpush1.xpose.msra.mxu0 0.0
        %2048 = vmatprep.subr.mxu0 0.0
        %2049 = vmatpush1.xpose.msra.mxu0 0.0
        %2050 = vmatprep.mubr.f32.mxu0 0.0
        %2051 = vmatmul.mubr.f32.gmra.mrb[0].mxu0 %v1981
        %v2052 = vpop.f32.mrb[0].mxu0
        %v2053 = vadd.f32 %v986, %v2052
        %v2054 = vpop.f32.mrb[0].mxu0
        %2055 = vdwg.mxu0
        %v2057 = vsel %vm1903, %v1222, 0
        %v2060 = vsel %vm1903, %v1526, 0
        %2062 = vmatprep.subr.mxu0 0.0
        %2063 = vmatpush1.xpose.msra.mxu0 %v2060
        %2064 = vmatprep.subr.mxu0 0.0
        %2065 = vmatpush1.xpose.msra.mxu0 0.0
        %2066 = vmatprep.subr.mxu0 0.0
        %2067 = vmatpush1.xpose.msra.mxu0 0.0
        %2068 = vmatprep.subr.mxu0 0.0
        %2069 = vmatpush1.xpose.msra.mxu0 0.0
        %2070 = vmatprep.subr.mxu0 0.0
        %2071 = vmatpush1.xpose.msra.mxu0 0.0
        %2072 = vmatprep.subr.mxu0 0.0
        %2073 = vmatpush1.xpose.msra.mxu0 0.0
        %2074 = vmatprep.subr.mxu0 0.0
        %2075 = vmatpush1.xpose.msra.mxu0 0.0
        %2076 = vmatprep.subr.mxu0 0.0
        %2077 = vmatpush1.xpose.msra.mxu0 0.0
        %2078 = vmatprep.subr.mxu0 0.0
        %2079 = vmatpush1.xpose.msra.mxu0 0.0
        %2080 = vmatprep.subr.mxu0 0.0
        %2081 = vmatpush1.xpose.msra.mxu0 0.0
        %2082 = vmatprep.subr.mxu0 0.0
        %2083 = vmatpush1.xpose.msra.mxu0 0.0
        %2084 = vmatprep.subr.mxu0 0.0
        %2085 = vmatpush1.xpose.msra.mxu0 0.0
        %2086 = vmatprep.subr.mxu0 0.0
        %2087 = vmatpush1.xpose.msra.mxu0 0.0
        %2088 = vmatprep.subr.mxu0 0.0
        %2089 = vmatpush1.xpose.msra.mxu0 0.0
        %2090 = vmatprep.subr.mxu0 0.0
        %2091 = vmatpush1.xpose.msra.mxu0 0.0
        %2092 = vmatprep.subr.mxu0 0.0
        %2093 = vmatpush1.xpose.msra.mxu0 0.0
        %2094 = vmatprep.subr.mxu0 0.0
        %2095 = vmatpush1.xpose.msra.mxu0 0.0
        %2096 = vmatprep.subr.mxu0 0.0
        %2097 = vmatpush1.xpose.msra.mxu0 0.0
        %2098 = vmatprep.subr.mxu0 0.0
        %2099 = vmatpush1.xpose.msra.mxu0 0.0
        %2100 = vmatprep.subr.mxu0 0.0
        %2101 = vmatpush1.xpose.msra.mxu0 0.0
        %2102 = vmatprep.subr.mxu0 0.0
        %2103 = vmatpush1.xpose.msra.mxu0 0.0
        %2104 = vmatprep.subr.mxu0 0.0
        %2105 = vmatpush1.xpose.msra.mxu0 0.0
        %2106 = vmatprep.subr.mxu0 0.0
        %2107 = vmatpush1.xpose.msra.mxu0 0.0
        %2108 = vmatprep.subr.mxu0 0.0
        %2109 = vmatpush1.xpose.msra.mxu0 0.0
        %2110 = vmatprep.subr.mxu0 0.0
        %2111 = vmatpush1.xpose.msra.mxu0 0.0
        %2112 = vmatprep.subr.mxu0 0.0
        %2113 = vmatpush1.xpose.msra.mxu0 0.0
        %2114 = vmatprep.subr.mxu0 0.0
        %2115 = vmatpush1.xpose.msra.mxu0 0.0
        %2116 = vmatprep.subr.mxu0 0.0
        %2117 = vmatpush1.xpose.msra.mxu0 0.0
        %2118 = vmatprep.subr.mxu0 0.0
        %2119 = vmatpush1.xpose.msra.mxu0 0.0
        %2120 = vmatprep.subr.mxu0 0.0
        %2121 = vmatpush1.xpose.msra.mxu0 0.0
        %2122 = vmatprep.subr.mxu0 0.0
        %2123 = vmatpush1.xpose.msra.mxu0 0.0
        %2124 = vmatprep.subr.mxu0 0.0
        %2125 = vmatpush1.xpose.msra.mxu0 0.0
        %2126 = vmatprep.mubr.f32.mxu0 0.0
        %2127 = vmatmul.mubr.f32.gmra.mrb[0].mxu0 %v2057
        %v2128 = vpop.f32.mrb[0].mxu0
        %v2129 = vadd.f32 %v986, %v2128
        %v2130 = vpop.f32.mrb[0].mxu0
        %2131 = vdwg.mxu0
        %v2133 = vsel %vm1903, %v1292, 0
        %v2136 = vsel %vm1903, %v1596, 0
        %2138 = vmatprep.subr.mxu0 0.0
        %2139 = vmatpush1.xpose.msra.mxu0 %v2136
        %2140 = vmatprep.subr.mxu0 0.0
        %2141 = vmatpush1.xpose.msra.mxu0 0.0
        %2142 = vmatprep.subr.mxu0 0.0
        %2143 = vmatpush1.xpose.msra.mxu0 0.0
        %2144 = vmatprep.subr.mxu0 0.0
        %2145 = vmatpush1.xpose.msra.mxu0 0.0
        %2146 = vmatprep.subr.mxu0 0.0
        %2147 = vmatpush1.xpose.msra.mxu0 0.0
        %2148 = vmatprep.subr.mxu0 0.0
        %2149 = vmatpush1.xpose.msra.mxu0 0.0
        %2150 = vmatprep.subr.mxu0 0.0
        %2151 = vmatpush1.xpose.msra.mxu0 0.0
        %2152 = vmatprep.subr.mxu0 0.0
        %2153 = vmatpush1.xpose.msra.mxu0 0.0
        %2154 = vmatprep.subr.mxu0 0.0
        %2155 = vmatpush1.xpose.msra.mxu0 0.0
        %2156 = vmatprep.subr.mxu0 0.0
        %2157 = vmatpush1.xpose.msra.mxu0 0.0
        %2158 = vmatprep.subr.mxu0 0.0
        %2159 = vmatpush1.xpose.msra.mxu0 0.0
        %2160 = vmatprep.subr.mxu0 0.0
        %2161 = vmatpush1.xpose.msra.mxu0 0.0
        %2162 = vmatprep.subr.mxu0 0.0
        %2163 = vmatpush1.xpose.msra.mxu0 0.0
        %2164 = vmatprep.subr.mxu0 0.0
        %2165 = vmatpush1.xpose.msra.mxu0 0.0
        %2166 = vmatprep.subr.mxu0 0.0
        %2167 = vmatpush1.xpose.msra.mxu0 0.0
        %2168 = vmatprep.subr.mxu0 0.0
        %2169 = vmatpush1.xpose.msra.mxu0 0.0
        %2170 = vmatprep.subr.mxu0 0.0
        %2171 = vmatpush1.xpose.msra.mxu0 0.0
        %2172 = vmatprep.subr.mxu0 0.0
        %2173 = vmatpush1.xpose.msra.mxu0 0.0
        %2174 = vmatprep.subr.mxu0 0.0
        %2175 = vmatpush1.xpose.msra.mxu0 0.0
        %2176 = vmatprep.subr.mxu0 0.0
        %2177 = vmatpush1.xpose.msra.mxu0 0.0
        %2178 = vmatprep.subr.mxu0 0.0
        %2179 = vmatpush1.xpose.msra.mxu0 0.0
        %2180 = vmatprep.subr.mxu0 0.0
        %2181 = vmatpush1.xpose.msra.mxu0 0.0
        %2182 = vmatprep.subr.mxu0 0.0
        %2183 = vmatpush1.xpose.msra.mxu0 0.0
        %2184 = vmatprep.subr.mxu0 0.0
        %2185 = vmatpush1.xpose.msra.mxu0 0.0
        %2186 = vmatprep.subr.mxu0 0.0
        %2187 = vmatpush1.xpose.msra.mxu0 0.0
        %2188 = vmatprep.subr.mxu0 0.0
        %2189 = vmatpush1.xpose.msra.mxu0 0.0
        %2190 = vmatprep.subr.mxu0 0.0
        %2191 = vmatpush1.xpose.msra.mxu0 0.0
        %2192 = vmatprep.subr.mxu0 0.0
        %2193 = vmatpush1.xpose.msra.mxu0 0.0
        %2194 = vmatprep.subr.mxu0 0.0
        %2195 = vmatpush1.xpose.msra.mxu0 0.0
        %2196 = vmatprep.subr.mxu0 0.0
        %2197 = vmatpush1.xpose.msra.mxu0 0.0
        %2198 = vmatprep.subr.mxu0 0.0
        %2199 = vmatpush1.xpose.msra.mxu0 0.0
        %2200 = vmatprep.subr.mxu0 0.0
        %2201 = vmatpush1.xpose.msra.mxu0 0.0
        %2202 = vmatprep.mubr.f32.mxu0 0.0
        %2203 = vmatmul.mubr.f32.gmra.mrb[0].mxu0 %v2133
        %v2204 = vpop.f32.mrb[0].mxu0
        %v2205 = vadd.f32 %v986, %v2204
        %v2206 = vpop.f32.mrb[0].mxu0
        %2207 = vdwg.mxu0
        %v2208 = vsel %vm1903, %v1977, -inf
        %2209 = vmax.xlane.f32.xlu0 %v2208
        %v2210 = vpop.xlane.xlu0 %2209
        %v2211 = vsel %vm1903, %v2053, -inf
        %2212 = vmax.xlane.f32.xlu0 %v2211
        %v2213 = vpop.xlane.xlu0 %2212
        %v2214 = vsel %vm1903, %v2129, -inf
        %2215 = vmax.xlane.f32.xlu0 %v2214
        %v2216 = vpop.xlane.xlu0 %2215
        %v2217 = vsel %vm1903, %v2205, -inf
        %2218 = vmax.xlane.f32.xlu0 %v2217
        %v2219 = vpop.xlane.xlu0 %2218
        %v2220 = vsub.f32 %v1977, %v2210
        %v2221 = vsub.f32 %v2053, %v2213
        %v2222 = vsub.f32 %v2129, %v2216
        %v2223 = vsub.f32 %v2205, %v2219
        %v2224 = vmul.f32 %v2220, 1.442695
        %v2225 = vpow.pop %v2224
        %v2226 = vmul.f32 %v2221, 1.442695
        %v2227 = vpow.pop %v2226
        %v2228 = vmul.f32 %v2222, 1.442695
        %v2229 = vpow.pop %v2228
        %v2230 = vmul.f32 %v2223, 1.442695
        %v2231 = vpow.pop %v2230
        %v2232 = vsel %vm1903, %v2225, 0.0
        %2233 = vadd.xlane.f32.xlu0 %v2232
        %v2234 = vpop.xlane.xlu0 %2233
        %v2235 = vsel %vm1903, %v2227, 0.0
        %2236 = vadd.xlane.f32.xlu0 %v2235
        %v2237 = vpop.xlane.xlu0 %2236
        %v2238 = vsel %vm1903, %v2229, 0.0
        %2239 = vadd.xlane.f32.xlu0 %v2238
        %v2240 = vpop.xlane.xlu0 %2239
        %v2241 = vsel %vm1903, %v2231, 0.0
        %2242 = vadd.xlane.f32.xlu0 %v2241
        %v2243 = vpop.xlane.xlu0 %2242
        %v2244 = vrcp.pop %v2234
        %v2245 = vrcp.pop %v2237
        %v2246 = vrcp.pop %v2240
        %v2247 = vrcp.pop %v2243
        %v2248 = vmul.f32 %v2225, %v2244
        %v2249 = vmul.f32 %v2227, %v2245
        %v2250 = vmul.f32 %v2229, %v2246
        %v2251 = vmul.f32 %v2231, %v2247
        %v2253 = vsel %vm1903, %v2248, 0
        %2255 = vmatprep.subr.mxu0 0.0
        %2256 = vmatpush1.msra.mxu0 %v1690
        %2257 = vmatprep.subr.mxu0 0.0
        %2258 = vmatpush1.msra.mxu0 0.0
        %2259 = vmatprep.subr.mxu0 0.0
        %2260 = vmatpush1.msra.mxu0 0.0
        %2261 = vmatprep.subr.mxu0 0.0
        %2262 = vmatpush1.msra.mxu0 0.0
        %2263 = vmatprep.subr.mxu0 0.0
        %2264 = vmatpush1.msra.mxu0 0.0
        %2265 = vmatprep.subr.mxu0 0.0
        %2266 = vmatpush1.msra.mxu0 0.0
        %2267 = vmatprep.subr.mxu0 0.0
        %2268 = vmatpush1.msra.mxu0 0.0
        %2269 = vmatprep.subr.mxu0 0.0
        %2270 = vmatpush1.msra.mxu0 0.0
        %2271 = vmatprep.subr.mxu0 0.0
        %2272 = vmatpush1.msra.mxu0 0.0
        %2273 = vmatprep.subr.mxu0 0.0
        %2274 = vmatpush1.msra.mxu0 0.0
        %2275 = vmatprep.subr.mxu0 0.0
        %2276 = vmatpush1.msra.mxu0 0.0
        %2277 = vmatprep.subr.mxu0 0.0
        %2278 = vmatpush1.msra.mxu0 0.0
        %2279 = vmatprep.subr.mxu0 0.0
        %2280 = vmatpush1.msra.mxu0 0.0
        %2281 = vmatprep.subr.mxu0 0.0
        %2282 = vmatpush1.msra.mxu0 0.0
        %2283 = vmatprep.subr.mxu0 0.0
        %2284 = vmatpush1.msra.mxu0 0.0
        %2285 = vmatprep.subr.mxu0 0.0
        %2286 = vmatpush1.msra.mxu0 0.0
        %2287 = vmatprep.subr.mxu0 0.0
        %2288 = vmatpush1.msra.mxu0 0.0
        %2289 = vmatprep.subr.mxu0 0.0
        %2290 = vmatpush1.msra.mxu0 0.0
        %2291 = vmatprep.subr.mxu0 0.0
        %2292 = vmatpush1.msra.mxu0 0.0
        %2293 = vmatprep.subr.mxu0 0.0
        %2294 = vmatpush1.msra.mxu0 0.0
        %2295 = vmatprep.subr.mxu0 0.0
        %2296 = vmatpush1.msra.mxu0 0.0
        %2297 = vmatprep.subr.mxu0 0.0
        %2298 = vmatpush1.msra.mxu0 0.0
        %2299 = vmatprep.subr.mxu0 0.0
        %2300 = vmatpush1.msra.mxu0 0.0
        %2301 = vmatprep.subr.mxu0 0.0
        %2302 = vmatpush1.msra.mxu0 0.0
        %2303 = vmatprep.subr.mxu0 0.0
        %2304 = vmatpush1.msra.mxu0 0.0
        %2305 = vmatprep.subr.mxu0 0.0
        %2306 = vmatpush1.msra.mxu0 0.0
        %2307 = vmatprep.subr.mxu0 0.0
        %2308 = vmatpush1.msra.mxu0 0.0
        %2309 = vmatprep.subr.mxu0 0.0
        %2310 = vmatpush1.msra.mxu0 0.0
        %2311 = vmatprep.subr.mxu0 0.0
        %2312 = vmatpush1.msra.mxu0 0.0
        %2313 = vmatprep.subr.mxu0 0.0
        %2314 = vmatpush1.msra.mxu0 0.0
        %2315 = vmatprep.subr.mxu0 0.0
        %2316 = vmatpush1.msra.mxu0 0.0
        %2317 = vmatprep.subr.mxu0 0.0
        %2318 = vmatpush1.msra.mxu0 0.0
        %2319 = vmatprep.mubr.f32.mxu0 0.0
        %2320 = vmatmul.mubr.f32.gmra.mrb[0].mxu0 %v2253
        %v2321 = vpop.f32.mrb[0].mxu0
        %v2322 = vadd.f32 0.0, %v2321
        %v2323 = vpop.f32.mrb[0].mxu0
        %2324 = vdwg.mxu0
        %v2326 = vsel %vm1903, %v2249, 0
        %2328 = vmatprep.subr.mxu0 0.0
        %2329 = vmatpush1.msra.mxu0 %v1760
        %2330 = vmatprep.subr.mxu0 0.0
        %2331 = vmatpush1.msra.mxu0 0.0
        %2332 = vmatprep.subr.mxu0 0.0
        %2333 = vmatpush1.msra.mxu0 0.0
        %2334 = vmatprep.subr.mxu0 0.0
        %2335 = vmatpush1.msra.mxu0 0.0
        %2336 = vmatprep.subr.mxu0 0.0
        %2337 = vmatpush1.msra.mxu0 0.0
        %2338 = vmatprep.subr.mxu0 0.0
        %2339 = vmatpush1.msra.mxu0 0.0
        %2340 = vmatprep.subr.mxu0 0.0
        %2341 = vmatpush1.msra.mxu0 0.0
        %2342 = vmatprep.subr.mxu0 0.0
        %2343 = vmatpush1.msra.mxu0 0.0
        %2344 = vmatprep.subr.mxu0 0.0
        %2345 = vmatpush1.msra.mxu0 0.0
        %2346 = vmatprep.subr.mxu0 0.0
        %2347 = vmatpush1.msra.mxu0 0.0
        %2348 = vmatprep.subr.mxu0 0.0
        %2349 = vmatpush1.msra.mxu0 0.0
        %2350 = vmatprep.subr.mxu0 0.0
        %2351 = vmatpush1.msra.mxu0 0.0
        %2352 = vmatprep.subr.mxu0 0.0
        %2353 = vmatpush1.msra.mxu0 0.0
        %2354 = vmatprep.subr.mxu0 0.0
        %2355 = vmatpush1.msra.mxu0 0.0
        %2356 = vmatprep.subr.mxu0 0.0
        %2357 = vmatpush1.msra.mxu0 0.0
        %2358 = vmatprep.subr.mxu0 0.0
        %2359 = vmatpush1.msra.mxu0 0.0
        %2360 = vmatprep.subr.mxu0 0.0
        %2361 = vmatpush1.msra.mxu0 0.0
        %2362 = vmatprep.subr.mxu0 0.0
        %2363 = vmatpush1.msra.mxu0 0.0
        %2364 = vmatprep.subr.mxu0 0.0
        %2365 = vmatpush1.msra.mxu0 0.0
        %2366 = vmatprep.subr.mxu0 0.0
        %2367 = vmatpush1.msra.mxu0 0.0
        %2368 = vmatprep.subr.mxu0 0.0
        %2369 = vmatpush1.msra.mxu0 0.0
        %2370 = vmatprep.subr.mxu0 0.0
        %2371 = vmatpush1.msra.mxu0 0.0
        %2372 = vmatprep.subr.mxu0 0.0
        %2373 = vmatpush1.msra.mxu0 0.0
        %2374 = vmatprep.subr.mxu0 0.0
        %2375 = vmatpush1.msra.mxu0 0.0
        %2376 = vmatprep.subr.mxu0 0.0
        %2377 = vmatpush1.msra.mxu0 0.0
        %2378 = vmatprep.subr.mxu0 0.0
        %2379 = vmatpush1.msra.mxu0 0.0
        %2380 = vmatprep.subr.mxu0 0.0
        %2381 = vmatpush1.msra.mxu0 0.0
        %2382 = vmatprep.subr.mxu0 0.0
        %2383 = vmatpush1.msra.mxu0 0.0
        %2384 = vmatprep.subr.mxu0 0.0
        %2385 = vmatpush1.msra.mxu0 0.0
        %2386 = vmatprep.subr.mxu0 0.0
        %2387 = vmatpush1.msra.mxu0 0.0
        %2388 = vmatprep.subr.mxu0 0.0
        %2389 = vmatpush1.msra.mxu0 0.0
        %2390 = vmatprep.subr.mxu0 0.0
        %2391 = vmatpush1.msra.mxu0 0.0
        %2392 = vmatprep.mubr.f32.mxu0 0.0
        %2393 = vmatmul.mubr.f32.gmra.mrb[0].mxu0 %v2326
        %v2394 = vpop.f32.mrb[0].mxu0
        %v2395 = vadd.f32 0.0, %v2394
        %v2396 = vpop.f32.mrb[0].mxu0
        %2397 = vdwg.mxu0
        %v2399 = vsel %vm1903, %v2250, 0
        %2401 = vmatprep.subr.mxu0 0.0
        %2402 = vmatpush1.msra.mxu0 %v1830
        %2403 = vmatprep.subr.mxu0 0.0
        %2404 = vmatpush1.msra.mxu0 0.0
        %2405 = vmatprep.subr.mxu0 0.0
        %2406 = vmatpush1.msra.mxu0 0.0
        %2407 = vmatprep.subr.mxu0 0.0
        %2408 = vmatpush1.msra.mxu0 0.0
        %2409 = vmatprep.subr.mxu0 0.0
        %2410 = vmatpush1.msra.mxu0 0.0
        %2411 = vmatprep.subr.mxu0 0.0
        %2412 = vmatpush1.msra.mxu0 0.0
        %2413 = vmatprep.subr.mxu0 0.0
        %2414 = vmatpush1.msra.mxu0 0.0
        %2415 = vmatprep.subr.mxu0 0.0
        %2416 = vmatpush1.msra.mxu0 0.0
        %2417 = vmatprep.subr.mxu0 0.0
        %2418 = vmatpush1.msra.mxu0 0.0
        %2419 = vmatprep.subr.mxu0 0.0
        %2420 = vmatpush1.msra.mxu0 0.0
        %2421 = vmatprep.subr.mxu0 0.0
        %2422 = vmatpush1.msra.mxu0 0.0
        %2423 = vmatprep.subr.mxu0 0.0
        %2424 = vmatpush1.msra.mxu0 0.0
        %2425 = vmatprep.subr.mxu0 0.0
        %2426 = vmatpush1.msra.mxu0 0.0
        %2427 = vmatprep.subr.mxu0 0.0
        %2428 = vmatpush1.msra.mxu0 0.0
        %2429 = vmatprep.subr.mxu0 0.0
        %2430 = vmatpush1.msra.mxu0 0.0
        %2431 = vmatprep.subr.mxu0 0.0
        %2432 = vmatpush1.msra.mxu0 0.0
        %2433 = vmatprep.subr.mxu0 0.0
        %2434 = vmatpush1.msra.mxu0 0.0
        %2435 = vmatprep.subr.mxu0 0.0
        %2436 = vmatpush1.msra.mxu0 0.0
        %2437 = vmatprep.subr.mxu0 0.0
        %2438 = vmatpush1.msra.mxu0 0.0
        %2439 = vmatprep.subr.mxu0 0.0
        %2440 = vmatpush1.msra.mxu0 0.0
        %2441 = vmatprep.subr.mxu0 0.0
        %2442 = vmatpush1.msra.mxu0 0.0
        %2443 = vmatprep.subr.mxu0 0.0
        %2444 = vmatpush1.msra.mxu0 0.0
        %2445 = vmatprep.subr.mxu0 0.0
        %2446 = vmatpush1.msra.mxu0 0.0
        %2447 = vmatprep.subr.mxu0 0.0
        %2448 = vmatpush1.msra.mxu0 0.0
        %2449 = vmatprep.subr.mxu0 0.0
        %2450 = vmatpush1.msra.mxu0 0.0
        %2451 = vmatprep.subr.mxu0 0.0
        %2452 = vmatpush1.msra.mxu0 0.0
        %2453 = vmatprep.subr.mxu0 0.0
        %2454 = vmatpush1.msra.mxu0 0.0
        %2455 = vmatprep.subr.mxu0 0.0
        %2456 = vmatpush1.msra.mxu0 0.0
        %2457 = vmatprep.subr.mxu0 0.0
        %2458 = vmatpush1.msra.mxu0 0.0
        %2459 = vmatprep.subr.mxu0 0.0
        %2460 = vmatpush1.msra.mxu0 0.0
        %2461 = vmatprep.subr.mxu0 0.0
        %2462 = vmatpush1.msra.mxu0 0.0
        %2463 = vmatprep.subr.mxu0 0.0
        %2464 = vmatpush1.msra.mxu0 0.0
        %2465 = vmatprep.mubr.f32.mxu0 0.0
        %2466 = vmatmul.mubr.f32.gmra.mrb[0].mxu0 %v2399
        %v2467 = vpop.f32.mrb[0].mxu0
        %v2468 = vadd.f32 0.0, %v2467
        %v2469 = vpop.f32.mrb[0].mxu0
        %2470 = vdwg.mxu0
        %v2472 = vsel %vm1903, %v2251, 0
        %2474 = vmatprep.subr.mxu0 0.0
        %2475 = vmatpush1.msra.mxu0 %v1900
        %2476 = vmatprep.subr.mxu0 0.0
        %2477 = vmatpush1.msra.mxu0 0.0
        %2478 = vmatprep.subr.mxu0 0.0
        %2479 = vmatpush1.msra.mxu0 0.0
        %2480 = vmatprep.subr.mxu0 0.0
        %2481 = vmatpush1.msra.mxu0 0.0
        %2482 = vmatprep.subr.mxu0 0.0
        %2483 = vmatpush1.msra.mxu0 0.0
        %2484 = vmatprep.subr.mxu0 0.0
        %2485 = vmatpush1.msra.mxu0 0.0
        %2486 = vmatprep.subr.mxu0 0.0
        %2487 = vmatpush1.msra.mxu0 0.0
        %2488 = vmatprep.subr.mxu0 0.0
        %2489 = vmatpush1.msra.mxu0 0.0
        %2490 = vmatprep.subr.mxu0 0.0
        %2491 = vmatpush1.msra.mxu0 0.0
        %2492 = vmatprep.subr.mxu0 0.0
        %2493 = vmatpush1.msra.mxu0 0.0
        %2494 = vmatprep.subr.mxu0 0.0
        %2495 = vmatpush1.msra.mxu0 0.0
        %2496 = vmatprep.subr.mxu0 0.0
        %2497 = vmatpush1.msra.mxu0 0.0
        %2498 = vmatprep.subr.mxu0 0.0
        %2499 = vmatpush1.msra.mxu0 0.0
        %2500 = vmatprep.subr.mxu0 0.0
        %2501 = vmatpush1.msra.mxu0 0.0
        %2502 = vmatprep.subr.mxu0 0.0
        %2503 = vmatpush1.msra.mxu0 0.0
        %2504 = vmatprep.subr.mxu0 0.0
        %2505 = vmatpush1.msra.mxu0 0.0
        %2506 = vmatprep.subr.mxu0 0.0
        %2507 = vmatpush1.msra.mxu0 0.0
        %2508 = vmatprep.subr.mxu0 0.0
        %2509 = vmatpush1.msra.mxu0 0.0
        %2510 = vmatprep.subr.mxu0 0.0
        %2511 = vmatpush1.msra.mxu0 0.0
        %2512 = vmatprep.subr.mxu0 0.0
        %2513 = vmatpush1.msra.mxu0 0.0
        %2514 = vmatprep.subr.mxu0 0.0
        %2515 = vmatpush1.msra.mxu0 0.0
        %2516 = vmatprep.subr.mxu0 0.0
        %2517 = vmatpush1.msra.mxu0 0.0
        %2518 = vmatprep.subr.mxu0 0.0
        %2519 = vmatpush1.msra.mxu0 0.0
        %2520 = vmatprep.subr.mxu0 0.0
        %2521 = vmatpush1.msra.mxu0 0.0
        %2522 = vmatprep.subr.mxu0 0.0
        %2523 = vmatpush1.msra.mxu0 0.0
        %2524 = vmatprep.subr.mxu0 0.0
        %2525 = vmatpush1.msra.mxu0 0.0
        %2526 = vmatprep.subr.mxu0 0.0
        %2527 = vmatpush1.msra.mxu0 0.0
        %2528 = vmatprep.subr.mxu0 0.0
        %2529 = vmatpush1.msra.mxu0 0.0
        %2530 = vmatprep.subr.mxu0 0.0
        %2531 = vmatpush1.msra.mxu0 0.0
        %2532 = vmatprep.subr.mxu0 0.0
        %2533 = vmatpush1.msra.mxu0 0.0
        %2534 = vmatprep.subr.mxu0 0.0
        %2535 = vmatpush1.msra.mxu0 0.0
        %2536 = vmatprep.subr.mxu0 0.0
        %2537 = vmatpush1.msra.mxu0 0.0
        %2538 = vmatprep.mubr.f32.mxu0 0.0
        %2539 = vmatmul.mubr.f32.gmra.mrb[0].mxu0 %v2472
        %v2540 = vpop.f32.mrb[0].mxu0
        %v2541 = vadd.f32 0.0, %v2540
        %v2542 = vpop.f32.mrb[0].mxu0
        %2543 = vdwg.mxu0
        %v2545 = vsel %vm1903, %v2322, 0
        %2547 = vmatprep.subr.mxu0 0.0
        %2548 = vmatpush1.msra.mxu0 %v961
        %2549 = vmatprep.subr.mxu0 0.0
        %2550 = vmatpush1.msra.mxu0 0.0
        %2551 = vmatprep.subr.mxu0 0.0
        %2552 = vmatpush1.msra.mxu0 0.0
        %2553 = vmatprep.subr.mxu0 0.0
        %2554 = vmatpush1.msra.mxu0 0.0
        %2555 = vmatprep.subr.mxu0 0.0
        %2556 = vmatpush1.msra.mxu0 0.0
        %2557 = vmatprep.subr.mxu0 0.0
        %2558 = vmatpush1.msra.mxu0 0.0
        %2559 = vmatprep.subr.mxu0 0.0
        %2560 = vmatpush1.msra.mxu0 0.0
        %2561 = vmatprep.subr.mxu0 0.0
        %2562 = vmatpush1.msra.mxu0 0.0
        %2563 = vmatprep.subr.mxu0 0.0
        %2564 = vmatpush1.msra.mxu0 0.0
        %2565 = vmatprep.subr.mxu0 0.0
        %2566 = vmatpush1.msra.mxu0 0.0
        %2567 = vmatprep.subr.mxu0 0.0
        %2568 = vmatpush1.msra.mxu0 0.0
        %2569 = vmatprep.subr.mxu0 0.0
        %2570 = vmatpush1.msra.mxu0 0.0
        %2571 = vmatprep.subr.mxu0 0.0
        %2572 = vmatpush1.msra.mxu0 0.0
        %2573 = vmatprep.subr.mxu0 0.0
        %2574 = vmatpush1.msra.mxu0 0.0
        %2575 = vmatprep.subr.mxu0 0.0
        %2576 = vmatpush1.msra.mxu0 0.0
        %2577 = vmatprep.subr.mxu0 0.0
        %2578 = vmatpush1.msra.mxu0 0.0
        %2579 = vmatprep.subr.mxu0 0.0
        %2580 = vmatpush1.msra.mxu0 0.0
        %2581 = vmatprep.subr.mxu0 0.0
        %2582 = vmatpush1.msra.mxu0 0.0
        %2583 = vmatprep.subr.mxu0 0.0
        %2584 = vmatpush1.msra.mxu0 0.0
        %2585 = vmatprep.subr.mxu0 0.0
        %2586 = vmatpush1.msra.mxu0 0.0
        %2587 = vmatprep.subr.mxu0 0.0
        %2588 = vmatpush1.msra.mxu0 0.0
        %2589 = vmatprep.subr.mxu0 0.0
        %2590 = vmatpush1.msra.mxu0 0.0
        %2591 = vmatprep.subr.mxu0 0.0
        %2592 = vmatpush1.msra.mxu0 0.0
        %2593 = vmatprep.subr.mxu0 0.0
        %2594 = vmatpush1.msra.mxu0 0.0
        %2595 = vmatprep.subr.mxu0 0.0
        %2596 = vmatpush1.msra.mxu0 0.0
        %2597 = vmatprep.subr.mxu0 0.0
        %2598 = vmatpush1.msra.mxu0 0.0
        %2599 = vmatprep.subr.mxu0 0.0
        %2600 = vmatpush1.msra.mxu0 0.0
        %2601 = vmatprep.subr.mxu0 0.0
        %2602 = vmatpush1.msra.mxu0 0.0
        %2603 = vmatprep.subr.mxu0 0.0
        %2604 = vmatpush1.msra.mxu0 0.0
        %2605 = vmatprep.subr.mxu0 0.0
        %2606 = vmatpush1.msra.mxu0 0.0
        %2607 = vmatprep.subr.mxu0 0.0
        %2608 = vmatpush1.msra.mxu0 0.0
        %2609 = vmatprep.subr.mxu0 0.0
        %2610 = vmatpush1.msra.mxu0 0.0
        %2611 = vmatprep.mubr.f32.mxu0 0.0
        %2612 = vmatmul.mubr.f32.gmra.mrb[0].mxu0 %v2545
        %v2613 = vpop.f32.mrb[0].mxu0
        %v2614 = vadd.f32 0.0, %v2613
        %v2615 = vpop.f32.mrb[0].mxu0
        %2616 = vdwg.mxu0
        %v2618 = vsel %vm1903, %v2395, 0
        %2620 = vmatprep.subr.mxu0 0.0
        %2621 = vmatpush1.msra.mxu0 %v962
        %2622 = vmatprep.subr.mxu0 0.0
        %2623 = vmatpush1.msra.mxu0 0.0
        %2624 = vmatprep.subr.mxu0 0.0
        %2625 = vmatpush1.msra.mxu0 0.0
        %2626 = vmatprep.subr.mxu0 0.0
        %2627 = vmatpush1.msra.mxu0 0.0
        %2628 = vmatprep.subr.mxu0 0.0
        %2629 = vmatpush1.msra.mxu0 0.0
        %2630 = vmatprep.subr.mxu0 0.0
        %2631 = vmatpush1.msra.mxu0 0.0
        %2632 = vmatprep.subr.mxu0 0.0
        %2633 = vmatpush1.msra.mxu0 0.0
        %2634 = vmatprep.subr.mxu0 0.0
        %2635 = vmatpush1.msra.mxu0 0.0
        %2636 = vmatprep.subr.mxu0 0.0
        %2637 = vmatpush1.msra.mxu0 0.0
        %2638 = vmatprep.subr.mxu0 0.0
        %2639 = vmatpush1.msra.mxu0 0.0
        %2640 = vmatprep.subr.mxu0 0.0
        %2641 = vmatpush1.msra.mxu0 0.0
        %2642 = vmatprep.subr.mxu0 0.0
        %2643 = vmatpush1.msra.mxu0 0.0
        %2644 = vmatprep.subr.mxu0 0.0
        %2645 = vmatpush1.msra.mxu0 0.0
        %2646 = vmatprep.subr.mxu0 0.0
        %2647 = vmatpush1.msra.mxu0 0.0
        %2648 = vmatprep.subr.mxu0 0.0
        %2649 = vmatpush1.msra.mxu0 0.0
        %2650 = vmatprep.subr.mxu0 0.0
        %2651 = vmatpush1.msra.mxu0 0.0
        %2652 = vmatprep.subr.mxu0 0.0
        %2653 = vmatpush1.msra.mxu0 0.0
        %2654 = vmatprep.subr.mxu0 0.0
        %2655 = vmatpush1.msra.mxu0 0.0
        %2656 = vmatprep.subr.mxu0 0.0
        %2657 = vmatpush1.msra.mxu0 0.0
        %2658 = vmatprep.subr.mxu0 0.0
        %2659 = vmatpush1.msra.mxu0 0.0
        %2660 = vmatprep.subr.mxu0 0.0
        %2661 = vmatpush1.msra.mxu0 0.0
        %2662 = vmatprep.subr.mxu0 0.0
        %2663 = vmatpush1.msra.mxu0 0.0
        %2664 = vmatprep.subr.mxu0 0.0
        %2665 = vmatpush1.msra.mxu0 0.0
        %2666 = vmatprep.subr.mxu0 0.0
        %2667 = vmatpush1.msra.mxu0 0.0
        %2668 = vmatprep.subr.mxu0 0.0
        %2669 = vmatpush1.msra.mxu0 0.0
        %2670 = vmatprep.subr.mxu0 0.0
        %2671 = vmatpush1.msra.mxu0 0.0
        %2672 = vmatprep.subr.mxu0 0.0
        %2673 = vmatpush1.msra.mxu0 0.0
        %2674 = vmatprep.subr.mxu0 0.0
        %2675 = vmatpush1.msra.mxu0 0.0
        %2676 = vmatprep.subr.mxu0 0.0
        %2677 = vmatpush1.msra.mxu0 0.0
        %2678 = vmatprep.subr.mxu0 0.0
        %2679 = vmatpush1.msra.mxu0 0.0
        %2680 = vmatprep.subr.mxu0 0.0
        %2681 = vmatpush1.msra.mxu0 0.0
        %2682 = vmatprep.subr.mxu0 0.0
        %2683 = vmatpush1.msra.mxu0 0.0
        %2684 = vmatprep.mubr.f32.mxu0 0.0
        %2685 = vmatmul.mubr.f32.gmra.mrb[0].mxu0 %v2618
        %v2686 = vpop.f32.mrb[0].mxu0
        %v2687 = vadd.f32 0.0, %v2686
        %v2688 = vpop.f32.mrb[0].mxu0
        %2689 = vdwg.mxu0
        %v2691 = vsel %vm1903, %v2468, 0
        %2693 = vmatprep.subr.mxu0 0.0
        %2694 = vmatpush1.msra.mxu0 %v963
        %2695 = vmatprep.subr.mxu0 0.0
        %2696 = vmatpush1.msra.mxu0 0.0
        %2697 = vmatprep.subr.mxu0 0.0
        %2698 = vmatpush1.msra.mxu0 0.0
        %2699 = vmatprep.subr.mxu0 0.0
        %2700 = vmatpush1.msra.mxu0 0.0
        %2701 = vmatprep.subr.mxu0 0.0
        %2702 = vmatpush1.msra.mxu0 0.0
        %2703 = vmatprep.subr.mxu0 0.0
        %2704 = vmatpush1.msra.mxu0 0.0
        %2705 = vmatprep.subr.mxu0 0.0
        %2706 = vmatpush1.msra.mxu0 0.0
        %2707 = vmatprep.subr.mxu0 0.0
        %2708 = vmatpush1.msra.mxu0 0.0
        %2709 = vmatprep.subr.mxu0 0.0
        %2710 = vmatpush1.msra.mxu0 0.0
        %2711 = vmatprep.subr.mxu0 0.0
        %2712 = vmatpush1.msra.mxu0 0.0
        %2713 = vmatprep.subr.mxu0 0.0
        %2714 = vmatpush1.msra.mxu0 0.0
        %2715 = vmatprep.subr.mxu0 0.0
        %2716 = vmatpush1.msra.mxu0 0.0
        %2717 = vmatprep.subr.mxu0 0.0
        %2718 = vmatpush1.msra.mxu0 0.0
        %2719 = vmatprep.subr.mxu0 0.0
        %2720 = vmatpush1.msra.mxu0 0.0
        %2721 = vmatprep.subr.mxu0 0.0
        %2722 = vmatpush1.msra.mxu0 0.0
        %2723 = vmatprep.subr.mxu0 0.0
        %2724 = vmatpush1.msra.mxu0 0.0
        %2725 = vmatprep.subr.mxu0 0.0
        %2726 = vmatpush1.msra.mxu0 0.0
        %2727 = vmatprep.subr.mxu0 0.0
        %2728 = vmatpush1.msra.mxu0 0.0
        %2729 = vmatprep.subr.mxu0 0.0
        %2730 = vmatpush1.msra.mxu0 0.0
        %2731 = vmatprep.subr.mxu0 0.0
        %2732 = vmatpush1.msra.mxu0 0.0
        %2733 = vmatprep.subr.mxu0 0.0
        %2734 = vmatpush1.msra.mxu0 0.0
        %2735 = vmatprep.subr.mxu0 0.0
        %2736 = vmatpush1.msra.mxu0 0.0
        %2737 = vmatprep.subr.mxu0 0.0
        %2738 = vmatpush1.msra.mxu0 0.0
        %2739 = vmatprep.subr.mxu0 0.0
        %2740 = vmatpush1.msra.mxu0 0.0
        %2741 = vmatprep.subr.mxu0 0.0
        %2742 = vmatpush1.msra.mxu0 0.0
        %2743 = vmatprep.subr.mxu0 0.0
        %2744 = vmatpush1.msra.mxu0 0.0
        %2745 = vmatprep.subr.mxu0 0.0
        %2746 = vmatpush1.msra.mxu0 0.0
        %2747 = vmatprep.subr.mxu0 0.0
        %2748 = vmatpush1.msra.mxu0 0.0
        %2749 = vmatprep.subr.mxu0 0.0
        %2750 = vmatpush1.msra.mxu0 0.0
        %2751 = vmatprep.subr.mxu0 0.0
        %2752 = vmatpush1.msra.mxu0 0.0
        %2753 = vmatprep.subr.mxu0 0.0
        %2754 = vmatpush1.msra.mxu0 0.0
        %2755 = vmatprep.subr.mxu0 0.0
        %2756 = vmatpush1.msra.mxu0 0.0
        %2757 = vmatprep.mubr.f32.mxu0 0.0
        %2758 = vmatmul.mubr.f32.gmra.mrb[0].mxu0 %v2691
        %v2759 = vpop.f32.mrb[0].mxu0
        %v2760 = vadd.f32 0.0, %v2759
        %v2761 = vpop.f32.mrb[0].mxu0
        %2762 = vdwg.mxu0
        %v2764 = vsel %vm1903, %v2541, 0
        %2766 = vmatprep.subr.mxu0 0.0
        %2767 = vmatpush1.msra.mxu0 %v964
        %2768 = vmatprep.subr.mxu0 0.0
        %2769 = vmatpush1.msra.mxu0 0.0
        %2770 = vmatprep.subr.mxu0 0.0
        %2771 = vmatpush1.msra.mxu0 0.0
        %2772 = vmatprep.subr.mxu0 0.0
        %2773 = vmatpush1.msra.mxu0 0.0
        %2774 = vmatprep.subr.mxu0 0.0
        %2775 = vmatpush1.msra.mxu0 0.0
        %2776 = vmatprep.subr.mxu0 0.0
        %2777 = vmatpush1.msra.mxu0 0.0
        %2778 = vmatprep.subr.mxu0 0.0
        %2779 = vmatpush1.msra.mxu0 0.0
        %2780 = vmatprep.subr.mxu0 0.0
        %2781 = vmatpush1.msra.mxu0 0.0
        %2782 = vmatprep.subr.mxu0 0.0
        %2783 = vmatpush1.msra.mxu0 0.0
        %2784 = vmatprep.subr.mxu0 0.0
        %2785 = vmatpush1.msra.mxu0 0.0
        %2786 = vmatprep.subr.mxu0 0.0
        %2787 = vmatpush1.msra.mxu0 0.0
        %2788 = vmatprep.subr.mxu0 0.0
        %2789 = vmatpush1.msra.mxu0 0.0
        %2790 = vmatprep.subr.mxu0 0.0
        %2791 = vmatpush1.msra.mxu0 0.0
        %2792 = vmatprep.subr.mxu0 0.0
        %2793 = vmatpush1.msra.mxu0 0.0
        %2794 = vmatprep.subr.mxu0 0.0
        %2795 = vmatpush1.msra.mxu0 0.0
        %2796 = vmatprep.subr.mxu0 0.0
        %2797 = vmatpush1.msra.mxu0 0.0
        %2798 = vmatprep.subr.mxu0 0.0
        %2799 = vmatpush1.msra.mxu0 0.0
        %2800 = vmatprep.subr.mxu0 0.0
        %2801 = vmatpush1.msra.mxu0 0.0
        %2802 = vmatprep.subr.mxu0 0.0
        %2803 = vmatpush1.msra.mxu0 0.0
        %2804 = vmatprep.subr.mxu0 0.0
        %2805 = vmatpush1.msra.mxu0 0.0
        %2806 = vmatprep.subr.mxu0 0.0
        %2807 = vmatpush1.msra.mxu0 0.0
        %2808 = vmatprep.subr.mxu0 0.0
        %2809 = vmatpush1.msra.mxu0 0.0
        %2810 = vmatprep.subr.mxu0 0.0
        %2811 = vmatpush1.msra.mxu0 0.0
        %2812 = vmatprep.subr.mxu0 0.0
        %2813 = vmatpush1.msra.mxu0 0.0
        %2814 = vmatprep.subr.mxu0 0.0
        %2815 = vmatpush1.msra.mxu0 0.0
        %2816 = vmatprep.subr.mxu0 0.0
        %2817 = vmatpush1.msra.mxu0 0.0
        %2818 = vmatprep.subr.mxu0 0.0
        %2819 = vmatpush1.msra.mxu0 0.0
        %2820 = vmatprep.subr.mxu0 0.0
        %2821 = vmatpush1.msra.mxu0 0.0
        %2822 = vmatprep.subr.mxu0 0.0
        %2823 = vmatpush1.msra.mxu0 0.0
        %2824 = vmatprep.subr.mxu0 0.0
        %2825 = vmatpush1.msra.mxu0 0.0
        %2826 = vmatprep.subr.mxu0 0.0
        %2827 = vmatpush1.msra.mxu0 0.0
        %2828 = vmatprep.subr.mxu0 0.0
        %2829 = vmatpush1.msra.mxu0 0.0
        %2830 = vmatprep.mubr.f32.mxu0 0.0
        %2831 = vmatmul.mubr.f32.gmra.mrb[0].mxu0 %v2764
        %v2832 = vpop.f32.mrb[0].mxu0
        %v2833 = vadd.f32 0.0, %v2832
        %v2834 = vpop.f32.mrb[0].mxu0
        %2835 = vdwg.mxu0
        %v2836 = vsel %vm1011, %v2614, 0.0
        %v2837 = vsel %vm1011, %v2687, 0.0
        %v2838 = vadd.f32 %v2836, %v2837
        %v2839 = vsel %vm1011, %v2760, 0.0
        %v2840 = vadd.f32 %v2838, %v2839
        %v2841 = vsel %vm1011, %v2833, 0.0
        %v2842 = vadd.f32 %v2840, %v2841
        %v2844 = vlaneseq
        %v2845 = vshrl.u32 %v2844, 7
        %v2846 = vsub.s32 0, %v2845
        %v2847 = vrot.slane %v965, %v2846
        %v2849 = vadd.f32 %v2842, %v2847
        %v2850 = vadd.f32 %v985, %v2849
        %v2851 = vsel %vm1011, %v2850, 0.0
        %2852 = vadd.xlane.f32.xlu0 %v2851
        %v2853 = vpop.xlane.xlu0 %2852
        %v2854 = vrcp.pop 32.0
        %v2855 = vmul.f32 %v2853, %v2854
        %v2856 = vsub.f32 %v2850, %v2855
        %v2857 = vmul.f32 %v2856, %v2856
        %v2858 = vsel %vm1011, %v2857, 0.0
        %2859 = vadd.xlane.f32.xlu0 %v2858
        %v2860 = vpop.xlane.xlu0 %2859
        %v2861 = vmul.f32 %v2860, %v2854
        %v2862 = vadd.f32 %v2861, 1e-05
        %v2863 = vrsqrt.pop %v2862
        %v2864 = vmul.f32 %v2856, %v2863
        %v2866 = vlaneseq
        %v2867 = vshrl.u32 %v2866, 7
        %v2868 = vsub.s32 0, %v2867
        %v2869 = vrot.slane %v980, %v2868
        %v2871 = vmul.f32 %v2864, %v2869
        %v2873 = vlaneseq
        %v2874 = vshrl.u32 %v2873, 7
        %v2875 = vsub.s32 0, %v2874
        %v2876 = vrot.slane %v981, %v2875
        %v2878 = vadd.f32 %v2871, %v2876
        %v2880 = vlaneseq
        %v2881 = vshrl.u32 %v2880, 7
        %v2882 = vsub.s32 0, %v2881
        %v2883 = vrot.slane %v970, %v2882
        %v2886 = vsel %vm1011, %v2878, 0
        %2888 = vmatprep.subr.mxu0 0.0
        %2889 = vmatpush1.msra.mxu0 %v966
        %2890 = vmatprep.subr.mxu0 0.0
        %2891 = vmatpush1.msra.mxu0 %v967
        %2892 = vmatprep.subr.mxu0 0.0
        %2893 = vmatpush1.msra.mxu0 %v968
        %2894 = vmatprep.subr.mxu0 0.0
        %2895 = vmatpush1.msra.mxu0 %v969
        %2896 = vmatprep.subr.mxu0 0.0
        %2897 = vmatpush1.msra.mxu0 0.0
        %2898 = vmatprep.subr.mxu0 0.0
        %2899 = vmatpush1.msra.mxu0 0.0
        %2900 = vmatprep.subr.mxu0 0.0
        %2901 = vmatpush1.msra.mxu0 0.0
        %2902 = vmatprep.subr.mxu0 0.0
        %2903 = vmatpush1.msra.mxu0 0.0
        %2904 = vmatprep.subr.mxu0 0.0
        %2905 = vmatpush1.msra.mxu0 0.0
        %2906 = vmatprep.subr.mxu0 0.0
        %2907 = vmatpush1.msra.mxu0 0.0
        %2908 = vmatprep.subr.mxu0 0.0
        %2909 = vmatpush1.msra.mxu0 0.0
        %2910 = vmatprep.subr.mxu0 0.0
        %2911 = vmatpush1.msra.mxu0 0.0
        %2912 = vmatprep.subr.mxu0 0.0
        %2913 = vmatpush1.msra.mxu0 0.0
        %2914 = vmatprep.subr.mxu0 0.0
        %2915 = vmatpush1.msra.mxu0 0.0
        %2916 = vmatprep.subr.mxu0 0.0
        %2917 = vmatpush1.msra.mxu0 0.0
        %2918 = vmatprep.subr.mxu0 0.0
        %2919 = vmatpush1.msra.mxu0 0.0
        %2920 = vmatprep.subr.mxu0 0.0
        %2921 = vmatpush1.msra.mxu0 0.0
        %2922 = vmatprep.subr.mxu0 0.0
        %2923 = vmatpush1.msra.mxu0 0.0
        %2924 = vmatprep.subr.mxu0 0.0
        %2925 = vmatpush1.msra.mxu0 0.0
        %2926 = vmatprep.subr.mxu0 0.0
        %2927 = vmatpush1.msra.mxu0 0.0
        %2928 = vmatprep.subr.mxu0 0.0
        %2929 = vmatpush1.msra.mxu0 0.0
        %2930 = vmatprep.subr.mxu0 0.0
        %2931 = vmatpush1.msra.mxu0 0.0
        %2932 = vmatprep.subr.mxu0 0.0
        %2933 = vmatpush1.msra.mxu0 0.0
        %2934 = vmatprep.subr.mxu0 0.0
        %2935 = vmatpush1.msra.mxu0 0.0
        %2936 = vmatprep.subr.mxu0 0.0
        %2937 = vmatpush1.msra.mxu0 0.0
        %2938 = vmatprep.subr.mxu0 0.0
        %2939 = vmatpush1.msra.mxu0 0.0
        %2940 = vmatprep.subr.mxu0 0.0
        %2941 = vmatpush1.msra.mxu0 0.0
        %2942 = vmatprep.subr.mxu0 0.0
        %2943 = vmatpush1.msra.mxu0 0.0
        %2944 = vmatprep.subr.mxu0 0.0
        %2945 = vmatpush1.msra.mxu0 0.0
        %2946 = vmatprep.subr.mxu0 0.0
        %2947 = vmatpush1.msra.mxu0 0.0
        %2948 = vmatprep.subr.mxu0 0.0
        %2949 = vmatpush1.msra.mxu0 0.0
        %2950 = vmatprep.subr.mxu0 0.0
        %2951 = vmatpush1.msra.mxu0 0.0
        %2952 = vmatprep.mubr.f32.mxu0 0.0
        %2953 = vmatmul.mubr.f32.gmra.mrb[0].mxu0 %v2886
        %v2954 = vpop.f32.mrb[0].mxu0
        %v2955 = vadd.f32 %v2883, %v2954
        %v2956 = vpop.f32.mrb[0].mxu0
        %2957 = vdwg.mxu0
        %v2958 = vmax.f32 %v2955, 0.0
        %v2960 = vlaneseq
        %v2961 = vshrl.u32 %v2960, 7
        %v2962 = vsub.s32 0, %v2961
        %v2963 = vrot.slane %v979, %v2962
        %vm2965 = vcmask 523264
        %v2967 = vsel %vm2965, %v2958, 0
        %2969 = vmatprep.subr.mxu0 0.0
        %2970 = vmatpush1.msra.mxu0 %v971
        %2971 = vmatprep.subr.mxu0 0.0
        %2972 = vmatpush1.msra.mxu0 %v972
        %2973 = vmatprep.subr.mxu0 0.0
        %2974 = vmatpush1.msra.mxu0 %v973
        %2975 = vmatprep.subr.mxu0 0.0
        %2976 = vmatpush1.msra.mxu0 %v974
        %2977 = vmatprep.subr.mxu0 0.0
        %2978 = vmatpush1.msra.mxu0 %v975
        %2979 = vmatprep.subr.mxu0 0.0
        %2980 = vmatpush1.msra.mxu0 %v976
        %2981 = vmatprep.subr.mxu0 0.0
        %2982 = vmatpush1.msra.mxu0 %v977
        %2983 = vmatprep.subr.mxu0 0.0
        %2984 = vmatpush1.msra.mxu0 %v978
        %2985 = vmatprep.subr.mxu0 0.0
        %2986 = vmatpush1.msra.mxu0 0.0
        %2987 = vmatprep.subr.mxu0 0.0
        %2988 = vmatpush1.msra.mxu0 0.0
        %2989 = vmatprep.subr.mxu0 0.0
        %2990 = vmatpush1.msra.mxu0 0.0
        %2991 = vmatprep.subr.mxu0 0.0
        %2992 = vmatpush1.msra.mxu0 0.0
        %2993 = vmatprep.subr.mxu0 0.0
        %2994 = vmatpush1.msra.mxu0 0.0
        %2995 = vmatprep.subr.mxu0 0.0
        %2996 = vmatpush1.msra.mxu0 0.0
        %2997 = vmatprep.subr.mxu0 0.0
        %2998 = vmatpush1.msra.mxu0 0.0
        %2999 = vmatprep.subr.mxu0 0.0
        %3000 = vmatpush1.msra.mxu0 0.0
        %3001 = vmatprep.subr.mxu0 0.0
        %3002 = vmatpush1.msra.mxu0 0.0
        %3003 = vmatprep.subr.mxu0 0.0
        %3004 = vmatpush1.msra.mxu0 0.0
        %3005 = vmatprep.subr.mxu0 0.0
        %3006 = vmatpush1.msra.mxu0 0.0
        %3007 = vmatprep.subr.mxu0 0.0
        %3008 = vmatpush1.msra.mxu0 0.0
        %3009 = vmatprep.subr.mxu0 0.0
        %3010 = vmatpush1.msra.mxu0 0.0
        %3011 = vmatprep.subr.mxu0 0.0
        %3012 = vmatpush1.msra.mxu0 0.0
        %3013 = vmatprep.subr.mxu0 0.0
        %3014 = vmatpush1.msra.mxu0 0.0
        %3015 = vmatprep.subr.mxu0 0.0
        %3016 = vmatpush1.msra.mxu0 0.0
        %3017 = vmatprep.subr.mxu0 0.0
        %3018 = vmatpush1.msra.mxu0 0.0
        %3019 = vmatprep.subr.mxu0 0.0
        %3020 = vmatpush1.msra.mxu0 0.0
        %3021 = vmatprep.subr.mxu0 0.0
        %3022 = vmatpush1.msra.mxu0 0.0
        %3023 = vmatprep.subr.mxu0 0.0
        %3024 = vmatpush1.msra.mxu0 0.0
        %3025 = vmatprep.subr.mxu0 0.0
        %3026 = vmatpush1.msra.mxu0 0.0
        %3027 = vmatprep.subr.mxu0 0.0
        %3028 = vmatpush1.msra.mxu0 0.0
        %3029 = vmatprep.subr.mxu0 0.0
        %3030 = vmatpush1.msra.mxu0 0.0
        %3031 = vmatprep.subr.mxu0 0.0
        %3032 = vmatpush1.msra.mxu0 0.0
        %3033 = vmatprep.mubr.f32.mxu0 0.0
        %3034 = vmatmul.mubr.f32.gmra.mrb[0].mxu0 %v2967
        %v3035 = vpop.f32.mrb[0].mxu0
        %v3036 = vadd.f32 %v2963, %v3035
        %v3037 = vpop.f32.mrb[0].mxu0
        %3038 = vdwg.mxu0
        %v3039 = vadd.f32 %v2878, %v3036
        %v3040 = vsel %vm1011, %v3039, 0.0
        %3041 = vadd.xlane.f32.xlu0 %v3040
        %v3042 = vpop.xlane.xlu0 %3041
        %v3043 = vmul.f32 %v3042, %v2854
        %v3044 = vsub.f32 %v3039, %v3043
        %v3045 = vmul.f32 %v3044, %v3044
        %v3046 = vsel %vm1011, %v3045, 0.0
        %3047 = vadd.xlane.f32.xlu0 %v3046
        %v3048 = vpop.xlane.xlu0 %3047
        %v3049 = vmul.f32 %v3048, %v2854
        %v3050 = vadd.f32 %v3049, 1e-05
        %v3051 = vrsqrt.pop %v3050
        %v3052 = vmul.f32 %v3044, %v3051
        %v3054 = vlaneseq
        %v3055 = vshrl.u32 %v3054, 7
        %v3056 = vsub.s32 0, %v3055
        %v3057 = vrot.slane %v982, %v3056
        %v3059 = vmul.f32 %v3052, %v3057
        %v3061 = vlaneseq
        %v3062 = vshrl.u32 %v3061, 7
        %v3063 = vsub.s32 0, %v3062
        %v3064 = vrot.slane %v983, %v3063
        %v3066 = vadd.f32 %v3059, %v3064
        %3067 = vst.msk [vmem:[#allocation2] sm:$0xff] %vm1011, %v3066
        %s3068 = scalar_lea.vmem %s828, 8
        %v3069 = vld [vmem:[%s3068] sm:$0xff]
        %v3070 = vadd.f32 %v3069, %v900
        %s3071 = scalar_lea.vmem %s834, 8
        %v3072 = vld [vmem:[%s3071] sm:$0xff]
        %v3074 = vsel %vm1011, %v3070, 0
        %3076 = vmatprep.subr.mxu0 0.0
        %3077 = vmatpush1.msra.mxu0 %v901
        %3078 = vmatprep.subr.mxu0 0.0
        %3079 = vmatpush1.msra.mxu0 %v902
        %3080 = vmatprep.subr.mxu0 0.0
        %3081 = vmatpush1.msra.mxu0 %v903
        %3082 = vmatprep.subr.mxu0 0.0
        %3083 = vmatpush1.msra.mxu0 %v904
        %3084 = vmatprep.subr.mxu0 0.0
        %3085 = vmatpush1.msra.mxu0 0.0
        %3086 = vmatprep.subr.mxu0 0.0
        %3087 = vmatpush1.msra.mxu0 0.0
        %3088 = vmatprep.subr.mxu0 0.0
        %3089 = vmatpush1.msra.mxu0 0.0
        %3090 = vmatprep.subr.mxu0 0.0
        %3091 = vmatpush1.msra.mxu0 0.0
        %3092 = vmatprep.subr.mxu0 0.0
        %3093 = vmatpush1.msra.mxu0 0.0
        %3094 = vmatprep.subr.mxu0 0.0
        %3095 = vmatpush1.msra.mxu0 0.0
        %3096 = vmatprep.subr.mxu0 0.0
        %3097 = vmatpush1.msra.mxu0 0.0
        %3098 = vmatprep.subr.mxu0 0.0
        %3099 = vmatpush1.msra.mxu0 0.0
        %3100 = vmatprep.subr.mxu0 0.0
        %3101 = vmatpush1.msra.mxu0 0.0
        %3102 = vmatprep.subr.mxu0 0.0
        %3103 = vmatpush1.msra.mxu0 0.0
        %3104 = vmatprep.subr.mxu0 0.0
        %3105 = vmatpush1.msra.mxu0 0.0
        %3106 = vmatprep.subr.mxu0 0.0
        %3107 = vmatpush1.msra.mxu0 0.0
        %3108 = vmatprep.subr.mxu0 0.0
        %3109 = vmatpush1.msra.mxu0 0.0
        %3110 = vmatprep.subr.mxu0 0.0
        %3111 = vmatpush1.msra.mxu0 0.0
        %3112 = vmatprep.subr.mxu0 0.0
        %3113 = vmatpush1.msra.mxu0 0.0
        %3114 = vmatprep.subr.mxu0 0.0
        %3115 = vmatpush1.msra.mxu0 0.0
        %3116 = vmatprep.subr.mxu0 0.0
        %3117 = vmatpush1.msra.mxu0 0.0
        %3118 = vmatprep.subr.mxu0 0.0
        %3119 = vmatpush1.msra.mxu0 0.0
        %3120 = vmatprep.subr.mxu0 0.0
        %3121 = vmatpush1.msra.mxu0 0.0
        %3122 = vmatprep.subr.mxu0 0.0
        %3123 = vmatpush1.msra.mxu0 0.0
        %3124 = vmatprep.subr.mxu0 0.0
        %3125 = vmatpush1.msra.mxu0 0.0
        %3126 = vmatprep.subr.mxu0 0.0
        %3127 = vmatpush1.msra.mxu0 0.0
        %3128 = vmatprep.subr.mxu0 0.0
        %3129 = vmatpush1.msra.mxu0 0.0
        %3130 = vmatprep.subr.mxu0 0.0
        %3131 = vmatpush1.msra.mxu0 0.0
        %3132 = vmatprep.subr.mxu0 0.0
        %3133 = vmatpush1.msra.mxu0 0.0
        %3134 = vmatprep.subr.mxu0 0.0
        %3135 = vmatpush1.msra.mxu0 0.0
        %3136 = vmatprep.subr.mxu0 0.0
        %3137 = vmatpush1.msra.mxu0 0.0
        %3138 = vmatprep.subr.mxu0 0.0
        %3139 = vmatpush1.msra.mxu0 0.0
        %3140 = vmatprep.mubr.f32.mxu0 0.0
        %3141 = vmatmul.mubr.f32.gmra.mrb[0].mxu0 %v3074
        %v3142 = vpop.f32.mrb[0].mxu0
        %v3143 = vadd.f32 %v994, %v3142
        %v3144 = vpop.f32.mrb[0].mxu0
        %3145 = vdwg.mxu0
        %3146 = vmatprep.subr.mxu0 0.0
        %3147 = vmatpush1.msra.mxu0 %v905
        %3148 = vmatprep.subr.mxu0 0.0
        %3149 = vmatpush1.msra.mxu0 %v906
        %3150 = vmatprep.subr.mxu0 0.0
        %3151 = vmatpush1.msra.mxu0 %v907
        %3152 = vmatprep.subr.mxu0 0.0
        %3153 = vmatpush1.msra.mxu0 %v908
        %3154 = vmatprep.subr.mxu0 0.0
        %3155 = vmatpush1.msra.mxu0 0.0
        %3156 = vmatprep.subr.mxu0 0.0
        %3157 = vmatpush1.msra.mxu0 0.0
        %3158 = vmatprep.subr.mxu0 0.0
        %3159 = vmatpush1.msra.mxu0 0.0
        %3160 = vmatprep.subr.mxu0 0.0
        %3161 = vmatpush1.msra.mxu0 0.0
        %3162 = vmatprep.subr.mxu0 0.0
        %3163 = vmatpush1.msra.mxu0 0.0
        %3164 = vmatprep.subr.mxu0 0.0
        %3165 = vmatpush1.msra.mxu0 0.0
        %3166 = vmatprep.subr.mxu0 0.0
        %3167 = vmatpush1.msra.mxu0 0.0
        %3168 = vmatprep.subr.mxu0 0.0
        %3169 = vmatpush1.msra.mxu0 0.0
        %3170 = vmatprep.subr.mxu0 0.0
        %3171 = vmatpush1.msra.mxu0 0.0
        %3172 = vmatprep.subr.mxu0 0.0
        %3173 = vmatpush1.msra.mxu0 0.0
        %3174 = vmatprep.subr.mxu0 0.0
        %3175 = vmatpush1.msra.mxu0 0.0
        %3176 = vmatprep.subr.mxu0 0.0
        %3177 = vmatpush1.msra.mxu0 0.0
        %3178 = vmatprep.subr.mxu0 0.0
        %3179 = vmatpush1.msra.mxu0 0.0
        %3180 = vmatprep.subr.mxu0 0.0
        %3181 = vmatpush1.msra.mxu0 0.0
        %3182 = vmatprep.subr.mxu0 0.0
        %3183 = vmatpush1.msra.mxu0 0.0
        %3184 = vmatprep.subr.mxu0 0.0
        %3185 = vmatpush1.msra.mxu0 0.0
        %3186 = vmatprep.subr.mxu0 0.0
        %3187 = vmatpush1.msra.mxu0 0.0
        %3188 = vmatprep.subr.mxu0 0.0
        %3189 = vmatpush1.msra.mxu0 0.0
        %3190 = vmatprep.subr.mxu0 0.0
        %3191 = vmatpush1.msra.mxu0 0.0
        %3192 = vmatprep.subr.mxu0 0.0
        %3193 = vmatpush1.msra.mxu0 0.0
        %3194 = vmatprep.subr.mxu0 0.0
        %3195 = vmatpush1.msra.mxu0 0.0
        %3196 = vmatprep.subr.mxu0 0.0
        %3197 = vmatpush1.msra.mxu0 0.0
        %3198 = vmatprep.subr.mxu0 0.0
        %3199 = vmatpush1.msra.mxu0 0.0
        %3200 = vmatprep.subr.mxu0 0.0
        %3201 = vmatpush1.msra.mxu0 0.0
        %3202 = vmatprep.subr.mxu0 0.0
        %3203 = vmatpush1.msra.mxu0 0.0
        %3204 = vmatprep.subr.mxu0 0.0
        %3205 = vmatpush1.msra.mxu0 0.0
        %3206 = vmatprep.subr.mxu0 0.0
        %3207 = vmatpush1.msra.mxu0 0.0
        %3208 = vmatprep.subr.mxu0 0.0
        %3209 = vmatpush1.msra.mxu0 0.0
        %3210 = vmatprep.mubr.f32.mxu0 0.0
        %3211 = vmatmul.mubr.f32.gmra.mrb[0].mxu0 %v3074
        %v3212 = vpop.f32.mrb[0].mxu0
        %v3213 = vadd.f32 %v998, %v3212
        %v3214 = vpop.f32.mrb[0].mxu0
        %3215 = vdwg.mxu0
        %3216 = vmatprep.subr.mxu0 0.0
        %3217 = vmatpush1.msra.mxu0 %v909
        %3218 = vmatprep.subr.mxu0 0.0
        %3219 = vmatpush1.msra.mxu0 %v910
        %3220 = vmatprep.subr.mxu0 0.0
        %3221 = vmatpush1.msra.mxu0 %v911
        %3222 = vmatprep.subr.mxu0 0.0
        %3223 = vmatpush1.msra.mxu0 %v912
        %3224 = vmatprep.subr.mxu0 0.0
        %3225 = vmatpush1.msra.mxu0 0.0
        %3226 = vmatprep.subr.mxu0 0.0
        %3227 = vmatpush1.msra.mxu0 0.0
        %3228 = vmatprep.subr.mxu0 0.0
        %3229 = vmatpush1.msra.mxu0 0.0
        %3230 = vmatprep.subr.mxu0 0.0
        %3231 = vmatpush1.msra.mxu0 0.0
        %3232 = vmatprep.subr.mxu0 0.0
        %3233 = vmatpush1.msra.mxu0 0.0
        %3234 = vmatprep.subr.mxu0 0.0
        %3235 = vmatpush1.msra.mxu0 0.0
        %3236 = vmatprep.subr.mxu0 0.0
        %3237 = vmatpush1.msra.mxu0 0.0
        %3238 = vmatprep.subr.mxu0 0.0
        %3239 = vmatpush1.msra.mxu0 0.0
        %3240 = vmatprep.subr.mxu0 0.0
        %3241 = vmatpush1.msra.mxu0 0.0
        %3242 = vmatprep.subr.mxu0 0.0
        %3243 = vmatpush1.msra.mxu0 0.0
        %3244 = vmatprep.subr.mxu0 0.0
        %3245 = vmatpush1.msra.mxu0 0.0
        %3246 = vmatprep.subr.mxu0 0.0
        %3247 = vmatpush1.msra.mxu0 0.0
        %3248 = vmatprep.subr.mxu0 0.0
        %3249 = vmatpush1.msra.mxu0 0.0
        %3250 = vmatprep.subr.mxu0 0.0
        %3251 = vmatpush1.msra.mxu0 0.0
        %3252 = vmatprep.subr.mxu0 0.0
        %3253 = vmatpush1.msra.mxu0 0.0
        %3254 = vmatprep.subr.mxu0 0.0
        %3255 = vmatpush1.msra.mxu0 0.0
        %3256 = vmatprep.subr.mxu0 0.0
        %3257 = vmatpush1.msra.mxu0 0.0
        %3258 = vmatprep.subr.mxu0 0.0
        %3259 = vmatpush1.msra.mxu0 0.0
        %3260 = vmatprep.subr.mxu0 0.0
        %3261 = vmatpush1.msra.mxu0 0.0
        %3262 = vmatprep.subr.mxu0 0.0
        %3263 = vmatpush1.msra.mxu0 0.0
        %3264 = vmatprep.subr.mxu0 0.0
        %3265 = vmatpush1.msra.mxu0 0.0
        %3266 = vmatprep.subr.mxu0 0.0
        %3267 = vmatpush1.msra.mxu0 0.0
        %3268 = vmatprep.subr.mxu0 0.0
        %3269 = vmatpush1.msra.mxu0 0.0
        %3270 = vmatprep.subr.mxu0 0.0
        %3271 = vmatpush1.msra.mxu0 0.0
        %3272 = vmatprep.subr.mxu0 0.0
        %3273 = vmatpush1.msra.mxu0 0.0
        %3274 = vmatprep.subr.mxu0 0.0
        %3275 = vmatpush1.msra.mxu0 0.0
        %3276 = vmatprep.subr.mxu0 0.0
        %3277 = vmatpush1.msra.mxu0 0.0
        %3278 = vmatprep.subr.mxu0 0.0
        %3279 = vmatpush1.msra.mxu0 0.0
        %3280 = vmatprep.mubr.f32.mxu0 0.0
        %3281 = vmatmul.mubr.f32.gmra.mrb[0].mxu0 %v3074
        %v3282 = vpop.f32.mrb[0].mxu0
        %v3283 = vadd.f32 %v1002, %v3282
        %v3284 = vpop.f32.mrb[0].mxu0
        %3285 = vdwg.mxu0
        %3286 = vmatprep.subr.mxu0 0.0
        %3287 = vmatpush1.msra.mxu0 %v913
        %3288 = vmatprep.subr.mxu0 0.0
        %3289 = vmatpush1.msra.mxu0 %v914
        %3290 = vmatprep.subr.mxu0 0.0
        %3291 = vmatpush1.msra.mxu0 %v915
        %3292 = vmatprep.subr.mxu0 0.0
        %3293 = vmatpush1.msra.mxu0 %v916
        %3294 = vmatprep.subr.mxu0 0.0
        %3295 = vmatpush1.msra.mxu0 0.0
        %3296 = vmatprep.subr.mxu0 0.0
        %3297 = vmatpush1.msra.mxu0 0.0
        %3298 = vmatprep.subr.mxu0 0.0
        %3299 = vmatpush1.msra.mxu0 0.0
        %3300 = vmatprep.subr.mxu0 0.0
        %3301 = vmatpush1.msra.mxu0 0.0
        %3302 = vmatprep.subr.mxu0 0.0
        %3303 = vmatpush1.msra.mxu0 0.0
        %3304 = vmatprep.subr.mxu0 0.0
        %3305 = vmatpush1.msra.mxu0 0.0
        %3306 = vmatprep.subr.mxu0 0.0
        %3307 = vmatpush1.msra.mxu0 0.0
        %3308 = vmatprep.subr.mxu0 0.0
        %3309 = vmatpush1.msra.mxu0 0.0
        %3310 = vmatprep.subr.mxu0 0.0
        %3311 = vmatpush1.msra.mxu0 0.0
        %3312 = vmatprep.subr.mxu0 0.0
        %3313 = vmatpush1.msra.mxu0 0.0
        %3314 = vmatprep.subr.mxu0 0.0
        %3315 = vmatpush1.msra.mxu0 0.0
        %3316 = vmatprep.subr.mxu0 0.0
        %3317 = vmatpush1.msra.mxu0 0.0
        %3318 = vmatprep.subr.mxu0 0.0
        %3319 = vmatpush1.msra.mxu0 0.0
        %3320 = vmatprep.subr.mxu0 0.0
        %3321 = vmatpush1.msra.mxu0 0.0
        %3322 = vmatprep.subr.mxu0 0.0
        %3323 = vmatpush1.msra.mxu0 0.0
        %3324 = vmatprep.subr.mxu0 0.0
        %3325 = vmatpush1.msra.mxu0 0.0
        %3326 = vmatprep.subr.mxu0 0.0
        %3327 = vmatpush1.msra.mxu0 0.0
        %3328 = vmatprep.subr.mxu0 0.0
        %3329 = vmatpush1.msra.mxu0 0.0
        %3330 = vmatprep.subr.mxu0 0.0
        %3331 = vmatpush1.msra.mxu0 0.0
        %3332 = vmatprep.subr.mxu0 0.0
        %3333 = vmatpush1.msra.mxu0 0.0
        %3334 = vmatprep.subr.mxu0 0.0
        %3335 = vmatpush1.msra.mxu0 0.0
        %3336 = vmatprep.subr.mxu0 0.0
        %3337 = vmatpush1.msra.mxu0 0.0
        %3338 = vmatprep.subr.mxu0 0.0
        %3339 = vmatpush1.msra.mxu0 0.0
        %3340 = vmatprep.subr.mxu0 0.0
        %3341 = vmatpush1.msra.mxu0 0.0
        %3342 = vmatprep.subr.mxu0 0.0
        %3343 = vmatpush1.msra.mxu0 0.0
        %3344 = vmatprep.subr.mxu0 0.0
        %3345 = vmatpush1.msra.mxu0 0.0
        %3346 = vmatprep.subr.mxu0 0.0
        %3347 = vmatpush1.msra.mxu0 0.0
        %3348 = vmatprep.subr.mxu0 0.0
        %3349 = vmatpush1.msra.mxu0 0.0
        %3350 = vmatprep.mubr.f32.mxu0 0.0
        %3351 = vmatmul.mubr.f32.gmra.mrb[0].mxu0 %v3074
        %v3352 = vpop.f32.mrb[0].mxu0
        %v3353 = vadd.f32 %v1006, %v3352
        %v3354 = vpop.f32.mrb[0].mxu0
        %3355 = vdwg.mxu0
        %3356 = vmatprep.subr.mxu0 0.0
        %3357 = vmatpush1.msra.mxu0 %v921
        %3358 = vmatprep.subr.mxu0 0.0
        %3359 = vmatpush1.msra.mxu0 %v922
        %3360 = vmatprep.subr.mxu0 0.0
        %3361 = vmatpush1.msra.mxu0 %v923
        %3362 = vmatprep.subr.mxu0 0.0
        %3363 = vmatpush1.msra.mxu0 %v924
        %3364 = vmatprep.subr.mxu0 0.0
        %3365 = vmatpush1.msra.mxu0 0.0
        %3366 = vmatprep.subr.mxu0 0.0
        %3367 = vmatpush1.msra.mxu0 0.0
        %3368 = vmatprep.subr.mxu0 0.0
        %3369 = vmatpush1.msra.mxu0 0.0
        %3370 = vmatprep.subr.mxu0 0.0
        %3371 = vmatpush1.msra.mxu0 0.0
        %3372 = vmatprep.subr.mxu0 0.0
        %3373 = vmatpush1.msra.mxu0 0.0
        %3374 = vmatprep.subr.mxu0 0.0
        %3375 = vmatpush1.msra.mxu0 0.0
        %3376 = vmatprep.subr.mxu0 0.0
        %3377 = vmatpush1.msra.mxu0 0.0
        %3378 = vmatprep.subr.mxu0 0.0
        %3379 = vmatpush1.msra.mxu0 0.0
        %3380 = vmatprep.subr.mxu0 0.0
        %3381 = vmatpush1.msra.mxu0 0.0
        %3382 = vmatprep.subr.mxu0 0.0
        %3383 = vmatpush1.msra.mxu0 0.0
        %3384 = vmatprep.subr.mxu0 0.0
        %3385 = vmatpush1.msra.mxu0 0.0
        %3386 = vmatprep.subr.mxu0 0.0
        %3387 = vmatpush1.msra.mxu0 0.0
        %3388 = vmatprep.subr.mxu0 0.0
        %3389 = vmatpush1.msra.mxu0 0.0
        %3390 = vmatprep.subr.mxu0 0.0
        %3391 = vmatpush1.msra.mxu0 0.0
        %3392 = vmatprep.subr.mxu0 0.0
        %3393 = vmatpush1.msra.mxu0 0.0
        %3394 = vmatprep.subr.mxu0 0.0
        %3395 = vmatpush1.msra.mxu0 0.0
        %3396 = vmatprep.subr.mxu0 0.0
        %3397 = vmatpush1.msra.mxu0 0.0
        %3398 = vmatprep.subr.mxu0 0.0
        %3399 = vmatpush1.msra.mxu0 0.0
        %3400 = vmatprep.subr.mxu0 0.0
        %3401 = vmatpush1.msra.mxu0 0.0
        %3402 = vmatprep.subr.mxu0 0.0
        %3403 = vmatpush1.msra.mxu0 0.0
        %3404 = vmatprep.subr.mxu0 0.0
        %3405 = vmatpush1.msra.mxu0 0.0
        %3406 = vmatprep.subr.mxu0 0.0
        %3407 = vmatpush1.msra.mxu0 0.0
        %3408 = vmatprep.subr.mxu0 0.0
        %3409 = vmatpush1.msra.mxu0 0.0
        %3410 = vmatprep.subr.mxu0 0.0
        %3411 = vmatpush1.msra.mxu0 0.0
        %3412 = vmatprep.subr.mxu0 0.0
        %3413 = vmatpush1.msra.mxu0 0.0
        %3414 = vmatprep.subr.mxu0 0.0
        %3415 = vmatpush1.msra.mxu0 0.0
        %3416 = vmatprep.subr.mxu0 0.0
        %3417 = vmatpush1.msra.mxu0 0.0
        %3418 = vmatprep.subr.mxu0 0.0
        %3419 = vmatpush1.msra.mxu0 0.0
        %3420 = vmatprep.mubr.f32.mxu0 0.0
        %3421 = vmatmul.mubr.f32.gmra.mrb[0].mxu0 %v3074
        %v3422 = vpop.f32.mrb[0].mxu0
        %v3423 = vadd.f32 %v1302, %v3422
        %v3424 = vpop.f32.mrb[0].mxu0
        %3425 = vdwg.mxu0
        %3426 = vmatprep.subr.mxu0 0.0
        %3427 = vmatpush1.msra.mxu0 %v925
        %3428 = vmatprep.subr.mxu0 0.0
        %3429 = vmatpush1.msra.mxu0 %v926
        %3430 = vmatprep.subr.mxu0 0.0
        %3431 = vmatpush1.msra.mxu0 %v927
        %3432 = vmatprep.subr.mxu0 0.0
        %3433 = vmatpush1.msra.mxu0 %v928
        %3434 = vmatprep.subr.mxu0 0.0
        %3435 = vmatpush1.msra.mxu0 0.0
        %3436 = vmatprep.subr.mxu0 0.0
        %3437 = vmatpush1.msra.mxu0 0.0
        %3438 = vmatprep.subr.mxu0 0.0
        %3439 = vmatpush1.msra.mxu0 0.0
        %3440 = vmatprep.subr.mxu0 0.0
        %3441 = vmatpush1.msra.mxu0 0.0
        %3442 = vmatprep.subr.mxu0 0.0
        %3443 = vmatpush1.msra.mxu0 0.0
        %3444 = vmatprep.subr.mxu0 0.0
        %3445 = vmatpush1.msra.mxu0 0.0
        %3446 = vmatprep.subr.mxu0 0.0
        %3447 = vmatpush1.msra.mxu0 0.0
        %3448 = vmatprep.subr.mxu0 0.0
        %3449 = vmatpush1.msra.mxu0 0.0
        %3450 = vmatprep.subr.mxu0 0.0
        %3451 = vmatpush1.msra.mxu0 0.0
        %3452 = vmatprep.subr.mxu0 0.0
        %3453 = vmatpush1.msra.mxu0 0.0
        %3454 = vmatprep.subr.mxu0 0.0
        %3455 = vmatpush1.msra.mxu0 0.0
        %3456 = vmatprep.subr.mxu0 0.0
        %3457 = vmatpush1.msra.mxu0 0.0
        %3458 = vmatprep.subr.mxu0 0.0
        %3459 = vmatpush1.msra.mxu0 0.0
        %3460 = vmatprep.subr.mxu0 0.0
        %3461 = vmatpush1.msra.mxu0 0.0
        %3462 = vmatprep.subr.mxu0 0.0
        %3463 = vmatpush1.msra.mxu0 0.0
        %3464 = vmatprep.subr.mxu0 0.0
        %3465 = vmatpush1.msra.mxu0 0.0
        %3466 = vmatprep.subr.mxu0 0.0
        %3467 = vmatpush1.msra.mxu0 0.0
        %3468 = vmatprep.subr.mxu0 0.0
        %3469 = vmatpush1.msra.mxu0 0.0
        %3470 = vmatprep.subr.mxu0 0.0
        %3471 = vmatpush1.msra.mxu0 0.0
        %3472 = vmatprep.subr.mxu0 0.0
        %3473 = vmatpush1.msra.mxu0 0.0
        %3474 = vmatprep.subr.mxu0 0.0
        %3475 = vmatpush1.msra.mxu0 0.0
        %3476 = vmatprep.subr.mxu0 0.0
        %3477 = vmatpush1.msra.mxu0 0.0
        %3478 = vmatprep.subr.mxu0 0.0
        %3479 = vmatpush1.msra.mxu0 0.0
        %3480 = vmatprep.subr.mxu0 0.0
        %3481 = vmatpush1.msra.mxu0 0.0
        %3482 = vmatprep.subr.mxu0 0.0
        %3483 = vmatpush1.msra.mxu0 0.0
        %3484 = vmatprep.subr.mxu0 0.0
        %3485 = vmatpush1.msra.mxu0 0.0
        %3486 = vmatprep.subr.mxu0 0.0
        %3487 = vmatpush1.msra.mxu0 0.0
        %3488 = vmatprep.subr.mxu0 0.0
        %3489 = vmatpush1.msra.mxu0 0.0
        %3490 = vmatprep.mubr.f32.mxu0 0.0
        %3491 = vmatmul.mubr.f32.gmra.mrb[0].mxu0 %v3074
        %v3492 = vpop.f32.mrb[0].mxu0
        %v3493 = vadd.f32 %v1306, %v3492
        %v3494 = vpop.f32.mrb[0].mxu0
        %3495 = vdwg.mxu0
        %3496 = vmatprep.subr.mxu0 0.0
        %3497 = vmatpush1.msra.mxu0 %v929
        %3498 = vmatprep.subr.mxu0 0.0
        %3499 = vmatpush1.msra.mxu0 %v930
        %3500 = vmatprep.subr.mxu0 0.0
        %3501 = vmatpush1.msra.mxu0 %v931
        %3502 = vmatprep.subr.mxu0 0.0
        %3503 = vmatpush1.msra.mxu0 %v932
        %3504 = vmatprep.subr.mxu0 0.0
        %3505 = vmatpush1.msra.mxu0 0.0
        %3506 = vmatprep.subr.mxu0 0.0
        %3507 = vmatpush1.msra.mxu0 0.0
        %3508 = vmatprep.subr.mxu0 0.0
        %3509 = vmatpush1.msra.mxu0 0.0
        %3510 = vmatprep.subr.mxu0 0.0
        %3511 = vmatpush1.msra.mxu0 0.0
        %3512 = vmatprep.subr.mxu0 0.0
        %3513 = vmatpush1.msra.mxu0 0.0
        %3514 = vmatprep.subr.mxu0 0.0
        %3515 = vmatpush1.msra.mxu0 0.0
        %3516 = vmatprep.subr.mxu0 0.0
        %3517 = vmatpush1.msra.mxu0 0.0
        %3518 = vmatprep.subr.mxu0 0.0
        %3519 = vmatpush1.msra.mxu0 0.0
        %3520 = vmatprep.subr.mxu0 0.0
        %3521 = vmatpush1.msra.mxu0 0.0
        %3522 = vmatprep.subr.mxu0 0.0
        %3523 = vmatpush1.msra.mxu0 0.0
        %3524 = vmatprep.subr.mxu0 0.0
        %3525 = vmatpush1.msra.mxu0 0.0
        %3526 = vmatprep.subr.mxu0 0.0
        %3527 = vmatpush1.msra.mxu0 0.0
        %3528 = vmatprep.subr.mxu0 0.0
        %3529 = vmatpush1.msra.mxu0 0.0
        %3530 = vmatprep.subr.mxu0 0.0
        %3531 = vmatpush1.msra.mxu0 0.0
        %3532 = vmatprep.subr.mxu0 0.0
        %3533 = vmatpush1.msra.mxu0 0.0
        %3534 = vmatprep.subr.mxu0 0.0
        %3535 = vmatpush1.msra.mxu0 0.0
        %3536 = vmatprep.subr.mxu0 0.0
        %3537 = vmatpush1.msra.mxu0 0.0
        %3538 = vmatprep.subr.mxu0 0.0
        %3539 = vmatpush1.msra.mxu0 0.0
        %3540 = vmatprep.subr.mxu0 0.0
        %3541 = vmatpush1.msra.mxu0 0.0
        %3542 = vmatprep.subr.mxu0 0.0
        %3543 = vmatpush1.msra.mxu0 0.0
        %3544 = vmatprep.subr.mxu0 0.0
        %3545 = vmatpush1.msra.mxu0 0.0
        %3546 = vmatprep.subr.mxu0 0.0
        %3547 = vmatpush1.msra.mxu0 0.0
        %3548 = vmatprep.subr.mxu0 0.0
        %3549 = vmatpush1.msra.mxu0 0.0
        %3550 = vmatprep.subr.mxu0 0.0
        %3551 = vmatpush1.msra.mxu0 0.0
        %3552 = vmatprep.subr.mxu0 0.0
        %3553 = vmatpush1.msra.mxu0 0.0
        %3554 = vmatprep.subr.mxu0 0.0
        %3555 = vmatpush1.msra.mxu0 0.0
        %3556 = vmatprep.subr.mxu0 0.0
        %3557 = vmatpush1.msra.mxu0 0.0
        %3558 = vmatprep.subr.mxu0 0.0
        %3559 = vmatpush1.msra.mxu0 0.0
        %3560 = vmatprep.mubr.f32.mxu0 0.0
        %3561 = vmatmul.mubr.f32.gmra.mrb[0].mxu0 %v3074
        %v3562 = vpop.f32.mrb[0].mxu0
        %v3563 = vadd.f32 %v1310, %v3562
        %v3564 = vpop.f32.mrb[0].mxu0
        %3565 = vdwg.mxu0
        %3566 = vmatprep.subr.mxu0 0.0
        %3567 = vmatpush1.msra.mxu0 %v933
        %3568 = vmatprep.subr.mxu0 0.0
        %3569 = vmatpush1.msra.mxu0 %v934
        %3570 = vmatprep.subr.mxu0 0.0
        %3571 = vmatpush1.msra.mxu0 %v935
        %3572 = vmatprep.subr.mxu0 0.0
        %3573 = vmatpush1.msra.mxu0 %v936
        %3574 = vmatprep.subr.mxu0 0.0
        %3575 = vmatpush1.msra.mxu0 0.0
        %3576 = vmatprep.subr.mxu0 0.0
        %3577 = vmatpush1.msra.mxu0 0.0
        %3578 = vmatprep.subr.mxu0 0.0
        %3579 = vmatpush1.msra.mxu0 0.0
        %3580 = vmatprep.subr.mxu0 0.0
        %3581 = vmatpush1.msra.mxu0 0.0
        %3582 = vmatprep.subr.mxu0 0.0
        %3583 = vmatpush1.msra.mxu0 0.0
        %3584 = vmatprep.subr.mxu0 0.0
        %3585 = vmatpush1.msra.mxu0 0.0
        %3586 = vmatprep.subr.mxu0 0.0
        %3587 = vmatpush1.msra.mxu0 0.0
        %3588 = vmatprep.subr.mxu0 0.0
        %3589 = vmatpush1.msra.mxu0 0.0
        %3590 = vmatprep.subr.mxu0 0.0
        %3591 = vmatpush1.msra.mxu0 0.0
        %3592 = vmatprep.subr.mxu0 0.0
        %3593 = vmatpush1.msra.mxu0 0.0
        %3594 = vmatprep.subr.mxu0 0.0
        %3595 = vmatpush1.msra.mxu0 0.0
        %3596 = vmatprep.subr.mxu0 0.0
        %3597 = vmatpush1.msra.mxu0 0.0
        %3598 = vmatprep.subr.mxu0 0.0
        %3599 = vmatpush1.msra.mxu0 0.0
        %3600 = vmatprep.subr.mxu0 0.0
        %3601 = vmatpush1.msra.mxu0 0.0
        %3602 = vmatprep.subr.mxu0 0.0
        %3603 = vmatpush1.msra.mxu0 0.0
        %3604 = vmatprep.subr.mxu0 0.0
        %3605 = vmatpush1.msra.mxu0 0.0
        %3606 = vmatprep.subr.mxu0 0.0
        %3607 = vmatpush1.msra.mxu0 0.0
        %3608 = vmatprep.subr.mxu0 0.0
        %3609 = vmatpush1.msra.mxu0 0.0
        %3610 = vmatprep.subr.mxu0 0.0
        %3611 = vmatpush1.msra.mxu0 0.0
        %3612 = vmatprep.subr.mxu0 0.0
        %3613 = vmatpush1.msra.mxu0 0.0
        %3614 = vmatprep.subr.mxu0 0.0
        %3615 = vmatpush1.msra.mxu0 0.0
        %3616 = vmatprep.subr.mxu0 0.0
        %3617 = vmatpush1.msra.mxu0 0.0
        %3618 = vmatprep.subr.mxu0 0.0
        %3619 = vmatpush1.msra.mxu0 0.0
        %3620 = vmatprep.subr.mxu0 0.0
        %3621 = vmatpush1.msra.mxu0 0.0
        %3622 = vmatprep.subr.mxu0 0.0
        %3623 = vmatpush1.msra.mxu0 0.0
        %3624 = vmatprep.subr.mxu0 0.0
        %3625 = vmatpush1.msra.mxu0 0.0
        %3626 = vmatprep.subr.mxu0 0.0
        %3627 = vmatpush1.msra.mxu0 0.0
        %3628 = vmatprep.subr.mxu0 0.0
        %3629 = vmatpush1.msra.mxu0 0.0
        %3630 = vmatprep.mubr.f32.mxu0 0.0
        %3631 = vmatmul.mubr.f32.gmra.mrb[0].mxu0 %v3074
        %v3632 = vpop.f32.mrb[0].mxu0
        %v3633 = vadd.f32 %v1314, %v3632
        %v3634 = vpop.f32.mrb[0].mxu0
        %3635 = vdwg.mxu0
        %3636 = vmatprep.subr.mxu0 0.0
        %3637 = vmatpush1.msra.mxu0 %v941
        %3638 = vmatprep.subr.mxu0 0.0
        %3639 = vmatpush1.msra.mxu0 %v942
        %3640 = vmatprep.subr.mxu0 0.0
        %3641 = vmatpush1.msra.mxu0 %v943
        %3642 = vmatprep.subr.mxu0 0.0
        %3643 = vmatpush1.msra.mxu0 %v944
        %3644 = vmatprep.subr.mxu0 0.0
        %3645 = vmatpush1.msra.mxu0 0.0
        %3646 = vmatprep.subr.mxu0 0.0
        %3647 = vmatpush1.msra.mxu0 0.0
        %3648 = vmatprep.subr.mxu0 0.0
        %3649 = vmatpush1.msra.mxu0 0.0
        %3650 = vmatprep.subr.mxu0 0.0
        %3651 = vmatpush1.msra.mxu0 0.0
        %3652 = vmatprep.subr.mxu0 0.0
        %3653 = vmatpush1.msra.mxu0 0.0
        %3654 = vmatprep.subr.mxu0 0.0
        %3655 = vmatpush1.msra.mxu0 0.0
        %3656 = vmatprep.subr.mxu0 0.0
        %3657 = vmatpush1.msra.mxu0 0.0
        %3658 = vmatprep.subr.mxu0 0.0
        %3659 = vmatpush1.msra.mxu0 0.0
        %3660 = vmatprep.subr.mxu0 0.0
        %3661 = vmatpush1.msra.mxu0 0.0
        %3662 = vmatprep.subr.mxu0 0.0
        %3663 = vmatpush1.msra.mxu0 0.0
        %3664 = vmatprep.subr.mxu0 0.0
        %3665 = vmatpush1.msra.mxu0 0.0
        %3666 = vmatprep.subr.mxu0 0.0
        %3667 = vmatpush1.msra.mxu0 0.0
        %3668 = vmatprep.subr.mxu0 0.0
        %3669 = vmatpush1.msra.mxu0 0.0
        %3670 = vmatprep.subr.mxu0 0.0
        %3671 = vmatpush1.msra.mxu0 0.0
        %3672 = vmatprep.subr.mxu0 0.0
        %3673 = vmatpush1.msra.mxu0 0.0
        %3674 = vmatprep.subr.mxu0 0.0
        %3675 = vmatpush1.msra.mxu0 0.0
        %3676 = vmatprep.subr.mxu0 0.0
        %3677 = vmatpush1.msra.mxu0 0.0
        %3678 = vmatprep.subr.mxu0 0.0
        %3679 = vmatpush1.msra.mxu0 0.0
        %3680 = vmatprep.subr.mxu0 0.0
        %3681 = vmatpush1.msra.mxu0 0.0
        %3682 = vmatprep.subr.mxu0 0.0
        %3683 = vmatpush1.msra.mxu0 0.0
        %3684 = vmatprep.subr.mxu0 0.0
        %3685 = vmatpush1.msra.mxu0 0.0
        %3686 = vmatprep.subr.mxu0 0.0
        %3687 = vmatpush1.msra.mxu0 0.0
        %3688 = vmatprep.subr.mxu0 0.0
        %3689 = vmatpush1.msra.mxu0 0.0
        %3690 = vmatprep.subr.mxu0 0.0
        %3691 = vmatpush1.msra.mxu0 0.0
        %3692 = vmatprep.subr.mxu0 0.0
        %3693 = vmatpush1.msra.mxu0 0.0
        %3694 = vmatprep.subr.mxu0 0.0
        %3695 = vmatpush1.msra.mxu0 0.0
        %3696 = vmatprep.subr.mxu0 0.0
        %3697 = vmatpush1.msra.mxu0 0.0
        %3698 = vmatprep.subr.mxu0 0.0
        %3699 = vmatpush1.msra.mxu0 0.0
        %3700 = vmatprep.mubr.f32.mxu0 0.0
        %3701 = vmatmul.mubr.f32.gmra.mrb[0].mxu0 %v3074
        %v3702 = vpop.f32.mrb[0].mxu0
        %v3703 = vadd.f32 %v1606, %v3702
        %v3704 = vpop.f32.mrb[0].mxu0
        %3705 = vdwg.mxu0
        %3706 = vmatprep.subr.mxu0 0.0
        %3707 = vmatpush1.msra.mxu0 %v945
        %3708 = vmatprep.subr.mxu0 0.0
        %3709 = vmatpush1.msra.mxu0 %v946
        %3710 = vmatprep.subr.mxu0 0.0
        %3711 = vmatpush1.msra.mxu0 %v947
        %3712 = vmatprep.subr.mxu0 0.0
        %3713 = vmatpush1.msra.mxu0 %v948
        %3714 = vmatprep.subr.mxu0 0.0
        %3715 = vmatpush1.msra.mxu0 0.0
        %3716 = vmatprep.subr.mxu0 0.0
        %3717 = vmatpush1.msra.mxu0 0.0
        %3718 = vmatprep.subr.mxu0 0.0
        %3719 = vmatpush1.msra.mxu0 0.0
        %3720 = vmatprep.subr.mxu0 0.0
        %3721 = vmatpush1.msra.mxu0 0.0
        %3722 = vmatprep.subr.mxu0 0.0
        %3723 = vmatpush1.msra.mxu0 0.0
        %3724 = vmatprep.subr.mxu0 0.0
        %3725 = vmatpush1.msra.mxu0 0.0
        %3726 = vmatprep.subr.mxu0 0.0
        %3727 = vmatpush1.msra.mxu0 0.0
        %3728 = vmatprep.subr.mxu0 0.0
        %3729 = vmatpush1.msra.mxu0 0.0
        %3730 = vmatprep.subr.mxu0 0.0
        %3731 = vmatpush1.msra.mxu0 0.0
        %3732 = vmatprep.subr.mxu0 0.0
        %3733 = vmatpush1.msra.mxu0 0.0
        %3734 = vmatprep.subr.mxu0 0.0
        %3735 = vmatpush1.msra.mxu0 0.0
        %3736 = vmatprep.subr.mxu0 0.0
        %3737 = vmatpush1.msra.mxu0 0.0
        %3738 = vmatprep.subr.mxu0 0.0
        %3739 = vmatpush1.msra.mxu0 0.0
        %3740 = vmatprep.subr.mxu0 0.0
        %3741 = vmatpush1.msra.mxu0 0.0
        %3742 = vmatprep.subr.mxu0 0.0
        %3743 = vmatpush1.msra.mxu0 0.0
        %3744 = vmatprep.subr.mxu0 0.0
        %3745 = vmatpush1.msra.mxu0 0.0
        %3746 = vmatprep.subr.mxu0 0.0
        %3747 = vmatpush1.msra.mxu0 0.0
        %3748 = vmatprep.subr.mxu0 0.0
        %3749 = vmatpush1.msra.mxu0 0.0
        %3750 = vmatprep.subr.mxu0 0.0
        %3751 = vmatpush1.msra.mxu0 0.0
        %3752 = vmatprep.subr.mxu0 0.0
        %3753 = vmatpush1.msra.mxu0 0.0
        %3754 = vmatprep.subr.mxu0 0.0
        %3755 = vmatpush1.msra.mxu0 0.0
        %3756 = vmatprep.subr.mxu0 0.0
        %3757 = vmatpush1.msra.mxu0 0.0
        %3758 = vmatprep.subr.mxu0 0.0
        %3759 = vmatpush1.msra.mxu0 0.0
        %3760 = vmatprep.subr.mxu0 0.0
        %3761 = vmatpush1.msra.mxu0 0.0
        %3762 = vmatprep.subr.mxu0 0.0
        %3763 = vmatpush1.msra.mxu0 0.0
        %3764 = vmatprep.subr.mxu0 0.0
        %3765 = vmatpush1.msra.mxu0 0.0
        %3766 = vmatprep.subr.mxu0 0.0
        %3767 = vmatpush1.msra.mxu0 0.0
        %3768 = vmatprep.subr.mxu0 0.0
        %3769 = vmatpush1.msra.mxu0 0.0
        %3770 = vmatprep.mubr.f32.mxu0 0.0
        %3771 = vmatmul.mubr.f32.gmra.mrb[0].mxu0 %v3074
        %v3772 = vpop.f32.mrb[0].mxu0
        %v3773 = vadd.f32 %v1610, %v3772
        %v3774 = vpop.f32.mrb[0].mxu0
        %3775 = vdwg.mxu0
        %3776 = vmatprep.subr.mxu0 0.0
        %3777 = vmatpush1.msra.mxu0 %v949
        %3778 = vmatprep.subr.mxu0 0.0
        %3779 = vmatpush1.msra.mxu0 %v950
        %3780 = vmatprep.subr.mxu0 0.0
        %3781 = vmatpush1.msra.mxu0 %v951
        %3782 = vmatprep.subr.mxu0 0.0
        %3783 = vmatpush1.msra.mxu0 %v952
        %3784 = vmatprep.subr.mxu0 0.0
        %3785 = vmatpush1.msra.mxu0 0.0
        %3786 = vmatprep.subr.mxu0 0.0
        %3787 = vmatpush1.msra.mxu0 0.0
        %3788 = vmatprep.subr.mxu0 0.0
        %3789 = vmatpush1.msra.mxu0 0.0
        %3790 = vmatprep.subr.mxu0 0.0
        %3791 = vmatpush1.msra.mxu0 0.0
        %3792 = vmatprep.subr.mxu0 0.0
        %3793 = vmatpush1.msra.mxu0 0.0
        %3794 = vmatprep.subr.mxu0 0.0
        %3795 = vmatpush1.msra.mxu0 0.0
        %3796 = vmatprep.subr.mxu0 0.0
        %3797 = vmatpush1.msra.mxu0 0.0
        %3798 = vmatprep.subr.mxu0 0.0
        %3799 = vmatpush1.msra.mxu0 0.0
        %3800 = vmatprep.subr.mxu0 0.0
        %3801 = vmatpush1.msra.mxu0 0.0
        %3802 = vmatprep.subr.mxu0 0.0
        %3803 = vmatpush1.msra.mxu0 0.0
        %3804 = vmatprep.subr.mxu0 0.0
        %3805 = vmatpush1.msra.mxu0 0.0
        %3806 = vmatprep.subr.mxu0 0.0
        %3807 = vmatpush1.msra.mxu0 0.0
        %3808 = vmatprep.subr.mxu0 0.0
        %3809 = vmatpush1.msra.mxu0 0.0
        %3810 = vmatprep.subr.mxu0 0.0
        %3811 = vmatpush1.msra.mxu0 0.0
        %3812 = vmatprep.subr.mxu0 0.0
        %3813 = vmatpush1.msra.mxu0 0.0
        %3814 = vmatprep.subr.mxu0 0.0
        %3815 = vmatpush1.msra.mxu0 0.0
        %3816 = vmatprep.subr.mxu0 0.0
        %3817 = vmatpush1.msra.mxu0 0.0
        %3818 = vmatprep.subr.mxu0 0.0
        %3819 = vmatpush1.msra.mxu0 0.0
        %3820 = vmatprep.subr.mxu0 0.0
        %3821 = vmatpush1.msra.mxu0 0.0
        %3822 = vmatprep.subr.mxu0 0.0
        %3823 = vmatpush1.msra.mxu0 0.0
        %3824 = vmatprep.subr.mxu0 0.0
        %3825 = vmatpush1.msra.mxu0 0.0
        %3826 = vmatprep.subr.mxu0 0.0
        %3827 = vmatpush1.msra.mxu0 0.0
        %3828 = vmatprep.subr.mxu0 0.0
        %3829 = vmatpush1.msra.mxu0 0.0
        %3830 = vmatprep.subr.mxu0 0.0
        %3831 = vmatpush1.msra.mxu0 0.0
        %3832 = vmatprep.subr.mxu0 0.0
        %3833 = vmatpush1.msra.mxu0 0.0
        %3834 = vmatprep.subr.mxu0 0.0
        %3835 = vmatpush1.msra.mxu0 0.0
        %3836 = vmatprep.subr.mxu0 0.0
        %3837 = vmatpush1.msra.mxu0 0.0
        %3838 = vmatprep.subr.mxu0 0.0
        %3839 = vmatpush1.msra.mxu0 0.0
        %3840 = vmatprep.mubr.f32.mxu0 0.0
        %3841 = vmatmul.mubr.f32.gmra.mrb[0].mxu0 %v3074
        %v3842 = vpop.f32.mrb[0].mxu0
        %v3843 = vadd.f32 %v1614, %v3842
        %v3844 = vpop.f32.mrb[0].mxu0
        %3845 = vdwg.mxu0
        %3846 = vmatprep.subr.mxu0 0.0
        %3847 = vmatpush1.msra.mxu0 %v953
        %3848 = vmatprep.subr.mxu0 0.0
        %3849 = vmatpush1.msra.mxu0 %v954
        %3850 = vmatprep.subr.mxu0 0.0
        %3851 = vmatpush1.msra.mxu0 %v955
        %3852 = vmatprep.subr.mxu0 0.0
        %3853 = vmatpush1.msra.mxu0 %v956
        %3854 = vmatprep.subr.mxu0 0.0
        %3855 = vmatpush1.msra.mxu0 0.0
        %3856 = vmatprep.subr.mxu0 0.0
        %3857 = vmatpush1.msra.mxu0 0.0
        %3858 = vmatprep.subr.mxu0 0.0
        %3859 = vmatpush1.msra.mxu0 0.0
        %3860 = vmatprep.subr.mxu0 0.0
        %3861 = vmatpush1.msra.mxu0 0.0
        %3862 = vmatprep.subr.mxu0 0.0
        %3863 = vmatpush1.msra.mxu0 0.0
        %3864 = vmatprep.subr.mxu0 0.0
        %3865 = vmatpush1.msra.mxu0 0.0
        %3866 = vmatprep.subr.mxu0 0.0
        %3867 = vmatpush1.msra.mxu0 0.0
        %3868 = vmatprep.subr.mxu0 0.0
        %3869 = vmatpush1.msra.mxu0 0.0
        %3870 = vmatprep.subr.mxu0 0.0
        %3871 = vmatpush1.msra.mxu0 0.0
        %3872 = vmatprep.subr.mxu0 0.0
        %3873 = vmatpush1.msra.mxu0 0.0
        %3874 = vmatprep.subr.mxu0 0.0
        %3875 = vmatpush1.msra.mxu0 0.0
        %3876 = vmatprep.subr.mxu0 0.0
        %3877 = vmatpush1.msra.mxu0 0.0
        %3878 = vmatprep.subr.mxu0 0.0
        %3879 = vmatpush1.msra.mxu0 0.0
        %3880 = vmatprep.subr.mxu0 0.0
        %3881 = vmatpush1.msra.mxu0 0.0
        %3882 = vmatprep.subr.mxu0 0.0
        %3883 = vmatpush1.msra.mxu0 0.0
        %3884 = vmatprep.subr.mxu0 0.0
        %3885 = vmatpush1.msra.mxu0 0.0
        %3886 = vmatprep.subr.mxu0 0.0
        %3887 = vmatpush1.msra.mxu0 0.0
        %3888 = vmatprep.subr.mxu0 0.0
        %3889 = vmatpush1.msra.mxu0 0.0
        %3890 = vmatprep.subr.mxu0 0.0
        %3891 = vmatpush1.msra.mxu0 0.0
        %3892 = vmatprep.subr.mxu0 0.0
        %3893 = vmatpush1.msra.mxu0 0.0
        %3894 = vmatprep.subr.mxu0 0.0
        %3895 = vmatpush1.msra.mxu0 0.0
        %3896 = vmatprep.subr.mxu0 0.0
        %3897 = vmatpush1.msra.mxu0 0.0
        %3898 = vmatprep.subr.mxu0 0.0
        %3899 = vmatpush1.msra.mxu0 0.0
        %3900 = vmatprep.subr.mxu0 0.0
        %3901 = vmatpush1.msra.mxu0 0.0
        %3902 = vmatprep.subr.mxu0 0.0
        %3903 = vmatpush1.msra.mxu0 0.0
        %3904 = vmatprep.subr.mxu0 0.0
        %3905 = vmatpush1.msra.mxu0 0.0
        %3906 = vmatprep.subr.mxu0 0.0
        %3907 = vmatpush1.msra.mxu0 0.0
        %3908 = vmatprep.subr.mxu0 0.0
        %3909 = vmatpush1.msra.mxu0 0.0
        %3910 = vmatprep.mubr.f32.mxu0 0.0
        %3911 = vmatmul.mubr.f32.gmra.mrb[0].mxu0 %v3074
        %v3912 = vpop.f32.mrb[0].mxu0
        %v3913 = vadd.f32 %v1618, %v3912
        %v3914 = vpop.f32.mrb[0].mxu0
        %3915 = vdwg.mxu0
        %v3917 = vsel %vm1903, %v3143, 0
        %v3920 = vsel %vm1903, %v3423, 0
        %3922 = vmatprep.subr.mxu0 0.0
        %3923 = vmatpush1.xpose.msra.mxu0 %v3920
        %3924 = vmatprep.subr.mxu0 0.0
        %3925 = vmatpush1.xpose.msra.mxu0 0.0
        %3926 = vmatprep.subr.mxu0 0.0
        %3927 = vmatpush1.xpose.msra.mxu0 0.0
        %3928 = vmatprep.subr.mxu0 0.0
        %3929 = vmatpush1.xpose.msra.mxu0 0.0
        %3930 = vmatprep.subr.mxu0 0.0
        %3931 = vmatpush1.xpose.msra.mxu0 0.0
        %3932 = vmatprep.subr.mxu0 0.0
        %3933 = vmatpush1.xpose.msra.mxu0 0.0
        %3934 = vmatprep.subr.mxu0 0.0
        %3935 = vmatpush1.xpose.msra.mxu0 0.0
        %3936 = vmatprep.subr.mxu0 0.0
        %3937 = vmatpush1.xpose.msra.mxu0 0.0
        %3938 = vmatprep.subr.mxu0 0.0
        %3939 = vmatpush1.xpose.msra.mxu0 0.0
        %3940 = vmatprep.subr.mxu0 0.0
        %3941 = vmatpush1.xpose.msra.mxu0 0.0
        %3942 = vmatprep.subr.mxu0 0.0
        %3943 = vmatpush1.xpose.msra.mxu0 0.0
        %3944 = vmatprep.subr.mxu0 0.0
        %3945 = vmatpush1.xpose.msra.mxu0 0.0
        %3946 = vmatprep.subr.mxu0 0.0
        %3947 = vmatpush1.xpose.msra.mxu0 0.0
        %3948 = vmatprep.subr.mxu0 0.0
        %3949 = vmatpush1.xpose.msra.mxu0 0.0
        %3950 = vmatprep.subr.mxu0 0.0
        %3951 = vmatpush1.xpose.msra.mxu0 0.0
        %3952 = vmatprep.subr.mxu0 0.0
        %3953 = vmatpush1.xpose.msra.mxu0 0.0
        %3954 = vmatprep.subr.mxu0 0.0
        %3955 = vmatpush1.xpose.msra.mxu0 0.0
        %3956 = vmatprep.subr.mxu0 0.0
        %3957 = vmatpush1.xpose.msra.mxu0 0.0
        %3958 = vmatprep.subr.mxu0 0.0
        %3959 = vmatpush1.xpose.msra.mxu0 0.0
        %3960 = vmatprep.subr.mxu0 0.0
        %3961 = vmatpush1.xpose.msra.mxu0 0.0
        %3962 = vmatprep.subr.mxu0 0.0
        %3963 = vmatpush1.xpose.msra.mxu0 0.0
        %3964 = vmatprep.subr.mxu0 0.0
        %3965 = vmatpush1.xpose.msra.mxu0 0.0
        %3966 = vmatprep.subr.mxu0 0.0
        %3967 = vmatpush1.xpose.msra.mxu0 0.0
        %3968 = vmatprep.subr.mxu0 0.0
        %3969 = vmatpush1.xpose.msra.mxu0 0.0
        %3970 = vmatprep.subr.mxu0 0.0
        %3971 = vmatpush1.xpose.msra.mxu0 0.0
        %3972 = vmatprep.subr.mxu0 0.0
        %3973 = vmatpush1.xpose.msra.mxu0 0.0
        %3974 = vmatprep.subr.mxu0 0.0
        %3975 = vmatpush1.xpose.msra.mxu0 0.0
        %3976 = vmatprep.subr.mxu0 0.0
        %3977 = vmatpush1.xpose.msra.mxu0 0.0
        %3978 = vmatprep.subr.mxu0 0.0
        %3979 = vmatpush1.xpose.msra.mxu0 0.0
        %3980 = vmatprep.subr.mxu0 0.0
        %3981 = vmatpush1.xpose.msra.mxu0 0.0
        %3982 = vmatprep.subr.mxu0 0.0
        %3983 = vmatpush1.xpose.msra.mxu0 0.0
        %3984 = vmatprep.subr.mxu0 0.0
        %3985 = vmatpush1.xpose.msra.mxu0 0.0
        %3986 = vmatprep.mubr.f32.mxu0 0.0
        %3987 = vmatmul.mubr.f32.gmra.mrb[0].mxu0 %v3917
        %v3988 = vpop.f32.mrb[0].mxu0
        %v3989 = vadd.f32 %v3072, %v3988
        %v3990 = vpop.f32.mrb[0].mxu0
        %3991 = vdwg.mxu0
        %v3993 = vsel %vm1903, %v3213, 0
        %v3996 = vsel %vm1903, %v3493, 0
        %3998 = vmatprep.subr.mxu0 0.0
        %3999 = vmatpush1.xpose.msra.mxu0 %v3996
        %4000 = vmatprep.subr.mxu0 0.0
        %4001 = vmatpush1.xpose.msra.mxu0 0.0
        %4002 = vmatprep.subr.mxu0 0.0
        %4003 = vmatpush1.xpose.msra.mxu0 0.0
        %4004 = vmatprep.subr.mxu0 0.0
        %4005 = vmatpush1.xpose.msra.mxu0 0.0
        %4006 = vmatprep.subr.mxu0 0.0
        %4007 = vmatpush1.xpose.msra.mxu0 0.0
        %4008 = vmatprep.subr.mxu0 0.0
        %4009 = vmatpush1.xpose.msra.mxu0 0.0
        %4010 = vmatprep.subr.mxu0 0.0
        %4011 = vmatpush1.xpose.msra.mxu0 0.0
        %4012 = vmatprep.subr.mxu0 0.0
        %4013 = vmatpush1.xpose.msra.mxu0 0.0
        %4014 = vmatprep.subr.mxu0 0.0
        %4015 = vmatpush1.xpose.msra.mxu0 0.0
        %4016 = vmatprep.subr.mxu0 0.0
        %4017 = vmatpush1.xpose.msra.mxu0 0.0
        %4018 = vmatprep.subr.mxu0 0.0
        %4019 = vmatpush1.xpose.msra.mxu0 0.0
        %4020 = vmatprep.subr.mxu0 0.0
        %4021 = vmatpush1.xpose.msra.mxu0 0.0
        %4022 = vmatprep.subr.mxu0 0.0
        %4023 = vmatpush1.xpose.msra.mxu0 0.0
        %4024 = vmatprep.subr.mxu0 0.0
        %4025 = vmatpush1.xpose.msra.mxu0 0.0
        %4026 = vmatprep.subr.mxu0 0.0
        %4027 = vmatpush1.xpose.msra.mxu0 0.0
        %4028 = vmatprep.subr.mxu0 0.0
        %4029 = vmatpush1.xpose.msra.mxu0 0.0
        %4030 = vmatprep.subr.mxu0 0.0
        %4031 = vmatpush1.xpose.msra.mxu0 0.0
        %4032 = vmatprep.subr.mxu0 0.0
        %4033 = vmatpush1.xpose.msra.mxu0 0.0
        %4034 = vmatprep.subr.mxu0 0.0
        %4035 = vmatpush1.xpose.msra.mxu0 0.0
        %4036 = vmatprep.subr.mxu0 0.0
        %4037 = vmatpush1.xpose.msra.mxu0 0.0
        %4038 = vmatprep.subr.mxu0 0.0
        %4039 = vmatpush1.xpose.msra.mxu0 0.0
        %4040 = vmatprep.subr.mxu0 0.0
        %4041 = vmatpush1.xpose.msra.mxu0 0.0
        %4042 = vmatprep.subr.mxu0 0.0
        %4043 = vmatpush1.xpose.msra.mxu0 0.0
        %4044 = vmatprep.subr.mxu0 0.0
        %4045 = vmatpush1.xpose.msra.mxu0 0.0
        %4046 = vmatprep.subr.mxu0 0.0
        %4047 = vmatpush1.xpose.msra.mxu0 0.0
        %4048 = vmatprep.subr.mxu0 0.0
        %4049 = vmatpush1.xpose.msra.mxu0 0.0
        %4050 = vmatprep.subr.mxu0 0.0
        %4051 = vmatpush1.xpose.msra.mxu0 0.0
        %4052 = vmatprep.subr.mxu0 0.0
        %4053 = vmatpush1.xpose.msra.mxu0 0.0
        %4054 = vmatprep.subr.mxu0 0.0
        %4055 = vmatpush1.xpose.msra.mxu0 0.0
        %4056 = vmatprep.subr.mxu0 0.0
        %4057 = vmatpush1.xpose.msra.mxu0 0.0
        %4058 = vmatprep.subr.mxu0 0.0
        %4059 = vmatpush1.xpose.msra.mxu0 0.0
        %4060 = vmatprep.subr.mxu0 0.0
        %4061 = vmatpush1.xpose.msra.mxu0 0.0
        %4062 = vmatprep.mubr.f32.mxu0 0.0
        %4063 = vmatmul.mubr.f32.gmra.mrb[0].mxu0 %v3993
        %v4064 = vpop.f32.mrb[0].mxu0
        %v4065 = vadd.f32 %v3072, %v4064
        %v4066 = vpop.f32.mrb[0].mxu0
        %4067 = vdwg.mxu0
        %v4069 = vsel %vm1903, %v3283, 0
        %v4072 = vsel %vm1903, %v3563, 0
        %4074 = vmatprep.subr.mxu0 0.0
        %4075 = vmatpush1.xpose.msra.mxu0 %v4072
        %4076 = vmatprep.subr.mxu0 0.0
        %4077 = vmatpush1.xpose.msra.mxu0 0.0
        %4078 = vmatprep.subr.mxu0 0.0
        %4079 = vmatpush1.xpose.msra.mxu0 0.0
        %4080 = vmatprep.subr.mxu0 0.0
        %4081 = vmatpush1.xpose.msra.mxu0 0.0
        %4082 = vmatprep.subr.mxu0 0.0
        %4083 = vmatpush1.xpose.msra.mxu0 0.0
        %4084 = vmatprep.subr.mxu0 0.0
        %4085 = vmatpush1.xpose.msra.mxu0 0.0
        %4086 = vmatprep.subr.mxu0 0.0
        %4087 = vmatpush1.xpose.msra.mxu0 0.0
        %4088 = vmatprep.subr.mxu0 0.0
        %4089 = vmatpush1.xpose.msra.mxu0 0.0
        %4090 = vmatprep.subr.mxu0 0.0
        %4091 = vmatpush1.xpose.msra.mxu0 0.0
        %4092 = vmatprep.subr.mxu0 0.0
        %4093 = vmatpush1.xpose.msra.mxu0 0.0
        %4094 = vmatprep.subr.mxu0 0.0
        %4095 = vmatpush1.xpose.msra.mxu0 0.0
        %4096 = vmatprep.subr.mxu0 0.0
        %4097 = vmatpush1.xpose.msra.mxu0 0.0
        %4098 = vmatprep.subr.mxu0 0.0
        %4099 = vmatpush1.xpose.msra.mxu0 0.0
        %4100 = vmatprep.subr.mxu0 0.0
        %4101 = vmatpush1.xpose.msra.mxu0 0.0
        %4102 = vmatprep.subr.mxu0 0.0
        %4103 = vmatpush1.xpose.msra.mxu0 0.0
        %4104 = vmatprep.subr.mxu0 0.0
        %4105 = vmatpush1.xpose.msra.mxu0 0.0
        %4106 = vmatprep.subr.mxu0 0.0
        %4107 = vmatpush1.xpose.msra.mxu0 0.0
        %4108 = vmatprep.subr.mxu0 0.0
        %4109 = vmatpush1.xpose.msra.mxu0 0.0
        %4110 = vmatprep.subr.mxu0 0.0
        %4111 = vmatpush1.xpose.msra.mxu0 0.0
        %4112 = vmatprep.subr.mxu0 0.0
        %4113 = vmatpush1.xpose.msra.mxu0 0.0
        %4114 = vmatprep.subr.mxu0 0.0
        %4115 = vmatpush1.xpose.msra.mxu0 0.0
        %4116 = vmatprep.subr.mxu0 0.0
        %4117 = vmatpush1.xpose.msra.mxu0 0.0
        %4118 = vmatprep.subr.mxu0 0.0
        %4119 = vmatpush1.xpose.msra.mxu0 0.0
        %4120 = vmatprep.subr.mxu0 0.0
        %4121 = vmatpush1.xpose.msra.mxu0 0.0
        %4122 = vmatprep.subr.mxu0 0.0
        %4123 = vmatpush1.xpose.msra.mxu0 0.0
        %4124 = vmatprep.subr.mxu0 0.0
        %4125 = vmatpush1.xpose.msra.mxu0 0.0
        %4126 = vmatprep.subr.mxu0 0.0
        %4127 = vmatpush1.xpose.msra.mxu0 0.0
        %4128 = vmatprep.subr.mxu0 0.0
        %4129 = vmatpush1.xpose.msra.mxu0 0.0
        %4130 = vmatprep.subr.mxu0 0.0
        %4131 = vmatpush1.xpose.msra.mxu0 0.0
        %4132 = vmatprep.subr.mxu0 0.0
        %4133 = vmatpush1.xpose.msra.mxu0 0.0
        %4134 = vmatprep.subr.mxu0 0.0
        %4135 = vmatpush1.xpose.msra.mxu0 0.0
        %4136 = vmatprep.subr.mxu0 0.0
        %4137 = vmatpush1.xpose.msra.mxu0 0.0
        %4138 = vmatprep.mubr.f32.mxu0 0.0
        %4139 = vmatmul.mubr.f32.gmra.mrb[0].mxu0 %v4069
        %v4140 = vpop.f32.mrb[0].mxu0
        %v4141 = vadd.f32 %v3072, %v4140
        %v4142 = vpop.f32.mrb[0].mxu0
        %4143 = vdwg.mxu0
        %v4145 = vsel %vm1903, %v3353, 0
        %v4148 = vsel %vm1903, %v3633, 0
        %4150 = vmatprep.subr.mxu0 0.0
        %4151 = vmatpush1.xpose.msra.mxu0 %v4148
        %4152 = vmatprep.subr.mxu0 0.0
        %4153 = vmatpush1.xpose.msra.mxu0 0.0
        %4154 = vmatprep.subr.mxu0 0.0
        %4155 = vmatpush1.xpose.msra.mxu0 0.0
        %4156 = vmatprep.subr.mxu0 0.0
        %4157 = vmatpush1.xpose.msra.mxu0 0.0
        %4158 = vmatprep.subr.mxu0 0.0
        %4159 = vmatpush1.xpose.msra.mxu0 0.0
        %4160 = vmatprep.subr.mxu0 0.0
        %4161 = vmatpush1.xpose.msra.mxu0 0.0
        %4162 = vmatprep.subr.mxu0 0.0
        %4163 = vmatpush1.xpose.msra.mxu0 0.0
        %4164 = vmatprep.subr.mxu0 0.0
        %4165 = vmatpush1.xpose.msra.mxu0 0.0
        %4166 = vmatprep.subr.mxu0 0.0
        %4167 = vmatpush1.xpose.msra.mxu0 0.0
        %4168 = vmatprep.subr.mxu0 0.0
        %4169 = vmatpush1.xpose.msra.mxu0 0.0
        %4170 = vmatprep.subr.mxu0 0.0
        %4171 = vmatpush1.xpose.msra.mxu0 0.0
        %4172 = vmatprep.subr.mxu0 0.0
        %4173 = vmatpush1.xpose.msra.mxu0 0.0
        %4174 = vmatprep.subr.mxu0 0.0
        %4175 = vmatpush1.xpose.msra.mxu0 0.0
        %4176 = vmatprep.subr.mxu0 0.0
        %4177 = vmatpush1.xpose.msra.mxu0 0.0
        %4178 = vmatprep.subr.mxu0 0.0
        %4179 = vmatpush1.xpose.msra.mxu0 0.0
        %4180 = vmatprep.subr.mxu0 0.0
        %4181 = vmatpush1.xpose.msra.mxu0 0.0
        %4182 = vmatprep.subr.mxu0 0.0
        %4183 = vmatpush1.xpose.msra.mxu0 0.0
        %4184 = vmatprep.subr.mxu0 0.0
        %4185 = vmatpush1.xpose.msra.mxu0 0.0
        %4186 = vmatprep.subr.mxu0 0.0
        %4187 = vmatpush1.xpose.msra.mxu0 0.0
        %4188 = vmatprep.subr.mxu0 0.0
        %4189 = vmatpush1.xpose.msra.mxu0 0.0
        %4190 = vmatprep.subr.mxu0 0.0
        %4191 = vmatpush1.xpose.msra.mxu0 0.0
        %4192 = vmatprep.subr.mxu0 0.0
        %4193 = vmatpush1.xpose.msra.mxu0 0.0
        %4194 = vmatprep.subr.mxu0 0.0
        %4195 = vmatpush1.xpose.msra.mxu0 0.0
        %4196 = vmatprep.subr.mxu0 0.0
        %4197 = vmatpush1.xpose.msra.mxu0 0.0
        %4198 = vmatprep.subr.mxu0 0.0
        %4199 = vmatpush1.xpose.msra.mxu0 0.0
        %4200 = vmatprep.subr.mxu0 0.0
        %4201 = vmatpush1.xpose.msra.mxu0 0.0
        %4202 = vmatprep.subr.mxu0 0.0
        %4203 = vmatpush1.xpose.msra.mxu0 0.0
        %4204 = vmatprep.subr.mxu0 0.0
        %4205 = vmatpush1.xpose.msra.mxu0 0.0
        %4206 = vmatprep.subr.mxu0 0.0
        %4207 = vmatpush1.xpose.msra.mxu0 0.0
        %4208 = vmatprep.subr.mxu0 0.0
        %4209 = vmatpush1.xpose.msra.mxu0 0.0
        %4210 = vmatprep.subr.mxu0 0.0
        %4211 = vmatpush1.xpose.msra.mxu0 0.0
        %4212 = vmatprep.subr.mxu0 0.0
        %4213 = vmatpush1.xpose.msra.mxu0 0.0
        %4214 = vmatprep.mubr.f32.mxu0 0.0
        %4215 = vmatmul.mubr.f32.gmra.mrb[0].mxu0 %v4145
        %v4216 = vpop.f32.mrb[0].mxu0
        %v4217 = vadd.f32 %v3072, %v4216
        %v4218 = vpop.f32.mrb[0].mxu0
        %4219 = vdwg.mxu0
        %v4220 = vsel %vm1903, %v3989, -inf
        %4221 = vmax.xlane.f32.xlu0 %v4220
        %v4222 = vpop.xlane.xlu0 %4221
        %v4223 = vsel %vm1903, %v4065, -inf
        %4224 = vmax.xlane.f32.xlu0 %v4223
        %v4225 = vpop.xlane.xlu0 %4224
        %v4226 = vsel %vm1903, %v4141, -inf
        %4227 = vmax.xlane.f32.xlu0 %v4226
        %v4228 = vpop.xlane.xlu0 %4227
        %v4229 = vsel %vm1903, %v4217, -inf
        %4230 = vmax.xlane.f32.xlu0 %v4229
        %v4231 = vpop.xlane.xlu0 %4230
        %v4232 = vsub.f32 %v3989, %v4222
        %v4233 = vsub.f32 %v4065, %v4225
        %v4234 = vsub.f32 %v4141, %v4228
        %v4235 = vsub.f32 %v4217, %v4231
        %v4236 = vmul.f32 %v4232, 1.442695
        %v4237 = vpow.pop %v4236
        %v4238 = vmul.f32 %v4233, 1.442695
        %v4239 = vpow.pop %v4238
        %v4240 = vmul.f32 %v4234, 1.442695
        %v4241 = vpow.pop %v4240
        %v4242 = vmul.f32 %v4235, 1.442695
        %v4243 = vpow.pop %v4242
        %v4244 = vsel %vm1903, %v4237, 0.0
        %4245 = vadd.xlane.f32.xlu0 %v4244
        %v4246 = vpop.xlane.xlu0 %4245
        %v4247 = vsel %vm1903, %v4239, 0.0
        %4248 = vadd.xlane.f32.xlu0 %v4247
        %v4249 = vpop.xlane.xlu0 %4248
        %v4250 = vsel %vm1903, %v4241, 0.0
        %4251 = vadd.xlane.f32.xlu0 %v4250
        %v4252 = vpop.xlane.xlu0 %4251
        %v4253 = vsel %vm1903, %v4243, 0.0
        %4254 = vadd.xlane.f32.xlu0 %v4253
        %v4255 = vpop.xlane.xlu0 %4254
        %v4256 = vrcp.pop %v4246
        %v4257 = vrcp.pop %v4249
        %v4258 = vrcp.pop %v4252
        %v4259 = vrcp.pop %v4255
        %v4260 = vmul.f32 %v4237, %v4256
        %v4261 = vmul.f32 %v4239, %v4257
        %v4262 = vmul.f32 %v4241, %v4258
        %v4263 = vmul.f32 %v4243, %v4259
        %v4265 = vsel %vm1903, %v4260, 0
        %4267 = vmatprep.subr.mxu0 0.0
        %4268 = vmatpush1.msra.mxu0 %v3703
        %4269 = vmatprep.subr.mxu0 0.0
        %4270 = vmatpush1.msra.mxu0 0.0
        %4271 = vmatprep.subr.mxu0 0.0
        %4272 = vmatpush1.msra.mxu0 0.0
        %4273 = vmatprep.subr.mxu0 0.0
        %4274 = vmatpush1.msra.mxu0 0.0
        %4275 = vmatprep.subr.mxu0 0.0
        %4276 = vmatpush1.msra.mxu0 0.0
        %4277 = vmatprep.subr.mxu0 0.0
        %4278 = vmatpush1.msra.mxu0 0.0
        %4279 = vmatprep.subr.mxu0 0.0
        %4280 = vmatpush1.msra.mxu0 0.0
        %4281 = vmatprep.subr.mxu0 0.0
        %4282 = vmatpush1.msra.mxu0 0.0
        %4283 = vmatprep.subr.mxu0 0.0
        %4284 = vmatpush1.msra.mxu0 0.0
        %4285 = vmatprep.subr.mxu0 0.0
        %4286 = vmatpush1.msra.mxu0 0.0
        %4287 = vmatprep.subr.mxu0 0.0
        %4288 = vmatpush1.msra.mxu0 0.0
        %4289 = vmatprep.subr.mxu0 0.0
        %4290 = vmatpush1.msra.mxu0 0.0
        %4291 = vmatprep.subr.mxu0 0.0
        %4292 = vmatpush1.msra.mxu0 0.0
        %4293 = vmatprep.subr.mxu0 0.0
        %4294 = vmatpush1.msra.mxu0 0.0
        %4295 = vmatprep.subr.mxu0 0.0
        %4296 = vmatpush1.msra.mxu0 0.0
        %4297 = vmatprep.subr.mxu0 0.0
        %4298 = vmatpush1.msra.mxu0 0.0
        %4299 = vmatprep.subr.mxu0 0.0
        %4300 = vmatpush1.msra.mxu0 0.0
        %4301 = vmatprep.subr.mxu0 0.0
        %4302 = vmatpush1.msra.mxu0 0.0
        %4303 = vmatprep.subr.mxu0 0.0
        %4304 = vmatpush1.msra.mxu0 0.0
        %4305 = vmatprep.subr.mxu0 0.0
        %4306 = vmatpush1.msra.mxu0 0.0
        %4307 = vmatprep.subr.mxu0 0.0
        %4308 = vmatpush1.msra.mxu0 0.0
        %4309 = vmatprep.subr.mxu0 0.0
        %4310 = vmatpush1.msra.mxu0 0.0
        %4311 = vmatprep.subr.mxu0 0.0
        %4312 = vmatpush1.msra.mxu0 0.0
        %4313 = vmatprep.subr.mxu0 0.0
        %4314 = vmatpush1.msra.mxu0 0.0
        %4315 = vmatprep.subr.mxu0 0.0
        %4316 = vmatpush1.msra.mxu0 0.0
        %4317 = vmatprep.subr.mxu0 0.0
        %4318 = vmatpush1.msra.mxu0 0.0
        %4319 = vmatprep.subr.mxu0 0.0
        %4320 = vmatpush1.msra.mxu0 0.0
        %4321 = vmatprep.subr.mxu0 0.0
        %4322 = vmatpush1.msra.mxu0 0.0
        %4323 = vmatprep.subr.mxu0 0.0
        %4324 = vmatpush1.msra.mxu0 0.0
        %4325 = vmatprep.subr.mxu0 0.0
        %4326 = vmatpush1.msra.mxu0 0.0
        %4327 = vmatprep.subr.mxu0 0.0
        %4328 = vmatpush1.msra.mxu0 0.0
        %4329 = vmatprep.subr.mxu0 0.0
        %4330 = vmatpush1.msra.mxu0 0.0
        %4331 = vmatprep.mubr.f32.mxu0 0.0
        %4332 = vmatmul.mubr.f32.gmra.mrb[0].mxu0 %v4265
        %v4333 = vpop.f32.mrb[0].mxu0
        %v4334 = vadd.f32 0.0, %v4333
        %v4335 = vpop.f32.mrb[0].mxu0
        %4336 = vdwg.mxu0
        %v4338 = vsel %vm1903, %v4261, 0
        %4340 = vmatprep.subr.mxu0 0.0
        %4341 = vmatpush1.msra.mxu0 %v3773
        %4342 = vmatprep.subr.mxu0 0.0
        %4343 = vmatpush1.msra.mxu0 0.0
        %4344 = vmatprep.subr.mxu0 0.0
        %4345 = vmatpush1.msra.mxu0 0.0
        %4346 = vmatprep.subr.mxu0 0.0
        %4347 = vmatpush1.msra.mxu0 0.0
        %4348 = vmatprep.subr.mxu0 0.0
        %4349 = vmatpush1.msra.mxu0 0.0
        %4350 = vmatprep.subr.mxu0 0.0
        %4351 = vmatpush1.msra.mxu0 0.0
        %4352 = vmatprep.subr.mxu0 0.0
        %4353 = vmatpush1.msra.mxu0 0.0
        %4354 = vmatprep.subr.mxu0 0.0
        %4355 = vmatpush1.msra.mxu0 0.0
        %4356 = vmatprep.subr.mxu0 0.0
        %4357 = vmatpush1.msra.mxu0 0.0
        %4358 = vmatprep.subr.mxu0 0.0
        %4359 = vmatpush1.msra.mxu0 0.0
        %4360 = vmatprep.subr.mxu0 0.0
        %4361 = vmatpush1.msra.mxu0 0.0
        %4362 = vmatprep.subr.mxu0 0.0
        %4363 = vmatpush1.msra.mxu0 0.0
        %4364 = vmatprep.subr.mxu0 0.0
        %4365 = vmatpush1.msra.mxu0 0.0
        %4366 = vmatprep.subr.mxu0 0.0
        %4367 = vmatpush1.msra.mxu0 0.0
        %4368 = vmatprep.subr.mxu0 0.0
        %4369 = vmatpush1.msra.mxu0 0.0
        %4370 = vmatprep.subr.mxu0 0.0
        %4371 = vmatpush1.msra.mxu0 0.0
        %4372 = vmatprep.subr.mxu0 0.0
        %4373 = vmatpush1.msra.mxu0 0.0
        %4374 = vmatprep.subr.mxu0 0.0
        %4375 = vmatpush1.msra.mxu0 0.0
        %4376 = vmatprep.subr.mxu0 0.0
        %4377 = vmatpush1.msra.mxu0 0.0
        %4378 = vmatprep.subr.mxu0 0.0
        %4379 = vmatpush1.msra.mxu0 0.0
        %4380 = vmatprep.subr.mxu0 0.0
        %4381 = vmatpush1.msra.mxu0 0.0
        %4382 = vmatprep.subr.mxu0 0.0
        %4383 = vmatpush1.msra.mxu0 0.0
        %4384 = vmatprep.subr.mxu0 0.0
        %4385 = vmatpush1.msra.mxu0 0.0
        %4386 = vmatprep.subr.mxu0 0.0
        %4387 = vmatpush1.msra.mxu0 0.0
        %4388 = vmatprep.subr.mxu0 0.0
        %4389 = vmatpush1.msra.mxu0 0.0
        %4390 = vmatprep.subr.mxu0 0.0
        %4391 = vmatpush1.msra.mxu0 0.0
        %4392 = vmatprep.subr.mxu0 0.0
        %4393 = vmatpush1.msra.mxu0 0.0
        %4394 = vmatprep.subr.mxu0 0.0
        %4395 = vmatpush1.msra.mxu0 0.0
        %4396 = vmatprep.subr.mxu0 0.0
        %4397 = vmatpush1.msra.mxu0 0.0
        %4398 = vmatprep.subr.mxu0 0.0
        %4399 = vmatpush1.msra.mxu0 0.0
        %4400 = vmatprep.subr.mxu0 0.0
        %4401 = vmatpush1.msra.mxu0 0.0
        %4402 = vmatprep.subr.mxu0 0.0
        %4403 = vmatpush1.msra.mxu0 0.0
        %4404 = vmatprep.mubr.f32.mxu0 0.0
        %4405 = vmatmul.mubr.f32.gmra.mrb[0].mxu0 %v4338
        %v4406 = vpop.f32.mrb[0].mxu0
        %v4407 = vadd.f32 0.0, %v4406
        %v4408 = vpop.f32.mrb[0].mxu0
        %4409 = vdwg.mxu0
        %v4411 = vsel %vm1903, %v4262, 0
        %4413 = vmatprep.subr.mxu0 0.0
        %4414 = vmatpush1.msra.mxu0 %v3843
        %4415 = vmatprep.subr.mxu0 0.0
        %4416 = vmatpush1.msra.mxu0 0.0
        %4417 = vmatprep.subr.mxu0 0.0
        %4418 = vmatpush1.msra.mxu0 0.0
        %4419 = vmatprep.subr.mxu0 0.0
        %4420 = vmatpush1.msra.mxu0 0.0
        %4421 = vmatprep.subr.mxu0 0.0
        %4422 = vmatpush1.msra.mxu0 0.0
        %4423 = vmatprep.subr.mxu0 0.0
        %4424 = vmatpush1.msra.mxu0 0.0
        %4425 = vmatprep.subr.mxu0 0.0
        %4426 = vmatpush1.msra.mxu0 0.0
        %4427 = vmatprep.subr.mxu0 0.0
        %4428 = vmatpush1.msra.mxu0 0.0
        %4429 = vmatprep.subr.mxu0 0.0
        %4430 = vmatpush1.msra.mxu0 0.0
        %4431 = vmatprep.subr.mxu0 0.0
        %4432 = vmatpush1.msra.mxu0 0.0
        %4433 = vmatprep.subr.mxu0 0.0
        %4434 = vmatpush1.msra.mxu0 0.0
        %4435 = vmatprep.subr.mxu0 0.0
        %4436 = vmatpush1.msra.mxu0 0.0
        %4437 = vmatprep.subr.mxu0 0.0
        %4438 = vmatpush1.msra.mxu0 0.0
        %4439 = vmatprep.subr.mxu0 0.0
        %4440 = vmatpush1.msra.mxu0 0.0
        %4441 = vmatprep.subr.mxu0 0.0
        %4442 = vmatpush1.msra.mxu0 0.0
        %4443 = vmatprep.subr.mxu0 0.0
        %4444 = vmatpush1.msra.mxu0 0.0
        %4445 = vmatprep.subr.mxu0 0.0
        %4446 = vmatpush1.msra.mxu0 0.0
        %4447 = vmatprep.subr.mxu0 0.0
        %4448 = vmatpush1.msra.mxu0 0.0
        %4449 = vmatprep.subr.mxu0 0.0
        %4450 = vmatpush1.msra.mxu0 0.0
        %4451 = vmatprep.subr.mxu0 0.0
        %4452 = vmatpush1.msra.mxu0 0.0
        %4453 = vmatprep.subr.mxu0 0.0
        %4454 = vmatpush1.msra.mxu0 0.0
        %4455 = vmatprep.subr.mxu0 0.0
        %4456 = vmatpush1.msra.mxu0 0.0
        %4457 = vmatprep.subr.mxu0 0.0
        %4458 = vmatpush1.msra.mxu0 0.0
        %4459 = vmatprep.subr.mxu0 0.0
        %4460 = vmatpush1.msra.mxu0 0.0
        %4461 = vmatprep.subr.mxu0 0.0
        %4462 = vmatpush1.msra.mxu0 0.0
        %4463 = vmatprep.subr.mxu0 0.0
        %4464 = vmatpush1.msra.mxu0 0.0
        %4465 = vmatprep.subr.mxu0 0.0
        %4466 = vmatpush1.msra.mxu0 0.0
        %4467 = vmatprep.subr.mxu0 0.0
        %4468 = vmatpush1.msra.mxu0 0.0
        %4469 = vmatprep.subr.mxu0 0.0
        %4470 = vmatpush1.msra.mxu0 0.0
        %4471 = vmatprep.subr.mxu0 0.0
        %4472 = vmatpush1.msra.mxu0 0.0
        %4473 = vmatprep.subr.mxu0 0.0
        %4474 = vmatpush1.msra.mxu0 0.0
        %4475 = vmatprep.subr.mxu0 0.0
        %4476 = vmatpush1.msra.mxu0 0.0
        %4477 = vmatprep.mubr.f32.mxu0 0.0
        %4478 = vmatmul.mubr.f32.gmra.mrb[0].mxu0 %v4411
        %v4479 = vpop.f32.mrb[0].mxu0
        %v4480 = vadd.f32 0.0, %v4479
        %v4481 = vpop.f32.mrb[0].mxu0
        %4482 = vdwg.mxu0
        %v4484 = vsel %vm1903, %v4263, 0
        %4486 = vmatprep.subr.mxu0 0.0
        %4487 = vmatpush1.msra.mxu0 %v3913
        %4488 = vmatprep.subr.mxu0 0.0
        %4489 = vmatpush1.msra.mxu0 0.0
        %4490 = vmatprep.subr.mxu0 0.0
        %4491 = vmatpush1.msra.mxu0 0.0
        %4492 = vmatprep.subr.mxu0 0.0
        %4493 = vmatpush1.msra.mxu0 0.0
        %4494 = vmatprep.subr.mxu0 0.0
        %4495 = vmatpush1.msra.mxu0 0.0
        %4496 = vmatprep.subr.mxu0 0.0
        %4497 = vmatpush1.msra.mxu0 0.0
        %4498 = vmatprep.subr.mxu0 0.0
        %4499 = vmatpush1.msra.mxu0 0.0
        %4500 = vmatprep.subr.mxu0 0.0
        %4501 = vmatpush1.msra.mxu0 0.0
        %4502 = vmatprep.subr.mxu0 0.0
        %4503 = vmatpush1.msra.mxu0 0.0
        %4504 = vmatprep.subr.mxu0 0.0
        %4505 = vmatpush1.msra.mxu0 0.0
        %4506 = vmatprep.subr.mxu0 0.0
        %4507 = vmatpush1.msra.mxu0 0.0
        %4508 = vmatprep.subr.mxu0 0.0
        %4509 = vmatpush1.msra.mxu0 0.0
        %4510 = vmatprep.subr.mxu0 0.0
        %4511 = vmatpush1.msra.mxu0 0.0
        %4512 = vmatprep.subr.mxu0 0.0
        %4513 = vmatpush1.msra.mxu0 0.0
        %4514 = vmatprep.subr.mxu0 0.0
        %4515 = vmatpush1.msra.mxu0 0.0
        %4516 = vmatprep.subr.mxu0 0.0
        %4517 = vmatpush1.msra.mxu0 0.0
        %4518 = vmatprep.subr.mxu0 0.0
        %4519 = vmatpush1.msra.mxu0 0.0
        %4520 = vmatprep.subr.mxu0 0.0
        %4521 = vmatpush1.msra.mxu0 0.0
        %4522 = vmatprep.subr.mxu0 0.0
        %4523 = vmatpush1.msra.mxu0 0.0
        %4524 = vmatprep.subr.mxu0 0.0
        %4525 = vmatpush1.msra.mxu0 0.0
        %4526 = vmatprep.subr.mxu0 0.0
        %4527 = vmatpush1.msra.mxu0 0.0
        %4528 = vmatprep.subr.mxu0 0.0
        %4529 = vmatpush1.msra.mxu0 0.0
        %4530 = vmatprep.subr.mxu0 0.0
        %4531 = vmatpush1.msra.mxu0 0.0
        %4532 = vmatprep.subr.mxu0 0.0
        %4533 = vmatpush1.msra.mxu0 0.0
        %4534 = vmatprep.subr.mxu0 0.0
        %4535 = vmatpush1.msra.mxu0 0.0
        %4536 = vmatprep.subr.mxu0 0.0
        %4537 = vmatpush1.msra.mxu0 0.0
        %4538 = vmatprep.subr.mxu0 0.0
        %4539 = vmatpush1.msra.mxu0 0.0
        %4540 = vmatprep.subr.mxu0 0.0
        %4541 = vmatpush1.msra.mxu0 0.0
        %4542 = vmatprep.subr.mxu0 0.0
        %4543 = vmatpush1.msra.mxu0 0.0
        %4544 = vmatprep.subr.mxu0 0.0
        %4545 = vmatpush1.msra.mxu0 0.0
        %4546 = vmatprep.subr.mxu0 0.0
        %4547 = vmatpush1.msra.mxu0 0.0
        %4548 = vmatprep.subr.mxu0 0.0
        %4549 = vmatpush1.msra.mxu0 0.0
        %4550 = vmatprep.mubr.f32.mxu0 0.0
        %4551 = vmatmul.mubr.f32.gmra.mrb[0].mxu0 %v4484
        %v4552 = vpop.f32.mrb[0].mxu0
        %v4553 = vadd.f32 0.0, %v4552
        %v4554 = vpop.f32.mrb[0].mxu0
        %4555 = vdwg.mxu0
        %v4557 = vsel %vm1903, %v4334, 0
        %4559 = vmatprep.subr.mxu0 0.0
        %4560 = vmatpush1.msra.mxu0 %v961
        %4561 = vmatprep.subr.mxu0 0.0
        %4562 = vmatpush1.msra.mxu0 0.0
        %4563 = vmatprep.subr.mxu0 0.0
        %4564 = vmatpush1.msra.mxu0 0.0
        %4565 = vmatprep.subr.mxu0 0.0
        %4566 = vmatpush1.msra.mxu0 0.0
        %4567 = vmatprep.subr.mxu0 0.0
        %4568 = vmatpush1.msra.mxu0 0.0
        %4569 = vmatprep.subr.mxu0 0.0
        %4570 = vmatpush1.msra.mxu0 0.0
        %4571 = vmatprep.subr.mxu0 0.0
        %4572 = vmatpush1.msra.mxu0 0.0
        %4573 = vmatprep.subr.mxu0 0.0
        %4574 = vmatpush1.msra.mxu0 0.0
        %4575 = vmatprep.subr.mxu0 0.0
        %4576 = vmatpush1.msra.mxu0 0.0
        %4577 = vmatprep.subr.mxu0 0.0
        %4578 = vmatpush1.msra.mxu0 0.0
        %4579 = vmatprep.subr.mxu0 0.0
        %4580 = vmatpush1.msra.mxu0 0.0
        %4581 = vmatprep.subr.mxu0 0.0
        %4582 = vmatpush1.msra.mxu0 0.0
        %4583 = vmatprep.subr.mxu0 0.0
        %4584 = vmatpush1.msra.mxu0 0.0
        %4585 = vmatprep.subr.mxu0 0.0
        %4586 = vmatpush1.msra.mxu0 0.0
        %4587 = vmatprep.subr.mxu0 0.0
        %4588 = vmatpush1.msra.mxu0 0.0
        %4589 = vmatprep.subr.mxu0 0.0
        %4590 = vmatpush1.msra.mxu0 0.0
        %4591 = vmatprep.subr.mxu0 0.0
        %4592 = vmatpush1.msra.mxu0 0.0
        %4593 = vmatprep.subr.mxu0 0.0
        %4594 = vmatpush1.msra.mxu0 0.0
        %4595 = vmatprep.subr.mxu0 0.0
        %4596 = vmatpush1.msra.mxu0 0.0
        %4597 = vmatprep.subr.mxu0 0.0
        %4598 = vmatpush1.msra.mxu0 0.0
        %4599 = vmatprep.subr.mxu0 0.0
        %4600 = vmatpush1.msra.mxu0 0.0
        %4601 = vmatprep.subr.mxu0 0.0
        %4602 = vmatpush1.msra.mxu0 0.0
        %4603 = vmatprep.subr.mxu0 0.0
        %4604 = vmatpush1.msra.mxu0 0.0
        %4605 = vmatprep.subr.mxu0 0.0
        %4606 = vmatpush1.msra.mxu0 0.0
        %4607 = vmatprep.subr.mxu0 0.0
        %4608 = vmatpush1.msra.mxu0 0.0
        %4609 = vmatprep.subr.mxu0 0.0
        %4610 = vmatpush1.msra.mxu0 0.0
        %4611 = vmatprep.subr.mxu0 0.0
        %4612 = vmatpush1.msra.mxu0 0.0
        %4613 = vmatprep.subr.mxu0 0.0
        %4614 = vmatpush1.msra.mxu0 0.0
        %4615 = vmatprep.subr.mxu0 0.0
        %4616 = vmatpush1.msra.mxu0 0.0
        %4617 = vmatprep.subr.mxu0 0.0
        %4618 = vmatpush1.msra.mxu0 0.0
        %4619 = vmatprep.subr.mxu0 0.0
        %4620 = vmatpush1.msra.mxu0 0.0
        %4621 = vmatprep.subr.mxu0 0.0
        %4622 = vmatpush1.msra.mxu0 0.0
        %4623 = vmatprep.mubr.f32.mxu0 0.0
        %4624 = vmatmul.mubr.f32.gmra.mrb[0].mxu0 %v4557
        %v4625 = vpop.f32.mrb[0].mxu0
        %v4626 = vadd.f32 0.0, %v4625
        %v4627 = vpop.f32.mrb[0].mxu0
        %4628 = vdwg.mxu0
        %v4630 = vsel %vm1903, %v4407, 0
        %4632 = vmatprep.subr.mxu0 0.0
        %4633 = vmatpush1.msra.mxu0 %v962
        %4634 = vmatprep.subr.mxu0 0.0
        %4635 = vmatpush1.msra.mxu0 0.0
        %4636 = vmatprep.subr.mxu0 0.0
        %4637 = vmatpush1.msra.mxu0 0.0
        %4638 = vmatprep.subr.mxu0 0.0
        %4639 = vmatpush1.msra.mxu0 0.0
        %4640 = vmatprep.subr.mxu0 0.0
        %4641 = vmatpush1.msra.mxu0 0.0
        %4642 = vmatprep.subr.mxu0 0.0
        %4643 = vmatpush1.msra.mxu0 0.0
        %4644 = vmatprep.subr.mxu0 0.0
        %4645 = vmatpush1.msra.mxu0 0.0
        %4646 = vmatprep.subr.mxu0 0.0
        %4647 = vmatpush1.msra.mxu0 0.0
        %4648 = vmatprep.subr.mxu0 0.0
        %4649 = vmatpush1.msra.mxu0 0.0
        %4650 = vmatprep.subr.mxu0 0.0
        %4651 = vmatpush1.msra.mxu0 0.0
        %4652 = vmatprep.subr.mxu0 0.0
        %4653 = vmatpush1.msra.mxu0 0.0
        %4654 = vmatprep.subr.mxu0 0.0
        %4655 = vmatpush1.msra.mxu0 0.0
        %4656 = vmatprep.subr.mxu0 0.0
        %4657 = vmatpush1.msra.mxu0 0.0
        %4658 = vmatprep.subr.mxu0 0.0
        %4659 = vmatpush1.msra.mxu0 0.0
        %4660 = vmatprep.subr.mxu0 0.0
        %4661 = vmatpush1.msra.mxu0 0.0
        %4662 = vmatprep.subr.mxu0 0.0
        %4663 = vmatpush1.msra.mxu0 0.0
        %4664 = vmatprep.subr.mxu0 0.0
        %4665 = vmatpush1.msra.mxu0 0.0
        %4666 = vmatprep.subr.mxu0 0.0
        %4667 = vmatpush1.msra.mxu0 0.0
        %4668 = vmatprep.subr.mxu0 0.0
        %4669 = vmatpush1.msra.mxu0 0.0
        %4670 = vmatprep.subr.mxu0 0.0
        %4671 = vmatpush1.msra.mxu0 0.0
        %4672 = vmatprep.subr.mxu0 0.0
        %4673 = vmatpush1.msra.mxu0 0.0
        %4674 = vmatprep.subr.mxu0 0.0
        %4675 = vmatpush1.msra.mxu0 0.0
        %4676 = vmatprep.subr.mxu0 0.0
        %4677 = vmatpush1.msra.mxu0 0.0
        %4678 = vmatprep.subr.mxu0 0.0
        %4679 = vmatpush1.msra.mxu0 0.0
        %4680 = vmatprep.subr.mxu0 0.0
        %4681 = vmatpush1.msra.mxu0 0.0
        %4682 = vmatprep.subr.mxu0 0.0
        %4683 = vmatpush1.msra.mxu0 0.0
        %4684 = vmatprep.subr.mxu0 0.0
        %4685 = vmatpush1.msra.mxu0 0.0
        %4686 = vmatprep.subr.mxu0 0.0
        %4687 = vmatpush1.msra.mxu0 0.0
        %4688 = vmatprep.subr.mxu0 0.0
        %4689 = vmatpush1.msra.mxu0 0.0
        %4690 = vmatprep.subr.mxu0 0.0
        %4691 = vmatpush1.msra.mxu0 0.0
        %4692 = vmatprep.subr.mxu0 0.0
        %4693 = vmatpush1.msra.mxu0 0.0
        %4694 = vmatprep.subr.mxu0 0.0
        %4695 = vmatpush1.msra.mxu0 0.0
        %4696 = vmatprep.mubr.f32.mxu0 0.0
        %4697 = vmatmul.mubr.f32.gmra.mrb[0].mxu0 %v4630
        %v4698 = vpop.f32.mrb[0].mxu0
        %v4699 = vadd.f32 0.0, %v4698
        %v4700 = vpop.f32.mrb[0].mxu0
        %4701 = vdwg.mxu0
        %v4703 = vsel %vm1903, %v4480, 0
        %4705 = vmatprep.subr.mxu0 0.0
        %4706 = vmatpush1.msra.mxu0 %v963
        %4707 = vmatprep.subr.mxu0 0.0
        %4708 = vmatpush1.msra.mxu0 0.0
        %4709 = vmatprep.subr.mxu0 0.0
        %4710 = vmatpush1.msra.mxu0 0.0
        %4711 = vmatprep.subr.mxu0 0.0
        %4712 = vmatpush1.msra.mxu0 0.0
        %4713 = vmatprep.subr.mxu0 0.0
        %4714 = vmatpush1.msra.mxu0 0.0
        %4715 = vmatprep.subr.mxu0 0.0
        %4716 = vmatpush1.msra.mxu0 0.0
        %4717 = vmatprep.subr.mxu0 0.0
        %4718 = vmatpush1.msra.mxu0 0.0
        %4719 = vmatprep.subr.mxu0 0.0
        %4720 = vmatpush1.msra.mxu0 0.0
        %4721 = vmatprep.subr.mxu0 0.0
        %4722 = vmatpush1.msra.mxu0 0.0
        %4723 = vmatprep.subr.mxu0 0.0
        %4724 = vmatpush1.msra.mxu0 0.0
        %4725 = vmatprep.subr.mxu0 0.0
        %4726 = vmatpush1.msra.mxu0 0.0
        %4727 = vmatprep.subr.mxu0 0.0
        %4728 = vmatpush1.msra.mxu0 0.0
        %4729 = vmatprep.subr.mxu0 0.0
        %4730 = vmatpush1.msra.mxu0 0.0
        %4731 = vmatprep.subr.mxu0 0.0
        %4732 = vmatpush1.msra.mxu0 0.0
        %4733 = vmatprep.subr.mxu0 0.0
        %4734 = vmatpush1.msra.mxu0 0.0
        %4735 = vmatprep.subr.mxu0 0.0
        %4736 = vmatpush1.msra.mxu0 0.0
        %4737 = vmatprep.subr.mxu0 0.0
        %4738 = vmatpush1.msra.mxu0 0.0
        %4739 = vmatprep.subr.mxu0 0.0
        %4740 = vmatpush1.msra.mxu0 0.0
        %4741 = vmatprep.subr.mxu0 0.0
        %4742 = vmatpush1.msra.mxu0 0.0
        %4743 = vmatprep.subr.mxu0 0.0
        %4744 = vmatpush1.msra.mxu0 0.0
        %4745 = vmatprep.subr.mxu0 0.0
        %4746 = vmatpush1.msra.mxu0 0.0
        %4747 = vmatprep.subr.mxu0 0.0
        %4748 = vmatpush1.msra.mxu0 0.0
        %4749 = vmatprep.subr.mxu0 0.0
        %4750 = vmatpush1.msra.mxu0 0.0
        %4751 = vmatprep.subr.mxu0 0.0
        %4752 = vmatpush1.msra.mxu0 0.0
        %4753 = vmatprep.subr.mxu0 0.0
        %4754 = vmatpush1.msra.mxu0 0.0
        %4755 = vmatprep.subr.mxu0 0.0
        %4756 = vmatpush1.msra.mxu0 0.0
        %4757 = vmatprep.subr.mxu0 0.0
        %4758 = vmatpush1.msra.mxu0 0.0
        %4759 = vmatprep.subr.mxu0 0.0
        %4760 = vmatpush1.msra.mxu0 0.0
        %4761 = vmatprep.subr.mxu0 0.0
        %4762 = vmatpush1.msra.mxu0 0.0
        %4763 = vmatprep.subr.mxu0 0.0
        %4764 = vmatpush1.msra.mxu0 0.0
        %4765 = vmatprep.subr.mxu0 0.0
        %4766 = vmatpush1.msra.mxu0 0.0
        %4767 = vmatprep.subr.mxu0 0.0
        %4768 = vmatpush1.msra.mxu0 0.0
        %4769 = vmatprep.mubr.f32.mxu0 0.0
        %4770 = vmatmul.mubr.f32.gmra.mrb[0].mxu0 %v4703
        %v4771 = vpop.f32.mrb[0].mxu0
        %v4772 = vadd.f32 0.0, %v4771
        %v4773 = vpop.f32.mrb[0].mxu0
        %4774 = vdwg.mxu0
        %v4776 = vsel %vm1903, %v4553, 0
        %4778 = vmatprep.subr.mxu0 0.0
        %4779 = vmatpush1.msra.mxu0 %v964
        %4780 = vmatprep.subr.mxu0 0.0
        %4781 = vmatpush1.msra.mxu0 0.0
        %4782 = vmatprep.subr.mxu0 0.0
        %4783 = vmatpush1.msra.mxu0 0.0
        %4784 = vmatprep.subr.mxu0 0.0
        %4785 = vmatpush1.msra.mxu0 0.0
        %4786 = vmatprep.subr.mxu0 0.0
        %4787 = vmatpush1.msra.mxu0 0.0
        %4788 = vmatprep.subr.mxu0 0.0
        %4789 = vmatpush1.msra.mxu0 0.0
        %4790 = vmatprep.subr.mxu0 0.0
        %4791 = vmatpush1.msra.mxu0 0.0
        %4792 = vmatprep.subr.mxu0 0.0
        %4793 = vmatpush1.msra.mxu0 0.0
        %4794 = vmatprep.subr.mxu0 0.0
        %4795 = vmatpush1.msra.mxu0 0.0
        %4796 = vmatprep.subr.mxu0 0.0
        %4797 = vmatpush1.msra.mxu0 0.0
        %4798 = vmatprep.subr.mxu0 0.0
        %4799 = vmatpush1.msra.mxu0 0.0
        %4800 = vmatprep.subr.mxu0 0.0
        %4801 = vmatpush1.msra.mxu0 0.0
        %4802 = vmatprep.subr.mxu0 0.0
        %4803 = vmatpush1.msra.mxu0 0.0
        %4804 = vmatprep.subr.mxu0 0.0
        %4805 = vmatpush1.msra.mxu0 0.0
        %4806 = vmatprep.subr.mxu0 0.0
        %4807 = vmatpush1.msra.mxu0 0.0
        %4808 = vmatprep.subr.mxu0 0.0
        %4809 = vmatpush1.msra.mxu0 0.0
        %4810 = vmatprep.subr.mxu0 0.0
        %4811 = vmatpush1.msra.mxu0 0.0
        %4812 = vmatprep.subr.mxu0 0.0
        %4813 = vmatpush1.msra.mxu0 0.0
        %4814 = vmatprep.subr.mxu0 0.0
        %4815 = vmatpush1.msra.mxu0 0.0
        %4816 = vmatprep.subr.mxu0 0.0
        %4817 = vmatpush1.msra.mxu0 0.0
        %4818 = vmatprep.subr.mxu0 0.0
        %4819 = vmatpush1.msra.mxu0 0.0
        %4820 = vmatprep.subr.mxu0 0.0
        %4821 = vmatpush1.msra.mxu0 0.0
        %4822 = vmatprep.subr.mxu0 0.0
        %4823 = vmatpush1.msra.mxu0 0.0
        %4824 = vmatprep.subr.mxu0 0.0
        %4825 = vmatpush1.msra.mxu0 0.0
        %4826 = vmatprep.subr.mxu0 0.0
        %4827 = vmatpush1.msra.mxu0 0.0
        %4828 = vmatprep.subr.mxu0 0.0
        %4829 = vmatpush1.msra.mxu0 0.0
        %4830 = vmatprep.subr.mxu0 0.0
        %4831 = vmatpush1.msra.mxu0 0.0
        %4832 = vmatprep.subr.mxu0 0.0
        %4833 = vmatpush1.msra.mxu0 0.0
        %4834 = vmatprep.subr.mxu0 0.0
        %4835 = vmatpush1.msra.mxu0 0.0
        %4836 = vmatprep.subr.mxu0 0.0
        %4837 = vmatpush1.msra.mxu0 0.0
        %4838 = vmatprep.subr.mxu0 0.0
        %4839 = vmatpush1.msra.mxu0 0.0
        %4840 = vmatprep.subr.mxu0 0.0
        %4841 = vmatpush1.msra.mxu0 0.0
        %4842 = vmatprep.mubr.f32.mxu0 0.0
        %4843 = vmatmul.mubr.f32.gmra.mrb[0].mxu0 %v4776
        %v4844 = vpop.f32.mrb[0].mxu0
        %v4845 = vadd.f32 0.0, %v4844
        %v4846 = vpop.f32.mrb[0].mxu0
        %4847 = vdwg.mxu0
        %v4848 = vsel %vm1011, %v4626, 0.0
        %v4849 = vsel %vm1011, %v4699, 0.0
        %v4850 = vadd.f32 %v4848, %v4849
        %v4851 = vsel %vm1011, %v4772, 0.0
        %v4852 = vadd.f32 %v4850, %v4851
        %v4853 = vsel %vm1011, %v4845, 0.0
        %v4854 = vadd.f32 %v4852, %v4853
        %v4855 = vadd.f32 %v4854, %v2847
        %v4856 = vadd.f32 %v3070, %v4855
        %v4857 = vsel %vm1011, %v4856, 0.0
        %4858 = vadd.xlane.f32.xlu0 %v4857
        %v4859 = vpop.xlane.xlu0 %4858
        %v4860 = vmul.f32 %v4859, %v2854
        %v4861 = vsub.f32 %v4856, %v4860
        %v4862 = vmul.f32 %v4861, %v4861
        %v4863 = vsel %vm1011, %v4862, 0.0
        %4864 = vadd.xlane.f32.xlu0 %v4863
        %v4865 = vpop.xlane.xlu0 %4864
        %v4866 = vmul.f32 %v4865, %v2854
        %v4867 = vadd.f32 %v4866, 1e-05
        %v4868 = vrsqrt.pop %v4867
        %v4869 = vmul.f32 %v4861, %v4868
        %v4870 = vmul.f32 %v4869, %v2869
        %v4871 = vadd.f32 %v4870, %v2876
        %v4873 = vsel %vm1011, %v4871, 0
        %4875 = vmatprep.subr.mxu0 0.0
        %4876 = vmatpush1.msra.mxu0 %v966
        %4877 = vmatprep.subr.mxu0 0.0
        %4878 = vmatpush1.msra.mxu0 %v967
        %4879 = vmatprep.subr.mxu0 0.0
        %4880 = vmatpush1.msra.mxu0 %v968
        %4881 = vmatprep.subr.mxu0 0.0
        %4882 = vmatpush1.msra.mxu0 %v969
        %4883 = vmatprep.subr.mxu0 0.0
        %4884 = vmatpush1.msra.mxu0 0.0
        %4885 = vmatprep.subr.mxu0 0.0
        %4886 = vmatpush1.msra.mxu0 0.0
        %4887 = vmatprep.subr.mxu0 0.0
        %4888 = vmatpush1.msra.mxu0 0.0
        %4889 = vmatprep.subr.mxu0 0.0
        %4890 = vmatpush1.msra.mxu0 0.0
        %4891 = vmatprep.subr.mxu0 0.0
        %4892 = vmatpush1.msra.mxu0 0.0
        %4893 = vmatprep.subr.mxu0 0.0
        %4894 = vmatpush1.msra.mxu0 0.0
        %4895 = vmatprep.subr.mxu0 0.0
        %4896 = vmatpush1.msra.mxu0 0.0
        %4897 = vmatprep.subr.mxu0 0.0
        %4898 = vmatpush1.msra.mxu0 0.0
        %4899 = vmatprep.subr.mxu0 0.0
        %4900 = vmatpush1.msra.mxu0 0.0
        %4901 = vmatprep.subr.mxu0 0.0
        %4902 = vmatpush1.msra.mxu0 0.0
        %4903 = vmatprep.subr.mxu0 0.0
        %4904 = vmatpush1.msra.mxu0 0.0
        %4905 = vmatprep.subr.mxu0 0.0
        %4906 = vmatpush1.msra.mxu0 0.0
        %4907 = vmatprep.subr.mxu0 0.0
        %4908 = vmatpush1.msra.mxu0 0.0
        %4909 = vmatprep.subr.mxu0 0.0
        %4910 = vmatpush1.msra.mxu0 0.0
        %4911 = vmatprep.subr.mxu0 0.0
        %4912 = vmatpush1.msra.mxu0 0.0
        %4913 = vmatprep.subr.mxu0 0.0
        %4914 = vmatpush1.msra.mxu0 0.0
        %4915 = vmatprep.subr.mxu0 0.0
        %4916 = vmatpush1.msra.mxu0 0.0
        %4917 = vmatprep.subr.mxu0 0.0
        %4918 = vmatpush1.msra.mxu0 0.0
        %4919 = vmatprep.subr.mxu0 0.0
        %4920 = vmatpush1.msra.mxu0 0.0
        %4921 = vmatprep.subr.mxu0 0.0
        %4922 = vmatpush1.msra.mxu0 0.0
        %4923 = vmatprep.subr.mxu0 0.0
        %4924 = vmatpush1.msra.mxu0 0.0
        %4925 = vmatprep.subr.mxu0 0.0
        %4926 = vmatpush1.msra.mxu0 0.0
        %4927 = vmatprep.subr.mxu0 0.0
        %4928 = vmatpush1.msra.mxu0 0.0
        %4929 = vmatprep.subr.mxu0 0.0
        %4930 = vmatpush1.msra.mxu0 0.0
        %4931 = vmatprep.subr.mxu0 0.0
        %4932 = vmatpush1.msra.mxu0 0.0
        %4933 = vmatprep.subr.mxu0 0.0
        %4934 = vmatpush1.msra.mxu0 0.0
        %4935 = vmatprep.subr.mxu0 0.0
        %4936 = vmatpush1.msra.mxu0 0.0
        %4937 = vmatprep.subr.mxu0 0.0
        %4938 = vmatpush1.msra.mxu0 0.0
        %4939 = vmatprep.mubr.f32.mxu0 0.0
        %4940 = vmatmul.mubr.f32.gmra.mrb[0].mxu0 %v4873
        %v4941 = vpop.f32.mrb[0].mxu0
        %v4942 = vadd.f32 %v2883, %v4941
        %v4943 = vpop.f32.mrb[0].mxu0
        %4944 = vdwg.mxu0
        %v4945 = vmax.f32 %v4942, 0.0
        %v4947 = vsel %vm2965, %v4945, 0
        %4949 = vmatprep.subr.mxu0 0.0
        %4950 = vmatpush1.msra.mxu0 %v971
        %4951 = vmatprep.subr.mxu0 0.0
        %4952 = vmatpush1.msra.mxu0 %v972
        %4953 = vmatprep.subr.mxu0 0.0
        %4954 = vmatpush1.msra.mxu0 %v973
        %4955 = vmatprep.subr.mxu0 0.0
        %4956 = vmatpush1.msra.mxu0 %v974
        %4957 = vmatprep.subr.mxu0 0.0
        %4958 = vmatpush1.msra.mxu0 %v975
        %4959 = vmatprep.subr.mxu0 0.0
        %4960 = vmatpush1.msra.mxu0 %v976
        %4961 = vmatprep.subr.mxu0 0.0
        %4962 = vmatpush1.msra.mxu0 %v977
        %4963 = vmatprep.subr.mxu0 0.0
        %4964 = vmatpush1.msra.mxu0 %v978
        %4965 = vmatprep.subr.mxu0 0.0
        %4966 = vmatpush1.msra.mxu0 0.0
        %4967 = vmatprep.subr.mxu0 0.0
        %4968 = vmatpush1.msra.mxu0 0.0
        %4969 = vmatprep.subr.mxu0 0.0
        %4970 = vmatpush1.msra.mxu0 0.0
        %4971 = vmatprep.subr.mxu0 0.0
        %4972 = vmatpush1.msra.mxu0 0.0
        %4973 = vmatprep.subr.mxu0 0.0
        %4974 = vmatpush1.msra.mxu0 0.0
        %4975 = vmatprep.subr.mxu0 0.0
        %4976 = vmatpush1.msra.mxu0 0.0
        %4977 = vmatprep.subr.mxu0 0.0
        %4978 = vmatpush1.msra.mxu0 0.0
        %4979 = vmatprep.subr.mxu0 0.0
        %4980 = vmatpush1.msra.mxu0 0.0
        %4981 = vmatprep.subr.mxu0 0.0
        %4982 = vmatpush1.msra.mxu0 0.0
        %4983 = vmatprep.subr.mxu0 0.0
        %4984 = vmatpush1.msra.mxu0 0.0
        %4985 = vmatprep.subr.mxu0 0.0
        %4986 = vmatpush1.msra.mxu0 0.0
        %4987 = vmatprep.subr.mxu0 0.0
        %4988 = vmatpush1.msra.mxu0 0.0
        %4989 = vmatprep.subr.mxu0 0.0
        %4990 = vmatpush1.msra.mxu0 0.0
        %4991 = vmatprep.subr.mxu0 0.0
        %4992 = vmatpush1.msra.mxu0 0.0
        %4993 = vmatprep.subr.mxu0 0.0
        %4994 = vmatpush1.msra.mxu0 0.0
        %4995 = vmatprep.subr.mxu0 0.0
        %4996 = vmatpush1.msra.mxu0 0.0
        %4997 = vmatprep.subr.mxu0 0.0
        %4998 = vmatpush1.msra.mxu0 0.0
        %4999 = vmatprep.subr.mxu0 0.0
        %5000 = vmatpush1.msra.mxu0 0.0
        %5001 = vmatprep.subr.mxu0 0.0
        %5002 = vmatpush1.msra.mxu0 0.0
        %5003 = vmatprep.subr.mxu0 0.0
        %5004 = vmatpush1.msra.mxu0 0.0
        %5005 = vmatprep.subr.mxu0 0.0
        %5006 = vmatpush1.msra.mxu0 0.0
        %5007 = vmatprep.subr.mxu0 0.0
        %5008 = vmatpush1.msra.mxu0 0.0
        %5009 = vmatprep.subr.mxu0 0.0
        %5010 = vmatpush1.msra.mxu0 0.0
        %5011 = vmatprep.subr.mxu0 0.0
        %5012 = vmatpush1.msra.mxu0 0.0
        %5013 = vmatprep.mubr.f32.mxu0 0.0
        %5014 = vmatmul.mubr.f32.gmra.mrb[0].mxu0 %v4947
        %v5015 = vpop.f32.mrb[0].mxu0
        %v5016 = vadd.f32 %v2963, %v5015
        %v5017 = vpop.f32.mrb[0].mxu0
        %5018 = vdwg.mxu0
        %v5019 = vadd.f32 %v4871, %v5016
        %v5020 = vsel %vm1011, %v5019, 0.0
        %5021 = vadd.xlane.f32.xlu0 %v5020
        %v5022 = vpop.xlane.xlu0 %5021
        %v5023 = vmul.f32 %v5022, %v2854
        %v5024 = vsub.f32 %v5019, %v5023
        %v5025 = vmul.f32 %v5024, %v5024
        %v5026 = vsel %vm1011, %v5025, 0.0
        %5027 = vadd.xlane.f32.xlu0 %v5026
        %v5028 = vpop.xlane.xlu0 %5027
        %v5029 = vmul.f32 %v5028, %v2854
        %v5030 = vadd.f32 %v5029, 1e-05
        %v5031 = vrsqrt.pop %v5030
        %v5032 = vmul.f32 %v5024, %v5031
        %v5033 = vmul.f32 %v5032, %v3057
        %v5034 = vadd.f32 %v5033, %v3064
        %s5035 = scalar_lea.vmem [#allocation2], 8
        %5036 = vst.msk [vmem:[%s5035] sm:$0xff] %vm1011, %v5034
        // Predicated region
        $region97: #{tpu_custom_call.1} parent=95 // pred_check
          %p5037 = pneg %p550
        $region98: #{tpu_custom_call.1} parent=95 // pred_check_branch
          %5039 = sbr.rel (%p5037) target = $region100
        $region99: #{tpu_custom_call.1} parent=95 // pred_region
          %s5040 = smul.u32 2, %s35
          %s5042 = ssub.s32 256, 256
          %5043 = vsyncadd [#allocation3], %s5042
          %s5044 = smul.addr %s5040, 128
          %s5045 = scalar_lea.hbm %s19, %s5044
          %s5046 = sshll.u32 [#allocation2], 4
          %s5047 = int_to_ptr.vmem [resolvable:$true] %s5046
          %5052 = dma.vmem_to_hbm [thread:$0]  %s5047, 256, %s5045, [#allocation3], 128, 128, 8
        $region100: #{tpu_custom_call.1} parent=95 // pred_fallthru
          _
        // Predicated region
        $region101: #{tpu_custom_call.1} parent=95 // pred_check
          %p5053 = pneg %p550
        $region102: #{tpu_custom_call.1} parent=95 // pred_check_branch
          %5055 = sbr.rel (%p5053) target = $region104
        $region103: #{tpu_custom_call.1} parent=95 // pred_region
          %5056 = dma.done [#allocation3], 256
        $region104: #{tpu_custom_call.1} parent=95 // pred_fallthru
          _
      $region96: #{tpu_custom_call.1} parent=5 // pred_fallthru
        _
      %p5057 = scmp.le.s32.totalorder 2, %s26
      // Predicated region
      $region105: #{tpu_custom_call.1} parent=5 // pred_check
        %p5058 = pneg %p5057
      $region106: #{tpu_custom_call.1} parent=5 // pred_check_branch
        %5060 = sbr.rel (%p5058) target = $region108
      $region107: #{tpu_custom_call.1} parent=5 // pred_region
        %s5061 = ssub.s32 %s26, 2
      $region108: #{tpu_custom_call.1} parent=5 // pred_fallthru
        _
    $region6: #{tpu_custom_call.1} parent=1 // loop_footer
      %s30 = sadd.s32 1, %s26
    $region7: #{tpu_custom_call.1} parent=1 // loop_footer_branch
      %25 = sbr.rel target = $region3
    $region8: #{tpu_custom_call.1} parent=1 // loop_exit
      _
    %5062 = vsyncpa [#allocation3], 1
    %s5063 = scalar_lea.sflag [#allocation3], 1
    %5064 = vsyncpa %s5063, 1

</llo_original>
